<compile_context>
chip_gen: v7x
topology: tpu7x:2x2x1
jax: 0.10.0
libtpu: 0.0.40
codegen_flags: <defaults>
</compile_context>

<pallas_src>
import functools
import math

import jax
import jax.numpy as jnp
import numpy as np
from jax import lax
from jax.experimental import pallas as pl
from jax.experimental.pallas import tpu as pltpu

MAX_CHUNK = 32  # max timesteps per lstm_scan grid step


def _round_up(x, m):
    return (x + m - 1) // m * m


def _largest_tile(n, cap, quantum):
    """Largest multiple of `quantum` dividing n and <= cap (n itself if n<=cap)."""
    if n <= cap:
        return n
    for d in range(cap // quantum * quantum, 0, -quantum):
        if n % d == 0:
            return d
    return quantum


def _vmem_limit(block_bytes):
    """Explicit VMEM budget (double-buffered blocks + headroom); None if the
    default scoped limit already covers it."""
    need = 2 * int(sum(block_bytes)) + (2 << 20)
    if need <= (32 << 20):
        return None
    return int(min(need, 128 << 20))


# --------------------------------------------------------------------------
# Tiled matmul + bias kernel:  y = x @ w + b   (M % 8 == 0, N lane-aligned)
# --------------------------------------------------------------------------
def _matmul_bias_kernel(x_ref, w_ref, b_ref, o_ref):
    o_ref[...] = (
        jnp.dot(x_ref[...], w_ref[...], preferred_element_type=jnp.float32)
        + b_ref[...])


def matmul_bias(x, w, b, *, tm_cap=256, tn_cap=256):
    M, K = x.shape
    Kw, N = w.shape
    assert K == Kw and M % 8 == 0
    tm = _largest_tile(M, tm_cap, 8)
    tn = _largest_tile(N, tn_cap, 128) if N % 128 == 0 else N
    vlim = _vmem_limit([tm * K * 4, K * tn * 4, tn * 4, tm * tn * 4])
    return pl.pallas_call(
        _matmul_bias_kernel,
        out_shape=jax.ShapeDtypeStruct((M, N), jnp.float32),
        grid_spec=pltpu.PrefetchScalarGridSpec(
            num_scalar_prefetch=0,
            grid=(M // tm, N // tn),
            in_specs=[
                pl.BlockSpec((tm, K), lambda i, j: (i, 0)),
                pl.BlockSpec((K, tn), lambda i, j: (0, j)),
                pl.BlockSpec((1, tn), lambda i, j: (0, j)),
            ],
            out_specs=pl.BlockSpec((tm, tn), lambda i, j: (i, j)),
        ),
        compiler_params=pltpu.CompilerParams(
            dimension_semantics=("parallel", "parallel"),
            vmem_limit_bytes=vlim),
    )(x, w, b.reshape(1, N))


# --------------------------------------------------------------------------
# LSTM recurrence kernel (input projection precomputed, gates in i,f,o,g order)
#   gx[t] = x[t] @ W_ih^T + (b_ih + b_hh), carry (h, c) in VMEM scratch.
#   Encoder mode (write_hs=False): only final (h, c) are emitted.
# --------------------------------------------------------------------------
def _lstm_scan_kernel(*refs, T, Tc, H, write_hs):
    if write_hs:
        (gx_ref, h0_ref, c0_ref, whh_ref,
         hs_ref, hN_ref, cN_ref, h_sc, c_sc) = refs
    else:
        (gx_ref, h0_ref, c0_ref, whh_ref,
         hN_ref, cN_ref, h_sc, c_sc) = refs
        hs_ref = None

    @pl.when(pl.program_id(0) == 0)
    def _():
        h_sc[...] = h0_ref[...]
        c_sc[...] = c0_ref[...]

    whh = whh_ref[...]                    # loaded once per chunk
    base = pl.program_id(0) * Tc
    needs_mask = (T % Tc) != 0            # static

    def body(s, carry):
        h, c = carry
        gates = gx_ref[s] + jnp.dot(h, whh,
                                    preferred_element_type=jnp.float32)
        sig = jax.nn.sigmoid(gates[:, :3 * H])      # i, f, o in one slab
        i_g = sig[:, 0:H]
        f_g = sig[:, H:2 * H]
        o_g = sig[:, 2 * H:3 * H]
        g_g = jnp.tanh(gates[:, 3 * H:4 * H])
        c_new = f_g * c + i_g * g_g
        h_new = o_g * jnp.tanh(c_new)
        if needs_mask:                    # padded tail steps keep the carry
            valid = (base + s) < T
            h_new = jnp.where(valid, h_new, h)
            c_new = jnp.where(valid, c_new, c)
        if write_hs:
            hs_ref[s] = h_new
        return h_new, c_new

    h, c = lax.fori_loop(0, Tc, body, (h_sc[...], c_sc[...]), unroll=True)
    h_sc[...] = h
    c_sc[...] = c
    hN_ref[...] = h
    cN_ref[...] = c


def lstm_scan(gx, h0, c0, whh_t, *, t_valid, Tc, return_hs):
    Tp, B, G = gx.shape
    H = whh_t.shape[0]
    assert Tp % Tc == 0 and G == 4 * H

    out_shape = []
    out_specs = []
    blocks = [Tc * B * G, B * H, B * H, H * G,    # inputs
              B * H, B * H,                       # hN, cN
              B * H, B * H]                       # scratch
    if return_hs:
        out_shape.append(jax.ShapeDtypeStruct((Tp, B, H), jnp.float32))
        out_specs.append(pl.BlockSpec((Tc, B, H), lambda t: (t, 0, 0)))
        blocks.append(Tc * B * H)
    out_shape += [jax.ShapeDtypeStruct((B, H), jnp.float32),
                  jax.ShapeDtypeStruct((B, H), jnp.float32)]
    out_specs += [pl.BlockSpec((B, H), lambda t: (0, 0)),
                  pl.BlockSpec((B, H), lambda t: (0, 0))]

    res = pl.pallas_call(
        functools.partial(_lstm_scan_kernel, T=t_valid, Tc=Tc, H=H,
                          write_hs=return_hs),
        out_shape=tuple(out_shape),
        grid_spec=pltpu.PrefetchScalarGridSpec(
            num_scalar_prefetch=0,
            grid=(Tp // Tc,),
            in_specs=[
                pl.BlockSpec((Tc, B, G), lambda t: (t, 0, 0)),
                pl.BlockSpec((B, H), lambda t: (0, 0)),
                pl.BlockSpec((B, H), lambda t: (0, 0)),
                pl.BlockSpec((H, G), lambda t: (0, 0)),
            ],
            out_specs=out_specs,
            scratch_shapes=[pltpu.VMEM((B, H), jnp.float32),
                            pltpu.VMEM((B, H), jnp.float32)],
        ),
        compiler_params=pltpu.CompilerParams(
            dimension_semantics=("arbitrary",),
            vmem_limit_bytes=_vmem_limit([b * 4 for b in blocks])),
    )(gx, h0, c0, whh_t)

    if return_hs:
        return res              # (hs, hN, cN)
    hN, cN = res
    return hN, cN


# --------------------------------------------------------------------------
# Vocabulary projection, written directly into the final output tensor:
#   out[0]      = 0
#   out[t, :bsz] = hs[t-1, :bsz] @ W + b   for t >= 1
# Vocab tile j is the OUTER grid axis -> each weight tile streams once.
# --------------------------------------------------------------------------
def _vocab_proj_kernel(hs_ref, w_ref, b_ref, o_ref, *, bsz):
    t = pl.program_id(1)

    @pl.when(t == 0)
    def _():
        o_ref[...] = jnp.zeros_like(o_ref)

    @pl.when(t > 0)
    def _():
        y = (jnp.dot(hs_ref[0], w_ref[...],
                     preferred_element_type=jnp.float32)
             + b_ref[...])
        o_ref[0] = y[:bsz, :]


def vocab_projection(hs, w, b, *, t_out, bsz, tn_cap=512):
    Tdp, Bp, H = hs.shape
    V = w.shape[1]
    tn = _largest_tile(V, tn_cap, 128) if V % 128 == 0 else V
    vlim = _vmem_limit([Bp * H * 4, H * tn * 4, tn * 4, bsz * tn * 4])
    return pl.pallas_call(
        functools.partial(_vocab_proj_kernel, bsz=bsz),
        out_shape=jax.ShapeDtypeStruct((t_out, bsz, V), jnp.float32),
        grid_spec=pltpu.PrefetchScalarGridSpec(
            num_scalar_prefetch=0,
            grid=(V // tn, t_out),
            in_specs=[
                pl.BlockSpec((1, Bp, H),
                             lambda j, t: (jnp.maximum(t - 1, 0), 0, 0)),
                pl.BlockSpec((H, tn), lambda j, t: (0, j)),
                pl.BlockSpec((1, tn), lambda j, t: (0, j)),
            ],
            out_specs=pl.BlockSpec((1, bsz, tn), lambda j, t: (t, 0, j)),
        ),
        compiler_params=pltpu.CompilerParams(
            dimension_semantics=("parallel", "parallel"),
            vmem_limit_bytes=vlim),
    )(hs, w, b.reshape(1, V))


# --------------------------------------------------------------------------
# Full Seq2SeqModel.forward  (tfr fixed to 1.0 => always teacher-forced)
# --------------------------------------------------------------------------
def _to_ifog(m):
    """Permute LSTM gate columns from PyTorch (i, f, g, o) to (i, f, o, g)."""
    H = m.shape[-1] // 4
    return jnp.concatenate(
        [m[..., :2 * H], m[..., 3 * H:4 * H], m[..., 2 * H:3 * H]], axis=-1)


@jax.jit
def seq2seq_forward(params, src_words, trg_words):
    max_trg_len, bsz = trg_words.shape
    H = params["enc_whh_t"].shape[0]
    E = params["src_embedding"].shape[1]
    assert H % 128 == 0, "hidden_size must be a multiple of 128 (lane tiling)"

    Bp = _round_up(bsz, 8)       # batch padded to a sublane multiple

    # Gate-permuted weights (one contiguous sigmoid slab inside the kernel).
    enc_wih, enc_whh, enc_b = (_to_ifog(params["enc_wih_t"]),
                               _to_ifog(params["enc_whh_t"]),
                               _to_ifog(params["enc_b"]))
    dec_wih, dec_whh, dec_b = (_to_ifog(params["dec_wih_t"]),
                               _to_ifog(params["dec_whh_t"]),
                               _to_ifog(params["dec_b"]))

    # ---- Encoder ----
    Ts = src_words.shape[0]
    Tc_e = min(Ts, MAX_CHUNK)
    Tsp = _round_up(Ts, Tc_e)
    src_emb = jnp.take(params["src_embedding"], src_words, axis=0)  # (Ts,B,E)
    src_emb = jnp.pad(src_emb, ((0, Tsp - Ts), (0, Bp - bsz), (0, 0)))
    # Hoisted input projection, batched over all timesteps.
    enc_gx = matmul_bias(src_emb.reshape(Tsp * Bp, E), enc_wih, enc_b)
    enc_gx = enc_gx.reshape(Tsp, Bp, 4 * H)
    zeros = jnp.zeros((Bp, H), jnp.float32)
    # Encoder: only final (h, c) -- the hidden-state sequence is never written.
    h0, c0 = lstm_scan(enc_gx, zeros, zeros, enc_whh,
                       t_valid=Ts, Tc=Tc_e, return_hs=False)

    # ---- Decoder (teacher forcing): inputs are trg_words[0 .. T-2] ----
    Td = max_trg_len - 1
    Tc_d = min(Td, MAX_CHUNK)
    Tdp = _round_up(Td, Tc_d)
    dec_emb = jnp.take(params["trg_embedding"], trg_words[:-1], axis=0)
    dec_emb = jnp.pad(dec_emb, ((0, Tdp - Td), (0, Bp - bsz), (0, 0)))
    dec_gx = matmul_bias(dec_emb.reshape(Tdp * Bp, E), dec_wih, dec_b)
    dec_gx = dec_gx.reshape(Tdp, Bp, 4 * H)
    hs, _, _ = lstm_scan(dec_gx, h0, c0, dec_whh,
                         t_valid=Td, Tc=Tc_d, return_hs=True)

    # ---- Vocabulary projection directly into (max_trg_len, bsz, V):
    # zero row 0, t->t+1 shift and batch un-pad are folded into the kernel.
    outputs = vocab_projection(hs, params["proj_w_t"], params["proj_b"],
                               t_out=max_trg_len, bsz=bsz)
    return outputs


# --------------------------------------------------------------------------
# Deterministic parameter init (matches shapes / init schemes of __init__);
# LSTM weights stored pre-transposed in PyTorch gate order (i, f, g, o).
# --------------------------------------------------------------------------
def init_params(key, nwords_src, nwords_trg, emb_size, hidden_size):
    ks = jax.random.split(key, 12)
    H = hidden_size
    k_lstm = 1.0 / math.sqrt(H)
    xav = math.sqrt(6.0 / (nwords_trg + H))

    def u(k, shape, lo, hi):
        return jax.random.uniform(k, shape, jnp.float32, lo, hi)

    return {
        "src_embedding": u(ks[0], (nwords_src, emb_size), -0.25, 0.25),
        "trg_embedding": u(ks[1], (nwords_trg, emb_size), -0.25, 0.25),
        "enc_wih_t": u(ks[2], (emb_size, 4 * H), -k_lstm, k_lstm),
        "enc_whh_t": u(ks[3], (H, 4 * H), -k_lstm, k_lstm),
        "enc_b": (u(ks[4], (1, 4 * H), -k_lstm, k_lstm)
                  + u(ks[5], (1, 4 * H), -k_lstm, k_lstm)),
        "dec_wih_t": u(ks[6], (emb_size, 4 * H), -k_lstm, k_lstm),
        "dec_whh_t": u(ks[7], (H, 4 * H), -k_lstm, k_lstm),
        "dec_b": (u(ks[8], (1, 4 * H), -k_lstm, k_lstm)
                  + u(ks[9], (1, 4 * H), -k_lstm, k_lstm)),
        "proj_w_t": u(ks[10], (H, nwords_trg), -xav, xav),
        "proj_b": u(ks[11], (1, nwords_trg), -k_lstm, k_lstm),
    }


# --------------------------------------------------------------------------
# Pure-JAX reference (lax.scan, PyTorch gate order) for correctness check
# --------------------------------------------------------------------------
def _lstm_step_ref(x, h, c, wih_t, whh_t, b, H):
    gates = (jnp.dot(x, wih_t, preferred_element_type=jnp.float32)
             + jnp.dot(h, whh_t, preferred_element_type=jnp.float32) + b)
    i = jax.nn.sigmoid(gates[:, 0:H])
    f = jax.nn.sigmoid(gates[:, H:2 * H])
    g = jnp.tanh(gates[:, 2 * H:3 * H])
    o = jax.nn.sigmoid(gates[:, 3 * H:4 * H])
    c_new = f * c + i * g
    h_new = o * jnp.tanh(c_new)
    return h_new, c_new


def seq2seq_reference(params, src_words, trg_words, nwords_trg):
    H = params["enc_whh_t"].shape[0]
    max_trg_len, bsz = trg_words.shape

    def step(wih_t, whh_t, b):
        def f(carry, x):
            h, c = carry
            h2, c2 = _lstm_step_ref(x, h, c, wih_t, whh_t, b, H)
            return (h2, c2), h2
        return f

    src_emb = jnp.take(params["src_embedding"], src_words, axis=0)
    h0 = jnp.zeros((bsz, H), jnp.float32)
    c0 = jnp.zeros((bsz, H), jnp.float32)
    (he, ce), _ = jax.lax.scan(
        step(params["enc_wih_t"], params["enc_whh_t"], params["enc_b"]),
        (h0, c0), src_emb)

    dec_emb = jnp.take(params["trg_embedding"], trg_words[:-1], axis=0)
    (_, _), hs = jax.lax.scan(
        step(params["dec_wih_t"], params["dec_whh_t"], params["dec_b"]),
        (he, ce), dec_emb)
    logits = jnp.einsum("tbh,hv->tbv", hs, params["proj_w_t"]) + params["proj_b"]
    return jnp.concatenate(
        [jnp.zeros((1, bsz, nwords_trg), jnp.float32), logits], axis=0)


# --------------------------------------------------------------------------
if __name__ == "__main__":
    # Small, TPU-friendly shapes.
    nwords_src, nwords_trg = 48, 256
    emb_size, hidden_size = 32, 128
    src_len, max_trg_len, bsz = 6, 7, 8

    key = jax.random.PRNGKey(0)
    k_params, k_src, k_trg = jax.random.split(key, 3)

    params = init_params(k_params, nwords_src, nwords_trg, emb_size, hidden_size)
    src_words = jax.random.randint(k_src, (src_len, bsz), 0, nwords_src,
                                   dtype=jnp.int32)
    trg_words = jax.random.randint(k_trg, (max_trg_len, bsz), 0, nwords_trg,
                                   dtype=jnp.int32)

    outputs = seq2seq_forward(params, src_words, trg_words)
    outputs = jax.block_until_ready(outputs)

    ref = seq2seq_reference(params, src_words, trg_words, nwords_trg)
    np.testing.assert_allclose(np.asarray(outputs), np.asarray(ref),
                               rtol=1e-4, atol=1e-4)
    assert outputs.shape == (max_trg_len, bsz, nwords_trg)
    print("KERNEL_OK")
</pallas_src>

<mosaic_0001>
module attributes {stable_mosaic.version = 11 : i64} {
  func.func @_matmul_bias_kernel(%arg0: i32, %arg1: i32, %arg2: memref<48x32xf32, #tpu.memory_space<vmem>>, %arg3: memref<32x256xf32, #tpu.memory_space<vmem>>, %arg4: memref<1x256xf32, #tpu.memory_space<vmem>>, %arg5: memref<48x256xf32, #tpu.memory_space<vmem>>) attributes {dimension_semantics = [#tpu.dimension_semantics<parallel>, #tpu.dimension_semantics<parallel>], iteration_bounds = array<i64: 1, 2>, scalar_prefetch = 0 : i64, scratch_operands = 0 : i64, tpu.core_type = #tpu.core_type<tc>, window_params = [{transform_indices = @transform_0, window_bounds = array<i64: 48, 32>}, {transform_indices = @transform_1, window_bounds = array<i64: 32, 256>}, {transform_indices = @transform_2, window_bounds = array<i64: 1, 256>}, {transform_indices = @transform_3, window_bounds = array<i64: 48, 256>}]} {
    %c0 = arith.constant 0 : index
    %c0_0 = arith.constant 0 : index
    %0 = vector.load %arg2[%c0, %c0_0] : memref<48x32xf32, #tpu.memory_space<vmem>>, vector<48x32xf32>
    %c0_1 = arith.constant 0 : index
    %c0_2 = arith.constant 0 : index
    %1 = vector.load %arg3[%c0_1, %c0_2] : memref<32x256xf32, #tpu.memory_space<vmem>>, vector<32x256xf32>
    %cst = arith.constant dense<0.000000e+00> : vector<48x256xf32>
    %2 = tpu.matmul %0, %1, %cst {dimension_numbers = #tpu.dot_dimension_numbers<[1], [0], [0], [1], [0, 0, 1, 1], [], []>} : vector<48x32xf32>, vector<32x256xf32>, vector<48x256xf32> -> vector<48x256xf32>
    %c0_3 = arith.constant 0 : index
    %c0_4 = arith.constant 0 : index
    %3 = vector.load %arg4[%c0_3, %c0_4] : memref<1x256xf32, #tpu.memory_space<vmem>>, vector<1x256xf32>
    %4 = vector.broadcast %3 : vector<1x256xf32> to vector<48x256xf32>
    %5 = arith.addf %2, %4 : vector<48x256xf32>
    %c0_5 = arith.constant 0 : index
    %c0_6 = arith.constant 0 : index
    %6 = vector.load %arg5[%c0_5, %c0_6] : memref<48x256xf32, #tpu.memory_space<vmem>>, vector<48x256xf32>
    tpu.vector_store %arg5[%c0_5, %c0_6], %5 {strides = array<i32>} : memref<48x256xf32, #tpu.memory_space<vmem>>, vector<48x256xf32>,
    return
  }
  func.func @transform_0(%arg0: i32, %arg1: i32) -> (i32, i32) {
    %c0_i32 = arith.constant 0 : i32
    %c0_i32_0 = arith.constant 0 : i32
    return %arg0, %c0_i32 : i32, i32
  }
  func.func @transform_1(%arg0: i32, %arg1: i32) -> (i32, i32) {
    %c0_i32 = arith.constant 0 : i32
    %c0_i32_0 = arith.constant 0 : i32
    return %c0_i32, %arg1 : i32, i32
  }
  func.func @transform_2(%arg0: i32, %arg1: i32) -> (i32, i32) {
    %c0_i32 = arith.constant 0 : i32
    %c0_i32_0 = arith.constant 0 : i32
    return %c0_i32, %arg1 : i32, i32
  }
  func.func @transform_3(%arg0: i32, %arg1: i32) -> (i32, i32) {
    %c0_i32 = arith.constant 0 : i32
    return %arg0, %arg1 : i32, i32
  }
}

module attributes {stable_mosaic.version = 11 : i64} {
  func.func @_lstm_scan_kernel(%arg0: i32, %arg1: memref<6x8x512xf32, #tpu.memory_space<vmem>>, %arg2: memref<8x128xf32, #tpu.memory_space<vmem>>, %arg3: memref<8x128xf32, #tpu.memory_space<vmem>>, %arg4: memref<128x512xf32, #tpu.memory_space<vmem>>, %arg5: memref<8x128xf32, #tpu.memory_space<vmem>>, %arg6: memref<8x128xf32, #tpu.memory_space<vmem>>, %arg7: memref<8x128xf32, #tpu.memory_space<vmem>>, %arg8: memref<8x128xf32, #tpu.memory_space<vmem>>) attributes {dimension_semantics = [#tpu.dimension_semantics<arbitrary>], iteration_bounds = array<i64: 1>, scalar_prefetch = 0 : i64, scratch_operands = 2 : i64, tpu.core_type = #tpu.core_type<tc>, window_params = [{transform_indices = @transform_0, window_bounds = array<i64: 6, 8, 512>}, {pipeline_mode = #tpu.pipeline_mode<synchronous>, transform_indices = @transform_1, window_bounds = array<i64: 8, 128>}, {pipeline_mode = #tpu.pipeline_mode<synchronous>, transform_indices = @transform_2, window_bounds = array<i64: 8, 128>}, {pipeline_mode = #tpu.pipeline_mode<synchronous>, transform_indices = @transform_3, window_bounds = array<i64: 128, 512>}, {pipeline_mode = #tpu.pipeline_mode<synchronous>, transform_indices = @transform_4, window_bounds = array<i64: 8, 128>}, {pipeline_mode = #tpu.pipeline_mode<synchronous>, transform_indices = @transform_5, window_bounds = array<i64: 8, 128>}]} {
    %c0_i32 = arith.constant 0 : i32
    %0 = arith.cmpi eq, %arg0, %c0_i32 : i32
    %1 = arith.extui %0 : i1 to i32
    %c0_i32_0 = arith.constant 0 : i32
    %2 = arith.cmpi ne, %1, %c0_i32_0 : i32
    scf.if %2 {
      %c0_38 = arith.constant 0 : index
      %c0_39 = arith.constant 0 : index
      %136 = vector.load %arg2[%c0_38, %c0_39] : memref<8x128xf32, #tpu.memory_space<vmem>>, vector<8x128xf32>
      %c0_40 = arith.constant 0 : index
      %c0_41 = arith.constant 0 : index
      %137 = vector.load %arg7[%c0_40, %c0_41] : memref<8x128xf32, #tpu.memory_space<vmem>>, vector<8x128xf32>
      tpu.vector_store %arg7[%c0_40, %c0_41], %136 {strides = array<i32>} : memref<8x128xf32, #tpu.memory_space<vmem>>, vector<8x128xf32>,
      %c0_42 = arith.constant 0 : index
      %c0_43 = arith.constant 0 : index
      %138 = vector.load %arg3[%c0_42, %c0_43] : memref<8x128xf32, #tpu.memory_space<vmem>>, vector<8x128xf32>
      %c0_44 = arith.constant 0 : index
      %c0_45 = arith.constant 0 : index
      %139 = vector.load %arg8[%c0_44, %c0_45] : memref<8x128xf32, #tpu.memory_space<vmem>>, vector<8x128xf32>
      tpu.vector_store %arg8[%c0_44, %c0_45], %138 {strides = array<i32>} : memref<8x128xf32, #tpu.memory_space<vmem>>, vector<8x128xf32>,
    } else {
    }
    %c0 = arith.constant 0 : index
    %c0_1 = arith.constant 0 : index
    %3 = vector.load %arg4[%c0, %c0_1] : memref<128x512xf32, #tpu.memory_space<vmem>>, vector<128x512xf32>
    %c0_2 = arith.constant 0 : index
    %c0_3 = arith.constant 0 : index
    %4 = vector.load %arg7[%c0_2, %c0_3] : memref<8x128xf32, #tpu.memory_space<vmem>>, vector<8x128xf32>
    %c0_4 = arith.constant 0 : index
    %c0_5 = arith.constant 0 : index
    %5 = vector.load %arg8[%c0_4, %c0_5] : memref<8x128xf32, #tpu.memory_space<vmem>>, vector<8x128xf32>
    %c0_i32_6 = arith.constant 0 : i32
    %6 = arith.index_cast %c0_i32_6 : i32 to index
    %c0_7 = arith.constant 0 : index
    %c0_8 = arith.constant 0 : index
    %7 = vector.load %arg1[%6, %c0_7, %c0_8] : memref<6x8x512xf32, #tpu.memory_space<vmem>>, vector<1x8x512xf32>
    %8 = vector.shape_cast %7 : vector<1x8x512xf32> to vector<8x512xf32>
    %cst = arith.constant dense<0.000000e+00> : vector<8x512xf32>
    %9 = tpu.matmul %4, %3, %cst {dimension_numbers = #tpu.dot_dimension_numbers<[1], [0], [0], [1], [0, 0, 1, 1], [], []>} : vector<8x128xf32>, vector<128x512xf32>, vector<8x512xf32> -> vector<8x512xf32>
    %10 = arith.addf %8, %9 : vector<8x512xf32>
    %11 = vector.extract_strided_slice %10 {offsets = [0, 0], sizes = [8, 384], strides = [1, 1]} : vector<8x512xf32> to vector<8x384xf32>
    %12 = arith.negf %11 : vector<8x384xf32>
    %13 = math.exp %12 : vector<8x384xf32>
    %cst_9 = arith.constant 1.000000e+00 : f32
    %14 = vector.broadcast %cst_9 : f32 to vector<8x384xf32>
    %15 = arith.addf %14, %13 : vector<8x384xf32>
    %16 = arith.divf %14, %15 : vector<8x384xf32>
    %17 = vector.extract_strided_slice %16 {offsets = [0, 0], sizes = [8, 128], strides = [1, 1]} : vector<8x384xf32> to vector<8x128xf32>
    %18 = vector.extract_strided_slice %16 {offsets = [0, 128], sizes = [8, 128], strides = [1, 1]} : vector<8x384xf32> to vector<8x128xf32>
    %19 = vector.extract_strided_slice %16 {offsets = [0, 256], sizes = [8, 128], strides = [1, 1]} : vector<8x384xf32> to vector<8x128xf32>
    %20 = vector.extract_strided_slice %10 {offsets = [0, 384], sizes = [8, 128], strides = [1, 1]} : vector<8x512xf32> to vector<8x128xf32>
    %21 = math.tanh %20 : vector<8x128xf32>
    %22 = arith.mulf %18, %5 : vector<8x128xf32>
    %23 = arith.mulf %17, %21 : vector<8x128xf32>
    %24 = arith.addf %22, %23 : vector<8x128xf32>
    %25 = math.tanh %24 : vector<8x128xf32>
    %26 = arith.mulf %19, %25 : vector<8x128xf32>
    %c1_i32 = arith.constant 1 : i32
    %27 = arith.index_cast %c1_i32 : i32 to index
    %c0_10 = arith.constant 0 : index
    %c0_11 = arith.constant 0 : index
    %28 = vector.load %arg1[%27, %c0_10, %c0_11] : memref<6x8x512xf32, #tpu.memory_space<vmem>>, vector<1x8x512xf32>
    %29 = vector.shape_cast %28 : vector<1x8x512xf32> to vector<8x512xf32>
    %cst_12 = arith.constant dense<0.000000e+00> : vector<8x512xf32>
    %30 = tpu.matmul %26, %3, %cst_12 {dimension_numbers = #tpu.dot_dimension_numbers<[1], [0], [0], [1], [0, 0, 1, 1], [], []>} : vector<8x128xf32>, vector<128x512xf32>, vector<8x512xf32> -> vector<8x512xf32>
    %31 = arith.addf %29, %30 : vector<8x512xf32>
    %32 = vector.extract_strided_slice %31 {offsets = [0, 0], sizes = [8, 384], strides = [1, 1]} : vector<8x512xf32> to vector<8x384xf32>
    %33 = arith.negf %32 : vector<8x384xf32>
    %34 = math.exp %33 : vector<8x384xf32>
    %cst_13 = arith.constant 1.000000e+00 : f32
    %35 = vector.broadcast %cst_13 : f32 to vector<8x384xf32>
    %36 = arith.addf %35, %34 : vector<8x384xf32>
    %37 = arith.divf %35, %36 : vector<8x384xf32>
    %38 = vector.extract_strided_slice %37 {offsets = [0, 0], sizes = [8, 128], strides = [1, 1]} : vector<8x384xf32> to vector<8x128xf32>
    %39 = vector.extract_strided_slice %37 {offsets = [0, 128], sizes = [8, 128], strides = [1, 1]} : vector<8x384xf32> to vector<8x128xf32>
    %40 = vector.extract_strided_slice %37 {offsets = [0, 256], sizes = [8, 128], strides = [1, 1]} : vector<8x384xf32> to vector<8x128xf32>
    %41 = vector.extract_strided_slice %31 {offsets = [0, 384], sizes = [8, 128], strides = [1, 1]} : vector<8x512xf32> to vector<8x128xf32>
    %42 = math.tanh %41 : vector<8x128xf32>
    %43 = arith.mulf %39, %24 : vector<8x128xf32>
    %44 = arith.mulf %38, %42 : vector<8x128xf32>
    %45 = arith.addf %43, %44 : vector<8x128xf32>
    %46 = math.tanh %45 : vector<8x128xf32>
    %47 = arith.mulf %40, %46 : vector<8x128xf32>
    %c2_i32 = arith.constant 2 : i32
    %48 = arith.index_cast %c2_i32 : i32 to index
    %c0_14 = arith.constant 0 : index
    %c0_15 = arith.constant 0 : index
    %49 = vector.load %arg1[%48, %c0_14, %c0_15] : memref<6x8x512xf32, #tpu.memory_space<vmem>>, vector<1x8x512xf32>
    %50 = vector.shape_cast %49 : vector<1x8x512xf32> to vector<8x512xf32>
    %cst_16 = arith.constant dense<0.000000e+00> : vector<8x512xf32>
    %51 = tpu.matmul %47, %3, %cst_16 {dimension_numbers = #tpu.dot_dimension_numbers<[1], [0], [0], [1], [0, 0, 1, 1], [], []>} : vector<8x128xf32>, vector<128x512xf32>, vector<8x512xf32> -> vector<8x512xf32>
    %52 = arith.addf %50, %51 : vector<8x512xf32>
    %53 = vector.extract_strided_slice %52 {offsets = [0, 0], sizes = [8, 384], strides = [1, 1]} : vector<8x512xf32> to vector<8x384xf32>
    %54 = arith.negf %53 : vector<8x384xf32>
    %55 = math.exp %54 : vector<8x384xf32>
    %cst_17 = arith.constant 1.000000e+00 : f32
    %56 = vector.broadcast %cst_17 : f32 to vector<8x384xf32>
    %57 = arith.addf %56, %55 : vector<8x384xf32>
    %58 = arith.divf %56, %57 : vector<8x384xf32>
    %59 = vector.extract_strided_slice %58 {offsets = [0, 0], sizes = [8, 128], strides = [1, 1]} : vector<8x384xf32> to vector<8x128xf32>
    %60 = vector.extract_strided_slice %58 {offsets = [0, 128], sizes = [8, 128], strides = [1, 1]} : vector<8x384xf32> to vector<8x128xf32>
    %61 = vector.extract_strided_slice %58 {offsets = [0, 256], sizes = [8, 128], strides = [1, 1]} : vector<8x384xf32> to vector<8x128xf32>
    %62 = vector.extract_strided_slice %52 {offsets = [0, 384], sizes = [8, 128], strides = [1, 1]} : vector<8x512xf32> to vector<8x128xf32>
    %63 = math.tanh %62 : vector<8x128xf32>
    %64 = arith.mulf %60, %45 : vector<8x128xf32>
    %65 = arith.mulf %59, %63 : vector<8x128xf32>
    %66 = arith.addf %64, %65 : vector<8x128xf32>
    %67 = math.tanh %66 : vector<8x128xf32>
    %68 = arith.mulf %61, %67 : vector<8x128xf32>
    %c3_i32 = arith.constant 3 : i32
    %69 = arith.index_cast %c3_i32 : i32 to index
    %c0_18 = arith.constant 0 : index
    %c0_19 = arith.constant 0 : index
    %70 = vector.load %arg1[%69, %c0_18, %c0_19] : memref<6x8x512xf32, #tpu.memory_space<vmem>>, vector<1x8x512xf32>
    %71 = vector.shape_cast %70 : vector<1x8x512xf32> to vector<8x512xf32>
    %cst_20 = arith.constant dense<0.000000e+00> : vector<8x512xf32>
    %72 = tpu.matmul %68, %3, %cst_20 {dimension_numbers = #tpu.dot_dimension_numbers<[1], [0], [0], [1], [0, 0, 1, 1], [], []>} : vector<8x128xf32>, vector<128x512xf32>, vector<8x512xf32> -> vector<8x512xf32>
    %73 = arith.addf %71, %72 : vector<8x512xf32>
    %74 = vector.extract_strided_slice %73 {offsets = [0, 0], sizes = [8, 384], strides = [1, 1]} : vector<8x512xf32> to vector<8x384xf32>
    %75 = arith.negf %74 : vector<8x384xf32>
    %76 = math.exp %75 : vector<8x384xf32>
    %cst_21 = arith.constant 1.000000e+00 : f32
    %77 = vector.broadcast %cst_21 : f32 to vector<8x384xf32>
    %78 = arith.addf %77, %76 : vector<8x384xf32>
    %79 = arith.divf %77, %78 : vector<8x384xf32>
    %80 = vector.extract_strided_slice %79 {offsets = [0, 0], sizes = [8, 128], strides = [1, 1]} : vector<8x384xf32> to vector<8x128xf32>
    %81 = vector.extract_strided_slice %79 {offsets = [0, 128], sizes = [8, 128], strides = [1, 1]} : vector<8x384xf32> to vector<8x128xf32>
    %82 = vector.extract_strided_slice %79 {offsets = [0, 256], sizes = [8, 128], strides = [1, 1]} : vector<8x384xf32> to vector<8x128xf32>
    %83 = vector.extract_strided_slice %73 {offsets = [0, 384], sizes = [8, 128], strides = [1, 1]} : vector<8x512xf32> to vector<8x128xf32>
    %84 = math.tanh %83 : vector<8x128xf32>
    %85 = arith.mulf %81, %66 : vector<8x128xf32>
    %86 = arith.mulf %80, %84 : vector<8x128xf32>
    %87 = arith.addf %85, %86 : vector<8x128xf32>
    %88 = math.tanh %87 : vector<8x128xf32>
    %89 = arith.mulf %82, %88 : vector<8x128xf32>
    %c4_i32 = arith.constant 4 : i32
    %90 = arith.index_cast %c4_i32 : i32 to index
    %c0_22 = arith.constant 0 : index
    %c0_23 = arith.constant 0 : index
    %91 = vector.load %arg1[%90, %c0_22, %c0_23] : memref<6x8x512xf32, #tpu.memory_space<vmem>>, vector<1x8x512xf32>
    %92 = vector.shape_cast %91 : vector<1x8x512xf32> to vector<8x512xf32>
    %cst_24 = arith.constant dense<0.000000e+00> : vector<8x512xf32>
    %93 = tpu.matmul %89, %3, %cst_24 {dimension_numbers = #tpu.dot_dimension_numbers<[1], [0], [0], [1], [0, 0, 1, 1], [], []>} : vector<8x128xf32>, vector<128x512xf32>, vector<8x512xf32> -> vector<8x512xf32>
    %94 = arith.addf %92, %93 : vector<8x512xf32>
    %95 = vector.extract_strided_slice %94 {offsets = [0, 0], sizes = [8, 384], strides = [1, 1]} : vector<8x512xf32> to vector<8x384xf32>
    %96 = arith.negf %95 : vector<8x384xf32>
    %97 = math.exp %96 : vector<8x384xf32>
    %cst_25 = arith.constant 1.000000e+00 : f32
    %98 = vector.broadcast %cst_25 : f32 to vector<8x384xf32>
    %99 = arith.addf %98, %97 : vector<8x384xf32>
    %100 = arith.divf %98, %99 : vector<8x384xf32>
    %101 = vector.extract_strided_slice %100 {offsets = [0, 0], sizes = [8, 128], strides = [1, 1]} : vector<8x384xf32> to vector<8x128xf32>
    %102 = vector.extract_strided_slice %100 {offsets = [0, 128], sizes = [8, 128], strides = [1, 1]} : vector<8x384xf32> to vector<8x128xf32>
    %103 = vector.extract_strided_slice %100 {offsets = [0, 256], sizes = [8, 128], strides = [1, 1]} : vector<8x384xf32> to vector<8x128xf32>
    %104 = vector.extract_strided_slice %94 {offsets = [0, 384], sizes = [8, 128], strides = [1, 1]} : vector<8x512xf32> to vector<8x128xf32>
    %105 = math.tanh %104 : vector<8x128xf32>
    %106 = arith.mulf %102, %87 : vector<8x128xf32>
    %107 = arith.mulf %101, %105 : vector<8x128xf32>
    %108 = arith.addf %106, %107 : vector<8x128xf32>
    %109 = math.tanh %108 : vector<8x128xf32>
    %110 = arith.mulf %103, %109 : vector<8x128xf32>
    %c5_i32 = arith.constant 5 : i32
    %111 = arith.index_cast %c5_i32 : i32 to index
    %c0_26 = arith.constant 0 : index
    %c0_27 = arith.constant 0 : index
    %112 = vector.load %arg1[%111, %c0_26, %c0_27] : memref<6x8x512xf32, #tpu.memory_space<vmem>>, vector<1x8x512xf32>
    %113 = vector.shape_cast %112 : vector<1x8x512xf32> to vector<8x512xf32>
    %cst_28 = arith.constant dense<0.000000e+00> : vector<8x512xf32>
    %114 = tpu.matmul %110, %3, %cst_28 {dimension_numbers = #tpu.dot_dimension_numbers<[1], [0], [0], [1], [0, 0, 1, 1], [], []>} : vector<8x128xf32>, vector<128x512xf32>, vector<8x512xf32> -> vector<8x512xf32>
    %115 = arith.addf %113, %114 : vector<8x512xf32>
    %116 = vector.extract_strided_slice %115 {offsets = [0, 0], sizes = [8, 384], strides = [1, 1]} : vector<8x512xf32> to vector<8x384xf32>
    %117 = arith.negf %116 : vector<8x384xf32>
    %118 = math.exp %117 : vector<8x384xf32>
    %cst_29 = arith.constant 1.000000e+00 : f32
    %119 = vector.broadcast %cst_29 : f32 to vector<8x384xf32>
    %120 = arith.addf %119, %118 : vector<8x384xf32>
    %121 = arith.divf %119, %120 : vector<8x384xf32>
    %122 = vector.extract_strided_slice %121 {offsets = [0, 0], sizes = [8, 128], strides = [1, 1]} : vector<8x384xf32> to vector<8x128xf32>
    %123 = vector.extract_strided_slice %121 {offsets = [0, 128], sizes = [8, 128], strides = [1, 1]} : vector<8x384xf32> to vector<8x128xf32>
    %124 = vector.extract_strided_slice %121 {offsets = [0, 256], sizes = [8, 128], strides = [1, 1]} : vector<8x384xf32> to vector<8x128xf32>
    %125 = vector.extract_strided_slice %115 {offsets = [0, 384], sizes = [8, 128], strides = [1, 1]} : vector<8x512xf32> to vector<8x128xf32>
    %126 = math.tanh %125 : vector<8x128xf32>
    %127 = arith.mulf %123, %108 : vector<8x128xf32>
    %128 = arith.mulf %122, %126 : vector<8x128xf32>
    %129 = arith.addf %127, %128 : vector<8x128xf32>
    %130 = math.tanh %129 : vector<8x128xf32>
    %131 = arith.mulf %124, %130 : vector<8x128xf32>
    %c6_i32 = arith.constant 6 : i32
    %c0_30 = arith.constant 0 : index
    %c0_31 = arith.constant 0 : index
    %132 = vector.load %arg7[%c0_30, %c0_31] : memref<8x128xf32, #tpu.memory_space<vmem>>, vector<8x128xf32>
    tpu.vector_store %arg7[%c0_30, %c0_31], %131 {strides = array<i32>} : memref<8x128xf32, #tpu.memory_space<vmem>>, vector<8x128xf32>,
    %c0_32 = arith.constant 0 : index
    %c0_33 = arith.constant 0 : index
    %133 = vector.load %arg8[%c0_32, %c0_33] : memref<8x128xf32, #tpu.memory_space<vmem>>, vector<8x128xf32>
    tpu.vector_store %arg8[%c0_32, %c0_33], %129 {strides = array<i32>} : memref<8x128xf32, #tpu.memory_space<vmem>>, vector<8x128xf32>,
    %c0_34 = arith.constant 0 : index
    %c0_35 = arith.constant 0 : index
    %134 = vector.load %arg5[%c0_34, %c0_35] : memref<8x128xf32, #tpu.memory_space<vmem>>, vector<8x128xf32>
    tpu.vector_store %arg5[%c0_34, %c0_35], %131 {strides = array<i32>} : memref<8x128xf32, #tpu.memory_space<vmem>>, vector<8x128xf32>,
    %c0_36 = arith.constant 0 : index
    %c0_37 = arith.constant 0 : index
    %135 = vector.load %arg6[%c0_36, %c0_37] : memref<8x128xf32, #tpu.memory_space<vmem>>, vector<8x128xf32>
    tpu.vector_store %arg6[%c0_36, %c0_37], %129 {strides = array<i32>} : memref<8x128xf32, #tpu.memory_space<vmem>>, vector<8x128xf32>,
    return
  }
  func.func @transform_0(%arg0: i32) -> (i32, i32, i32) {
    %c0_i32 = arith.constant 0 : i32
    %c0_i32_0 = arith.constant 0 : i32
    %c0_i32_1 = arith.constant 0 : i32
    return %arg0, %c0_i32, %c0_i32_0 : i32, i32, i32
  }
  func.func @transform_1(%arg0: i32) -> (i32, i32) {
    %c0_i32 = arith.constant 0 : i32
    %c0_i32_0 = arith.constant 0 : i32
    %c0_i32_1 = arith.constant 0 : i32
    return %c0_i32, %c0_i32_0 : i32, i32
  }
  func.func @transform_2(%arg0: i32) -> (i32, i32) {
    %c0_i32 = arith.constant 0 : i32
    %c0_i32_0 = arith.constant 0 : i32
    %c0_i32_1 = arith.constant 0 : i32
    return %c0_i32, %c0_i32_0 : i32, i32
  }
  func.func @transform_3(%arg0: i32) -> (i32, i32) {
    %c0_i32 = arith.constant 0 : i32
    %c0_i32_0 = arith.constant 0 : i32
    %c0_i32_1 = arith.constant 0 : i32
    return %c0_i32, %c0_i32_0 : i32, i32
  }
  func.func @transform_4(%arg0: i32) -> (i32, i32) {
    %c0_i32 = arith.constant 0 : i32
    %c0_i32_0 = arith.constant 0 : i32
    %c0_i32_1 = arith.constant 0 : i32
    return %c0_i32, %c0_i32_0 : i32, i32
  }
  func.func @transform_5(%arg0: i32) -> (i32, i32) {
    %c0_i32 = arith.constant 0 : i32
    %c0_i32_0 = arith.constant 0 : i32
    %c0_i32_1 = arith.constant 0 : i32
    return %c0_i32, %c0_i32_0 : i32, i32
  }
}

module attributes {stable_mosaic.version = 11 : i64} {
  func.func @_lstm_scan_kernel(%arg0: i32, %arg1: memref<6x8x512xf32, #tpu.memory_space<vmem>>, %arg2: memref<8x128xf32, #tpu.memory_space<vmem>>, %arg3: memref<8x128xf32, #tpu.memory_space<vmem>>, %arg4: memref<128x512xf32, #tpu.memory_space<vmem>>, %arg5: memref<6x8x128xf32, #tpu.memory_space<vmem>>, %arg6: memref<8x128xf32, #tpu.memory_space<vmem>>, %arg7: memref<8x128xf32, #tpu.memory_space<vmem>>, %arg8: memref<8x128xf32, #tpu.memory_space<vmem>>, %arg9: memref<8x128xf32, #tpu.memory_space<vmem>>) attributes {dimension_semantics = [#tpu.dimension_semantics<arbitrary>], iteration_bounds = array<i64: 1>, scalar_prefetch = 0 : i64, scratch_operands = 2 : i64, tpu.core_type = #tpu.core_type<tc>, window_params = [{transform_indices = @transform_0, window_bounds = array<i64: 6, 8, 512>}, {pipeline_mode = #tpu.pipeline_mode<synchronous>, transform_indices = @transform_1, window_bounds = array<i64: 8, 128>}, {pipeline_mode = #tpu.pipeline_mode<synchronous>, transform_indices = @transform_2, window_bounds = array<i64: 8, 128>}, {pipeline_mode = #tpu.pipeline_mode<synchronous>, transform_indices = @transform_3, window_bounds = array<i64: 128, 512>}, {transform_indices = @transform_4, window_bounds = array<i64: 6, 8, 128>}, {pipeline_mode = #tpu.pipeline_mode<synchronous>, transform_indices = @transform_5, window_bounds = array<i64: 8, 128>}, {pipeline_mode = #tpu.pipeline_mode<synchronous>, transform_indices = @transform_6, window_bounds = array<i64: 8, 128>}]} {
    %c0_i32 = arith.constant 0 : i32
    %0 = arith.cmpi eq, %arg0, %c0_i32 : i32
    %1 = arith.extui %0 : i1 to i32
    %c0_i32_0 = arith.constant 0 : i32
    %2 = arith.cmpi ne, %1, %c0_i32_0 : i32
    scf.if %2 {
      %c0_50 = arith.constant 0 : index
      %c0_51 = arith.constant 0 : index
      %160 = vector.load %arg2[%c0_50, %c0_51] : memref<8x128xf32, #tpu.memory_space<vmem>>, vector<8x128xf32>
      %c0_52 = arith.constant 0 : index
      %c0_53 = arith.constant 0 : index
      %161 = vector.load %arg8[%c0_52, %c0_53] : memref<8x128xf32, #tpu.memory_space<vmem>>, vector<8x128xf32>
      tpu.vector_store %arg8[%c0_52, %c0_53], %160 {strides = array<i32>} : memref<8x128xf32, #tpu.memory_space<vmem>>, vector<8x128xf32>,
      %c0_54 = arith.constant 0 : index
      %c0_55 = arith.constant 0 : index
      %162 = vector.load %arg3[%c0_54, %c0_55] : memref<8x128xf32, #tpu.memory_space<vmem>>, vector<8x128xf32>
      %c0_56 = arith.constant 0 : index
      %c0_57 = arith.constant 0 : index
      %163 = vector.load %arg9[%c0_56, %c0_57] : memref<8x128xf32, #tpu.memory_space<vmem>>, vector<8x128xf32>
      tpu.vector_store %arg9[%c0_56, %c0_57], %162 {strides = array<i32>} : memref<8x128xf32, #tpu.memory_space<vmem>>, vector<8x128xf32>,
    } else {
    }
    %c0 = arith.constant 0 : index
    %c0_1 = arith.constant 0 : index
    %3 = vector.load %arg4[%c0, %c0_1] : memref<128x512xf32, #tpu.memory_space<vmem>>, vector<128x512xf32>
    %c0_2 = arith.constant 0 : index
    %c0_3 = arith.constant 0 : index
    %4 = vector.load %arg8[%c0_2, %c0_3] : memref<8x128xf32, #tpu.memory_space<vmem>>, vector<8x128xf32>
    %c0_4 = arith.constant 0 : index
    %c0_5 = arith.constant 0 : index
    %5 = vector.load %arg9[%c0_4, %c0_5] : memref<8x128xf32, #tpu.memory_space<vmem>>, vector<8x128xf32>
    %c0_i32_6 = arith.constant 0 : i32
    %6 = arith.index_cast %c0_i32_6 : i32 to index
    %c0_7 = arith.constant 0 : index
    %c0_8 = arith.constant 0 : index
    %7 = vector.load %arg1[%6, %c0_7, %c0_8] : memref<6x8x512xf32, #tpu.memory_space<vmem>>, vector<1x8x512xf32>
    %8 = vector.shape_cast %7 : vector<1x8x512xf32> to vector<8x512xf32>
    %cst = arith.constant dense<0.000000e+00> : vector<8x512xf32>
    %9 = tpu.matmul %4, %3, %cst {dimension_numbers = #tpu.dot_dimension_numbers<[1], [0], [0], [1], [0, 0, 1, 1], [], []>} : vector<8x128xf32>, vector<128x512xf32>, vector<8x512xf32> -> vector<8x512xf32>
    %10 = arith.addf %8, %9 : vector<8x512xf32>
    %11 = vector.extract_strided_slice %10 {offsets = [0, 0], sizes = [8, 384], strides = [1, 1]} : vector<8x512xf32> to vector<8x384xf32>
    %12 = arith.negf %11 : vector<8x384xf32>
    %13 = math.exp %12 : vector<8x384xf32>
    %cst_9 = arith.constant 1.000000e+00 : f32
    %14 = vector.broadcast %cst_9 : f32 to vector<8x384xf32>
    %15 = arith.addf %14, %13 : vector<8x384xf32>
    %16 = arith.divf %14, %15 : vector<8x384xf32>
    %17 = vector.extract_strided_slice %16 {offsets = [0, 0], sizes = [8, 128], strides = [1, 1]} : vector<8x384xf32> to vector<8x128xf32>
    %18 = vector.extract_strided_slice %16 {offsets = [0, 128], sizes = [8, 128], strides = [1, 1]} : vector<8x384xf32> to vector<8x128xf32>
    %19 = vector.extract_strided_slice %16 {offsets = [0, 256], sizes = [8, 128], strides = [1, 1]} : vector<8x384xf32> to vector<8x128xf32>
    %20 = vector.extract_strided_slice %10 {offsets = [0, 384], sizes = [8, 128], strides = [1, 1]} : vector<8x512xf32> to vector<8x128xf32>
    %21 = math.tanh %20 : vector<8x128xf32>
    %22 = arith.mulf %18, %5 : vector<8x128xf32>
    %23 = arith.mulf %17, %21 : vector<8x128xf32>
    %24 = arith.addf %22, %23 : vector<8x128xf32>
    %25 = math.tanh %24 : vector<8x128xf32>
    %26 = arith.mulf %19, %25 : vector<8x128xf32>
    %27 = arith.index_cast %c0_i32_6 : i32 to index
    %c0_10 = arith.constant 0 : index
    %c0_11 = arith.constant 0 : index
    %28 = vector.load %arg5[%27, %c0_10, %c0_11] : memref<6x8x128xf32, #tpu.memory_space<vmem>>, vector<1x8x128xf32>
    %29 = vector.shape_cast %28 : vector<1x8x128xf32> to vector<8x128xf32>
    %30 = vector.shape_cast %26 : vector<8x128xf32> to vector<1x8x128xf32>
    tpu.vector_store %arg5[%27, %c0_10, %c0_11], %30 {strides = array<i32>} : memref<6x8x128xf32, #tpu.memory_space<vmem>>, vector<1x8x128xf32>,
    %c1_i32 = arith.constant 1 : i32
    %31 = arith.index_cast %c1_i32 : i32 to index
    %c0_12 = arith.constant 0 : index
    %c0_13 = arith.constant 0 : index
    %32 = vector.load %arg1[%31, %c0_12, %c0_13] : memref<6x8x512xf32, #tpu.memory_space<vmem>>, vector<1x8x512xf32>
    %33 = vector.shape_cast %32 : vector<1x8x512xf32> to vector<8x512xf32>
    %cst_14 = arith.constant dense<0.000000e+00> : vector<8x512xf32>
    %34 = tpu.matmul %26, %3, %cst_14 {dimension_numbers = #tpu.dot_dimension_numbers<[1], [0], [0], [1], [0, 0, 1, 1], [], []>} : vector<8x128xf32>, vector<128x512xf32>, vector<8x512xf32> -> vector<8x512xf32>
    %35 = arith.addf %33, %34 : vector<8x512xf32>
    %36 = vector.extract_strided_slice %35 {offsets = [0, 0], sizes = [8, 384], strides = [1, 1]} : vector<8x512xf32> to vector<8x384xf32>
    %37 = arith.negf %36 : vector<8x384xf32>
    %38 = math.exp %37 : vector<8x384xf32>
    %cst_15 = arith.constant 1.000000e+00 : f32
    %39 = vector.broadcast %cst_15 : f32 to vector<8x384xf32>
    %40 = arith.addf %39, %38 : vector<8x384xf32>
    %41 = arith.divf %39, %40 : vector<8x384xf32>
    %42 = vector.extract_strided_slice %41 {offsets = [0, 0], sizes = [8, 128], strides = [1, 1]} : vector<8x384xf32> to vector<8x128xf32>
    %43 = vector.extract_strided_slice %41 {offsets = [0, 128], sizes = [8, 128], strides = [1, 1]} : vector<8x384xf32> to vector<8x128xf32>
    %44 = vector.extract_strided_slice %41 {offsets = [0, 256], sizes = [8, 128], strides = [1, 1]} : vector<8x384xf32> to vector<8x128xf32>
    %45 = vector.extract_strided_slice %35 {offsets = [0, 384], sizes = [8, 128], strides = [1, 1]} : vector<8x512xf32> to vector<8x128xf32>
    %46 = math.tanh %45 : vector<8x128xf32>
    %47 = arith.mulf %43, %24 : vector<8x128xf32>
    %48 = arith.mulf %42, %46 : vector<8x128xf32>
    %49 = arith.addf %47, %48 : vector<8x128xf32>
    %50 = math.tanh %49 : vector<8x128xf32>
    %51 = arith.mulf %44, %50 : vector<8x128xf32>
    %52 = arith.index_cast %c1_i32 : i32 to index
    %c0_16 = arith.constant 0 : index
    %c0_17 = arith.constant 0 : index
    %53 = vector.load %arg5[%52, %c0_16, %c0_17] : memref<6x8x128xf32, #tpu.memory_space<vmem>>, vector<1x8x128xf32>
    %54 = vector.shape_cast %53 : vector<1x8x128xf32> to vector<8x128xf32>
    %55 = vector.shape_cast %51 : vector<8x128xf32> to vector<1x8x128xf32>
    tpu.vector_store %arg5[%52, %c0_16, %c0_17], %55 {strides = array<i32>} : memref<6x8x128xf32, #tpu.memory_space<vmem>>, vector<1x8x128xf32>,
    %c2_i32 = arith.constant 2 : i32
    %56 = arith.index_cast %c2_i32 : i32 to index
    %c0_18 = arith.constant 0 : index
    %c0_19 = arith.constant 0 : index
    %57 = vector.load %arg1[%56, %c0_18, %c0_19] : memref<6x8x512xf32, #tpu.memory_space<vmem>>, vector<1x8x512xf32>
    %58 = vector.shape_cast %57 : vector<1x8x512xf32> to vector<8x512xf32>
    %cst_20 = arith.constant dense<0.000000e+00> : vector<8x512xf32>
    %59 = tpu.matmul %51, %3, %cst_20 {dimension_numbers = #tpu.dot_dimension_numbers<[1], [0], [0], [1], [0, 0, 1, 1], [], []>} : vector<8x128xf32>, vector<128x512xf32>, vector<8x512xf32> -> vector<8x512xf32>
    %60 = arith.addf %58, %59 : vector<8x512xf32>
    %61 = vector.extract_strided_slice %60 {offsets = [0, 0], sizes = [8, 384], strides = [1, 1]} : vector<8x512xf32> to vector<8x384xf32>
    %62 = arith.negf %61 : vector<8x384xf32>
    %63 = math.exp %62 : vector<8x384xf32>
    %cst_21 = arith.constant 1.000000e+00 : f32
    %64 = vector.broadcast %cst_21 : f32 to vector<8x384xf32>
    %65 = arith.addf %64, %63 : vector<8x384xf32>
    %66 = arith.divf %64, %65 : vector<8x384xf32>
    %67 = vector.extract_strided_slice %66 {offsets = [0, 0], sizes = [8, 128], strides = [1, 1]} : vector<8x384xf32> to vector<8x128xf32>
    %68 = vector.extract_strided_slice %66 {offsets = [0, 128], sizes = [8, 128], strides = [1, 1]} : vector<8x384xf32> to vector<8x128xf32>
    %69 = vector.extract_strided_slice %66 {offsets = [0, 256], sizes = [8, 128], strides = [1, 1]} : vector<8x384xf32> to vector<8x128xf32>
    %70 = vector.extract_strided_slice %60 {offsets = [0, 384], sizes = [8, 128], strides = [1, 1]} : vector<8x512xf32> to vector<8x128xf32>
    %71 = math.tanh %70 : vector<8x128xf32>
    %72 = arith.mulf %68, %49 : vector<8x128xf32>
    %73 = arith.mulf %67, %71 : vector<8x128xf32>
    %74 = arith.addf %72, %73 : vector<8x128xf32>
    %75 = math.tanh %74 : vector<8x128xf32>
    %76 = arith.mulf %69, %75 : vector<8x128xf32>
    %77 = arith.index_cast %c2_i32 : i32 to index
    %c0_22 = arith.constant 0 : index
    %c0_23 = arith.constant 0 : index
    %78 = vector.load %arg5[%77, %c0_22, %c0_23] : memref<6x8x128xf32, #tpu.memory_space<vmem>>, vector<1x8x128xf32>
    %79 = vector.shape_cast %78 : vector<1x8x128xf32> to vector<8x128xf32>
    %80 = vector.shape_cast %76 : vector<8x128xf32> to vector<1x8x128xf32>
    tpu.vector_store %arg5[%77, %c0_22, %c0_23], %80 {strides = array<i32>} : memref<6x8x128xf32, #tpu.memory_space<vmem>>, vector<1x8x128xf32>,
    %c3_i32 = arith.constant 3 : i32
    %81 = arith.index_cast %c3_i32 : i32 to index
    %c0_24 = arith.constant 0 : index
    %c0_25 = arith.constant 0 : index
    %82 = vector.load %arg1[%81, %c0_24, %c0_25] : memref<6x8x512xf32, #tpu.memory_space<vmem>>, vector<1x8x512xf32>
    %83 = vector.shape_cast %82 : vector<1x8x512xf32> to vector<8x512xf32>
    %cst_26 = arith.constant dense<0.000000e+00> : vector<8x512xf32>
    %84 = tpu.matmul %76, %3, %cst_26 {dimension_numbers = #tpu.dot_dimension_numbers<[1], [0], [0], [1], [0, 0, 1, 1], [], []>} : vector<8x128xf32>, vector<128x512xf32>, vector<8x512xf32> -> vector<8x512xf32>
    %85 = arith.addf %83, %84 : vector<8x512xf32>
    %86 = vector.extract_strided_slice %85 {offsets = [0, 0], sizes = [8, 384], strides = [1, 1]} : vector<8x512xf32> to vector<8x384xf32>
    %87 = arith.negf %86 : vector<8x384xf32>
    %88 = math.exp %87 : vector<8x384xf32>
    %cst_27 = arith.constant 1.000000e+00 : f32
    %89 = vector.broadcast %cst_27 : f32 to vector<8x384xf32>
    %90 = arith.addf %89, %88 : vector<8x384xf32>
    %91 = arith.divf %89, %90 : vector<8x384xf32>
    %92 = vector.extract_strided_slice %91 {offsets = [0, 0], sizes = [8, 128], strides = [1, 1]} : vector<8x384xf32> to vector<8x128xf32>
    %93 = vector.extract_strided_slice %91 {offsets = [0, 128], sizes = [8, 128], strides = [1, 1]} : vector<8x384xf32> to vector<8x128xf32>
    %94 = vector.extract_strided_slice %91 {offsets = [0, 256], sizes = [8, 128], strides = [1, 1]} : vector<8x384xf32> to vector<8x128xf32>
    %95 = vector.extract_strided_slice %85 {offsets = [0, 384], sizes = [8, 128], strides = [1, 1]} : vector<8x512xf32> to vector<8x128xf32>
    %96 = math.tanh %95 : vector<8x128xf32>
    %97 = arith.mulf %93, %74 : vector<8x128xf32>
    %98 = arith.mulf %92, %96 : vector<8x128xf32>
    %99 = arith.addf %97, %98 : vector<8x128xf32>
    %100 = math.tanh %99 : vector<8x128xf32>
    %101 = arith.mulf %94, %100 : vector<8x128xf32>
    %102 = arith.index_cast %c3_i32 : i32 to index
    %c0_28 = arith.constant 0 : index
    %c0_29 = arith.constant 0 : index
    %103 = vector.load %arg5[%102, %c0_28, %c0_29] : memref<6x8x128xf32, #tpu.memory_space<vmem>>, vector<1x8x128xf32>
    %104 = vector.shape_cast %103 : vector<1x8x128xf32> to vector<8x128xf32>
    %105 = vector.shape_cast %101 : vector<8x128xf32> to vector<1x8x128xf32>
    tpu.vector_store %arg5[%102, %c0_28, %c0_29], %105 {strides = array<i32>} : memref<6x8x128xf32, #tpu.memory_space<vmem>>, vector<1x8x128xf32>,
    %c4_i32 = arith.constant 4 : i32
    %106 = arith.index_cast %c4_i32 : i32 to index
    %c0_30 = arith.constant 0 : index
    %c0_31 = arith.constant 0 : index
    %107 = vector.load %arg1[%106, %c0_30, %c0_31] : memref<6x8x512xf32, #tpu.memory_space<vmem>>, vector<1x8x512xf32>
    %108 = vector.shape_cast %107 : vector<1x8x512xf32> to vector<8x512xf32>
    %cst_32 = arith.constant dense<0.000000e+00> : vector<8x512xf32>
    %109 = tpu.matmul %101, %3, %cst_32 {dimension_numbers = #tpu.dot_dimension_numbers<[1], [0], [0], [1], [0, 0, 1, 1], [], []>} : vector<8x128xf32>, vector<128x512xf32>, vector<8x512xf32> -> vector<8x512xf32>
    %110 = arith.addf %108, %109 : vector<8x512xf32>
    %111 = vector.extract_strided_slice %110 {offsets = [0, 0], sizes = [8, 384], strides = [1, 1]} : vector<8x512xf32> to vector<8x384xf32>
    %112 = arith.negf %111 : vector<8x384xf32>
    %113 = math.exp %112 : vector<8x384xf32>
    %cst_33 = arith.constant 1.000000e+00 : f32
    %114 = vector.broadcast %cst_33 : f32 to vector<8x384xf32>
    %115 = arith.addf %114, %113 : vector<8x384xf32>
    %116 = arith.divf %114, %115 : vector<8x384xf32>
    %117 = vector.extract_strided_slice %116 {offsets = [0, 0], sizes = [8, 128], strides = [1, 1]} : vector<8x384xf32> to vector<8x128xf32>
    %118 = vector.extract_strided_slice %116 {offsets = [0, 128], sizes = [8, 128], strides = [1, 1]} : vector<8x384xf32> to vector<8x128xf32>
    %119 = vector.extract_strided_slice %116 {offsets = [0, 256], sizes = [8, 128], strides = [1, 1]} : vector<8x384xf32> to vector<8x128xf32>
    %120 = vector.extract_strided_slice %110 {offsets = [0, 384], sizes = [8, 128], strides = [1, 1]} : vector<8x512xf32> to vector<8x128xf32>
    %121 = math.tanh %120 : vector<8x128xf32>
    %122 = arith.mulf %118, %99 : vector<8x128xf32>
    %123 = arith.mulf %117, %121 : vector<8x128xf32>
    %124 = arith.addf %122, %123 : vector<8x128xf32>
    %125 = math.tanh %124 : vector<8x128xf32>
    %126 = arith.mulf %119, %125 : vector<8x128xf32>
    %127 = arith.index_cast %c4_i32 : i32 to index
    %c0_34 = arith.constant 0 : index
    %c0_35 = arith.constant 0 : index
    %128 = vector.load %arg5[%127, %c0_34, %c0_35] : memref<6x8x128xf32, #tpu.memory_space<vmem>>, vector<1x8x128xf32>
    %129 = vector.shape_cast %128 : vector<1x8x128xf32> to vector<8x128xf32>
    %130 = vector.shape_cast %126 : vector<8x128xf32> to vector<1x8x128xf32>
    tpu.vector_store %arg5[%127, %c0_34, %c0_35], %130 {strides = array<i32>} : memref<6x8x128xf32, #tpu.memory_space<vmem>>, vector<1x8x128xf32>,
    %c5_i32 = arith.constant 5 : i32
    %131 = arith.index_cast %c5_i32 : i32 to index
    %c0_36 = arith.constant 0 : index
    %c0_37 = arith.constant 0 : index
    %132 = vector.load %arg1[%131, %c0_36, %c0_37] : memref<6x8x512xf32, #tpu.memory_space<vmem>>, vector<1x8x512xf32>
    %133 = vector.shape_cast %132 : vector<1x8x512xf32> to vector<8x512xf32>
    %cst_38 = arith.constant dense<0.000000e+00> : vector<8x512xf32>
    %134 = tpu.matmul %126, %3, %cst_38 {dimension_numbers = #tpu.dot_dimension_numbers<[1], [0], [0], [1], [0, 0, 1, 1], [], []>} : vector<8x128xf32>, vector<128x512xf32>, vector<8x512xf32> -> vector<8x512xf32>
    %135 = arith.addf %133, %134 : vector<8x512xf32>
    %136 = vector.extract_strided_slice %135 {offsets = [0, 0], sizes = [8, 384], strides = [1, 1]} : vector<8x512xf32> to vector<8x384xf32>
    %137 = arith.negf %136 : vector<8x384xf32>
    %138 = math.exp %137 : vector<8x384xf32>
    %cst_39 = arith.constant 1.000000e+00 : f32
    %139 = vector.broadcast %cst_39 : f32 to vector<8x384xf32>
    %140 = arith.addf %139, %138 : vector<8x384xf32>
    %141 = arith.divf %139, %140 : vector<8x384xf32>
    %142 = vector.extract_strided_slice %141 {offsets = [0, 0], sizes = [8, 128], strides = [1, 1]} : vector<8x384xf32> to vector<8x128xf32>
    %143 = vector.extract_strided_slice %141 {offsets = [0, 128], sizes = [8, 128], strides = [1, 1]} : vector<8x384xf32> to vector<8x128xf32>
    %144 = vector.extract_strided_slice %141 {offsets = [0, 256], sizes = [8, 128], strides = [1, 1]} : vector<8x384xf32> to vector<8x128xf32>
    %145 = vector.extract_strided_slice %135 {offsets = [0, 384], sizes = [8, 128], strides = [1, 1]} : vector<8x512xf32> to vector<8x128xf32>
    %146 = math.tanh %145 : vector<8x128xf32>
    %147 = arith.mulf %143, %124 : vector<8x128xf32>
    %148 = arith.mulf %142, %146 : vector<8x128xf32>
    %149 = arith.addf %147, %148 : vector<8x128xf32>
    %150 = math.tanh %149 : vector<8x128xf32>
    %151 = arith.mulf %144, %150 : vector<8x128xf32>
    %152 = arith.index_cast %c5_i32 : i32 to index
    %c0_40 = arith.constant 0 : index
    %c0_41 = arith.constant 0 : index
    %153 = vector.load %arg5[%152, %c0_40, %c0_41] : memref<6x8x128xf32, #tpu.memory_space<vmem>>, vector<1x8x128xf32>
    %154 = vector.shape_cast %153 : vector<1x8x128xf32> to vector<8x128xf32>
    %155 = vector.shape_cast %151 : vector<8x128xf32> to vector<1x8x128xf32>
    tpu.vector_store %arg5[%152, %c0_40, %c0_41], %155 {strides = array<i32>} : memref<6x8x128xf32, #tpu.memory_space<vmem>>, vector<1x8x128xf32>,
    %c6_i32 = arith.constant 6 : i32
    %c0_42 = arith.constant 0 : index
    %c0_43 = arith.constant 0 : index
    %156 = vector.load %arg8[%c0_42, %c0_43] : memref<8x128xf32, #tpu.memory_space<vmem>>, vector<8x128xf32>
    tpu.vector_store %arg8[%c0_42, %c0_43], %151 {strides = array<i32>} : memref<8x128xf32, #tpu.memory_space<vmem>>, vector<8x128xf32>,
    %c0_44 = arith.constant 0 : index
    %c0_45 = arith.constant 0 : index
    %157 = vector.load %arg9[%c0_44, %c0_45] : memref<8x128xf32, #tpu.memory_space<vmem>>, vector<8x128xf32>
    tpu.vector_store %arg9[%c0_44, %c0_45], %149 {strides = array<i32>} : memref<8x128xf32, #tpu.memory_space<vmem>>, vector<8x128xf32>,
    %c0_46 = arith.constant 0 : index
    %c0_47 = arith.constant 0 : index
    %158 = vector.load %arg6[%c0_46, %c0_47] : memref<8x128xf32, #tpu.memory_space<vmem>>, vector<8x128xf32>
    tpu.vector_store %arg6[%c0_46, %c0_47], %151 {strides = array<i32>} : memref<8x128xf32, #tpu.memory_space<vmem>>, vector<8x128xf32>,
    %c0_48 = arith.constant 0 : index
    %c0_49 = arith.constant 0 : index
    %159 = vector.load %arg7[%c0_48, %c0_49] : memref<8x128xf32, #tpu.memory_space<vmem>>, vector<8x128xf32>
    tpu.vector_store %arg7[%c0_48, %c0_49], %149 {strides = array<i32>} : memref<8x128xf32, #tpu.memory_space<vmem>>, vector<8x128xf32>,
    return
  }
  func.func @transform_0(%arg0: i32) -> (i32, i32, i32) {
    %c0_i32 = arith.constant 0 : i32
    %c0_i32_0 = arith.constant 0 : i32
    %c0_i32_1 = arith.constant 0 : i32
    return %arg0, %c0_i32, %c0_i32_0 : i32, i32, i32
  }
  func.func @transform_1(%arg0: i32) -> (i32, i32) {
    %c0_i32 = arith.constant 0 : i32
    %c0_i32_0 = arith.constant 0 : i32
    %c0_i32_1 = arith.constant 0 : i32
    return %c0_i32, %c0_i32_0 : i32, i32
  }
  func.func @transform_2(%arg0: i32) -> (i32, i32) {
    %c0_i32 = arith.constant 0 : i32
    %c0_i32_0 = arith.constant 0 : i32
    %c0_i32_1 = arith.constant 0 : i32
    return %c0_i32, %c0_i32_0 : i32, i32
  }
  func.func @transform_3(%arg0: i32) -> (i32, i32) {
    %c0_i32 = arith.constant 0 : i32
    %c0_i32_0 = arith.constant 0 : i32
    %c0_i32_1 = arith.constant 0 : i32
    return %c0_i32, %c0_i32_0 : i32, i32
  }
  func.func @transform_4(%arg0: i32) -> (i32, i32, i32) {
    %c0_i32 = arith.constant 0 : i32
    %c0_i32_0 = arith.constant 0 : i32
    %c0_i32_1 = arith.constant 0 : i32
    return %arg0, %c0_i32, %c0_i32_0 : i32, i32, i32
  }
  func.func @transform_5(%arg0: i32) -> (i32, i32) {
    %c0_i32 = arith.constant 0 : i32
    %c0_i32_0 = arith.constant 0 : i32
    %c0_i32_1 = arith.constant 0 : i32
    return %c0_i32, %c0_i32_0 : i32, i32
  }
  func.func @transform_6(%arg0: i32) -> (i32, i32) {
    %c0_i32 = arith.constant 0 : i32
    %c0_i32_0 = arith.constant 0 : i32
    %c0_i32_1 = arith.constant 0 : i32
    return %c0_i32, %c0_i32_0 : i32, i32
  }
}

module attributes {stable_mosaic.version = 11 : i64} {
  func.func @_vocab_proj_kernel(%arg0: i32, %arg1: i32, %arg2: memref<1x8x128xf32, #tpu.memory_space<vmem>>, %arg3: memref<128x256xf32, #tpu.memory_space<vmem>>, %arg4: memref<1x256xf32, #tpu.memory_space<vmem>>, %arg5: memref<1x8x256xf32, #tpu.memory_space<vmem>>) attributes {dimension_semantics = [#tpu.dimension_semantics<parallel>, #tpu.dimension_semantics<parallel>], iteration_bounds = array<i64: 1, 7>, scalar_prefetch = 0 : i64, scratch_operands = 0 : i64, tpu.core_type = #tpu.core_type<tc>, window_params = [{transform_indices = @transform_0, window_bounds = array<i64: 1, 8, 128>}, {transform_indices = @transform_1, window_bounds = array<i64: 128, 256>}, {transform_indices = @transform_2, window_bounds = array<i64: 1, 256>}, {transform_indices = @transform_3, window_bounds = array<i64: 1, 8, 256>}]} {
    %c0_i32 = arith.constant 0 : i32
    %0 = arith.cmpi eq, %arg1, %c0_i32 : i32
    %1 = arith.extui %0 : i1 to i32
    %c0_i32_0 = arith.constant 0 : i32
    %2 = arith.cmpi ne, %1, %c0_i32_0 : i32
    scf.if %2 {
      %cst = arith.constant 0.000000e+00 : f32
      %6 = vector.broadcast %cst : f32 to vector<1x8x256xf32>
      %c0 = arith.constant 0 : index
      %c0_3 = arith.constant 0 : index
      %c0_4 = arith.constant 0 : index
      %7 = vector.load %arg5[%c0, %c0_3, %c0_4] : memref<1x8x256xf32, #tpu.memory_space<vmem>>, vector<1x8x256xf32>
      tpu.vector_store %arg5[%c0, %c0_3, %c0_4], %6 {strides = array<i32>} : memref<1x8x256xf32, #tpu.memory_space<vmem>>, vector<1x8x256xf32>,
    } else {
    }
    %c0_i32_1 = arith.constant 0 : i32
    %3 = arith.cmpi sgt, %arg1, %c0_i32_1 : i32
    %4 = arith.extui %3 : i1 to i32
    %c0_i32_2 = arith.constant 0 : i32
    %5 = arith.cmpi ne, %4, %c0_i32_2 : i32
    scf.if %5 {
      %c0 = arith.constant 0 : index
      %c0_3 = arith.constant 0 : index
      %c0_4 = arith.constant 0 : index
      %6 = vector.load %arg2[%c0, %c0_3, %c0_4] : memref<1x8x128xf32, #tpu.memory_space<vmem>>, vector<1x8x128xf32>
      %7 = vector.shape_cast %6 : vector<1x8x128xf32> to vector<8x128xf32>
      %c0_5 = arith.constant 0 : index
      %c0_6 = arith.constant 0 : index
      %8 = vector.load %arg3[%c0_5, %c0_6] : memref<128x256xf32, #tpu.memory_space<vmem>>, vector<128x256xf32>
      %cst = arith.constant dense<0.000000e+00> : vector<8x256xf32>
      %9 = tpu.matmul %7, %8, %cst {dimension_numbers = #tpu.dot_dimension_numbers<[1], [0], [0], [1], [0, 0, 1, 1], [], []>} : vector<8x128xf32>, vector<128x256xf32>, vector<8x256xf32> -> vector<8x256xf32>
      %c0_7 = arith.constant 0 : index
      %c0_8 = arith.constant 0 : index
      %10 = vector.load %arg4[%c0_7, %c0_8] : memref<1x256xf32, #tpu.memory_space<vmem>>, vector<1x256xf32>
      %11 = vector.broadcast %10 : vector<1x256xf32> to vector<8x256xf32>
      %12 = arith.addf %9, %11 : vector<8x256xf32>
      %c0_9 = arith.constant 0 : index
      %c0_10 = arith.constant 0 : index
      %c0_11 = arith.constant 0 : index
      %13 = vector.load %arg5[%c0_9, %c0_10, %c0_11] : memref<1x8x256xf32, #tpu.memory_space<vmem>>, vector<1x8x256xf32>
      %14 = vector.shape_cast %13 : vector<1x8x256xf32> to vector<8x256xf32>
      %15 = vector.shape_cast %12 : vector<8x256xf32> to vector<1x8x256xf32>
      tpu.vector_store %arg5[%c0_9, %c0_10, %c0_11], %15 {strides = array<i32>} : memref<1x8x256xf32, #tpu.memory_space<vmem>>, vector<1x8x256xf32>,
    } else {
    }
    return
  }
  func.func @transform_0(%arg0: i32, %arg1: i32) -> (i32, i32, i32) {
    %c1_i32 = arith.constant 1 : i32
    %0 = arith.subi %arg1, %c1_i32 : i32
    %c0_i32 = arith.constant 0 : i32
    %1 = arith.maxsi %0, %c0_i32 : i32
    %c0_i32_0 = arith.constant 0 : i32
    %c0_i32_1 = arith.constant 0 : i32
    %c0_i32_2 = arith.constant 0 : i32
    return %1, %c0_i32_0, %c0_i32_1 : i32, i32, i32
  }
  func.func @transform_1(%arg0: i32, %arg1: i32) -> (i32, i32) {
    %c0_i32 = arith.constant 0 : i32
    %c0_i32_0 = arith.constant 0 : i32
    return %c0_i32, %arg0 : i32, i32
  }
  func.func @transform_2(%arg0: i32, %arg1: i32) -> (i32, i32) {
    %c0_i32 = arith.constant 0 : i32
    %c0_i32_0 = arith.constant 0 : i32
    return %c0_i32, %arg0 : i32, i32
  }
  func.func @transform_3(%arg0: i32, %arg1: i32) -> (i32, i32, i32) {
    %c0_i32 = arith.constant 0 : i32
    %c0_i32_0 = arith.constant 0 : i32
    return %arg1, %c0_i32, %arg0 : i32, i32, i32
  }
}

</mosaic_0001>

<llo_original>
// kernel: seq2seq_forward.5
$region0: #{seq2seq_forward.5}
  #allocation0 [shape = 'u32[]', space=smem, size = 0x4, offset = 0x4, fixed_abs, tag = 'smem constant byte address 0x4 - core index']
  #allocation1 [shape = 'u32[144,128]{1,0:T(1,128)}', space=vmem, size = 0x12000, scoped, tag = 'internal scratch']
  %s0 = inlined_call_operand.vmem [shape: f32[48,32], index: 0, kind: input, shape index: {}]
  %s1 = inlined_call_operand.vmem [shape: f32[32,512], index: 1, kind: input, shape index: {}]
  %s2 = inlined_call_operand.vmem [shape: f32[1,512], index: 2, kind: input, shape index: {}]
  %s3 = inlined_call_operand.vmem [shape: f32[48,512], index: 3, kind: output, shape index: {}]
  %s4 = sld [smem:[#allocation0]]
  $region87: #{seq2seq_forward.5} parent=0
    _
  %s6 = ssub.s32 1, %s4
  %s7 = scalar_select 0, %s6, %s4
  $region1: #{seq2seq_forward.5} parent=0
    #allocation2 [shape = 'u8[65536]{0}', space=vmem, size = 0x10000, scoped, tag = 'input window, operand 1']
    #allocation3 [shape = 'u8[98304]{0}', space=vmem, size = 0x18000, scoped, tag = 'output window, operand 0']
    loop: start=0, step=1, limit=4
    $region2: #{seq2seq_forward.5} parent=1 // loop_pre_header
      _
    $region3: #{seq2seq_forward.5} parent=1 // loop_header
      %s9 = sphi 0, %s13
      %p10 = scmp.ge.s32.totalorder %s9, 4
      %s16 = sphi 0, %s28
      %s17 = sphi 0, %s24
      %s18 = sphi 0, %s16
      %s19 = sphi 0, %s17
      %s20 = sphi 0, %s18
      %s21 = sphi 0, %s19
      %s31 = sphi 0, %s33
      %s34 = sphi 0, %s31
      %s35 = sphi 0, %s34
      %s51 = sphi 0, %s35
      %s57 = sphi 0, %s59
      %s60 = sphi 0, %s57
      %s61 = sphi 0, %s60
      %s77 = sphi 0, %s61
      %s83 = sphi 0, %s85
      %s86 = sphi 0, %s83
      %s87 = sphi 0, %s86
      %s103 = sphi 0, %s87
      %s111 = sphi 0, %s113
      %s114 = sphi 0, %s111
      %s115 = sphi 0, %s114
      %s131 = sphi 0, %s115
    $region4: #{seq2seq_forward.5} parent=1 // loop_header_branch
      %12 = sbr.rel (%p10) target = $region8
    $region5: #{seq2seq_forward.5} parent=1 // loop_body
      %s14 = ssub.s32 %s9, 1
      %s15 = ssub.s32 %s9, 2
      %s22 = sadd.s32 1, %s17
      %p23 = scmp.ge.s32.totalorder %s22, 2
      %s24 = scalar_select %p23, 0, %s22
      %s25 = sadd.s32 1, %s16
      %s26 = scalar_select %p23, %s25, %s16
      %p27 = scmp.ge.s32.totalorder %s26, 1
      %s28 = scalar_select %p27, 0, %s26
      %s29 = ssub.s32 %s16, %s28
      %p30 = scmp.eq.s32.totalorder %s29, 0
      %s32 = sadd.s32 %s31, 1
      %s33 = scalar_select %p30, %s31, %s32
      %p36 = pneg %p30
      %p37 = scmp.eq.s32.totalorder %s9, 1
      %p38 = por %p36, %p37
      %p39 = scmp.ne.s32.totalorder %s31, %s34
      %p40 = scmp.eq.s32.totalorder %s9, 0
      %p41 = por %p39, %p40
      %p42 = scmp.ne.s32.totalorder %s31, %s34
      %p43 = scmp.eq.s32.totalorder %s14, 1
      %p44 = por %p42, %p43
      %p45 = scmp.ne.s32.totalorder %s34, %s35
      %p46 = scmp.eq.s32.totalorder %s14, 0
      %p47 = por %p45, %p46
      %p48 = scmp.ne.s32.totalorder %s34, %s35
      %p49 = scmp.eq.s32.totalorder %s15, 1
      %p50 = por %p48, %p49
      %p52 = scmp.ne.s32.totalorder %s35, %s51
      %p53 = scmp.eq.s32.totalorder %s15, 0
      %p54 = por %p52, %p53
      %s55 = ssub.s32 %s17, %s24
      %p56 = scmp.eq.s32.totalorder %s55, 0
      %s58 = sadd.s32 %s57, 1
      %s59 = scalar_select %p56, %s57, %s58
      %p62 = pneg %p56
      %p63 = scmp.eq.s32.totalorder %s9, 1
      %p64 = por %p62, %p63
      %p65 = scmp.ne.s32.totalorder %s57, %s60
      %p66 = scmp.eq.s32.totalorder %s9, 0
      %p67 = por %p65, %p66
      %p68 = scmp.ne.s32.totalorder %s57, %s60
      %p69 = scmp.eq.s32.totalorder %s14, 1
      %p70 = por %p68, %p69
      %p71 = scmp.ne.s32.totalorder %s60, %s61
      %p72 = scmp.eq.s32.totalorder %s14, 0
      %p73 = por %p71, %p72
      %p74 = scmp.ne.s32.totalorder %s60, %s61
      %p75 = scmp.eq.s32.totalorder %s15, 1
      %p76 = por %p74, %p75
      %p78 = scmp.ne.s32.totalorder %s61, %s77
      %p79 = scmp.eq.s32.totalorder %s15, 0
      %p80 = por %p78, %p79
      %s81 = ssub.s32 %s17, %s24
      %p82 = scmp.eq.s32.totalorder %s81, 0
      %s84 = sadd.s32 %s83, 1
      %s85 = scalar_select %p82, %s83, %s84
      %p88 = pneg %p82
      %p89 = scmp.eq.s32.totalorder %s9, 1
      %p90 = por %p88, %p89
      %p91 = scmp.ne.s32.totalorder %s83, %s86
      %p92 = scmp.eq.s32.totalorder %s9, 0
      %p93 = por %p91, %p92
      %p94 = scmp.ne.s32.totalorder %s83, %s86
      %p95 = scmp.eq.s32.totalorder %s14, 1
      %p96 = por %p94, %p95
      %p97 = scmp.ne.s32.totalorder %s86, %s87
      %p98 = scmp.eq.s32.totalorder %s14, 0
      %p99 = por %p97, %p98
      %p100 = scmp.ne.s32.totalorder %s86, %s87
      %p101 = scmp.eq.s32.totalorder %s15, 1
      %p102 = por %p100, %p101
      %p104 = scmp.ne.s32.totalorder %s87, %s103
      %p105 = scmp.eq.s32.totalorder %s15, 0
      %p106 = por %p104, %p105
      %s107 = ssub.s32 %s16, %s28
      %s108 = ssub.s32 %s17, %s24
      %s109 = sor.u32 %s107, %s108
      %p110 = scmp.eq.s32.totalorder %s109, 0
      %s112 = sadd.s32 %s111, 1
      %s113 = scalar_select %p110, %s111, %s112
      %p116 = pneg %p110
      %p117 = scmp.eq.s32.totalorder %s9, 1
      %p118 = por %p116, %p117
      %p119 = scmp.ne.s32.totalorder %s111, %s114
      %p120 = scmp.eq.s32.totalorder %s9, 0
      %p121 = por %p119, %p120
      %p122 = scmp.ne.s32.totalorder %s111, %s114
      %p123 = scmp.eq.s32.totalorder %s14, 1
      %p124 = por %p122, %p123
      %p125 = scmp.ne.s32.totalorder %s114, %s115
      %p126 = scmp.eq.s32.totalorder %s14, 0
      %p127 = por %p125, %p126
      %p128 = scmp.ne.s32.totalorder %s114, %s115
      %p129 = scmp.eq.s32.totalorder %s15, 1
      %p130 = por %p128, %p129
      %p132 = scmp.ne.s32.totalorder %s115, %s131
      %p133 = scmp.eq.s32.totalorder %s15, 0
      %p134 = por %p132, %p133
      %p135 = scmp.le.s32.totalorder 1, %s9
      %p136 = scmp.lt.s32.totalorder %s9, 3
      %p137 = pnand %p135, %p136
      %p138 = pneg %p137
      // Predicated region
      $region9: #{seq2seq_forward.5} parent=5 // pred_check
        _
      $region10: #{seq2seq_forward.5} parent=5 // pred_check_branch
        %140 = sbr.rel (%p137) target = $region12
      $region11: #{seq2seq_forward.5} parent=5 // pred_region
        %s141 = ssub.s32 %s9, 1
        // Predicated region
        $region13: #{seq2seq_forward.5} parent=11 // pred_check
          %p142 = pneg %p47
        $region14: #{seq2seq_forward.5} parent=11 // pred_check_branch
          %144 = sbr.rel (%p142) target = $region16
        $region15: #{seq2seq_forward.5} parent=11 // pred_region
          %s145 = smul.u32 6, %s18
          %p146 = scmp.lt.s32.totalorder %s145, 5
          %s147 = scalar_select %p146, %s145, 5
          %s148 = smul.addr %s147, 8
          %s149 = scalar_lea.vmem %s0, %s148
          %s150 = smul.u32 6, %s18
        $region16: #{seq2seq_forward.5} parent=11 // pred_fallthru
          _
      $region12: #{seq2seq_forward.5} parent=5 // pred_fallthru
        _
      %p151 = scmp.lt.s32.totalorder %s9, 2
      // Predicated region
      $region17: #{seq2seq_forward.5} parent=5 // pred_check
        %p152 = pneg %p151
      $region18: #{seq2seq_forward.5} parent=5 // pred_check_branch
        %154 = sbr.rel (%p152) target = $region20
      $region19: #{seq2seq_forward.5} parent=5 // pred_region
        // Predicated region
        $region21: #{seq2seq_forward.5} parent=19 // pred_check
          %p155 = pneg %p67
        $region22: #{seq2seq_forward.5} parent=19 // pred_check_branch
          %157 = sbr.rel (%p155) target = $region24
        $region23: #{seq2seq_forward.5} parent=19 // pred_region
          %s158 = sand.u32 %s57, 1
          %s159 = sand.u32 %s57, 1
          %s160 = smul.addr %s159, 64
          %s161 = scalar_lea.vmem [#allocation2], %s160
          %s162 = smul.u32 2, %s17
          %s163 = smul.addr %s162, 8
          %s164 = scalar_lea.vmem %s1, %s163
          // Predicated region
          $region25: #{seq2seq_forward.5} parent=23 // pred_check
            _
          $region26: #{seq2seq_forward.5} parent=23 // pred_check_branch
            %166 = sbr.rel (0) target = $region28
          $region27: #{seq2seq_forward.5} parent=23 // pred_region
            // Predicated region
            $region29: #{seq2seq_forward.5} parent=27 // pred_check
              _
            $region30: #{seq2seq_forward.5} parent=27 // pred_check_branch
              %168 = sbr.rel (0) target = $region32
            $region31: #{seq2seq_forward.5} parent=27 // pred_region
              loop: start=0, step=1, limit=1
              $region33: #{seq2seq_forward.5} parent=31 // loop_pre_header
                _
              $region34: #{seq2seq_forward.5} parent=31 // loop_header
                %s170 = sphi 0, %s174
                %p171 = scmp.ge.s32.totalorder %s170, 1
                %s175 = sphi %s164, %s164
                %s176 = sphi %s161, %s161
              $region35: #{seq2seq_forward.5} parent=31 // loop_header_branch
                %173 = sbr.rel (%p171) target = $region39
              $region36: #{seq2seq_forward.5} parent=31 // loop_body
                %v177 = vld [vmem:[%s175] sm:$0xff]
                %178 = vst [vmem:[%s176] sm:$0xff] %v177
                %v179 = vld [vmem:[%s175 + $0x8] sm:$0xff]
                %180 = vst [vmem:[%s176 + $0x8] sm:$0xff] %v179
                %v181 = vld [vmem:[%s175 + $0x20] sm:$0xff]
                %182 = vst [vmem:[%s176 + $0x10] sm:$0xff] %v181
                %v183 = vld [vmem:[%s175 + $0x28] sm:$0xff]
                %184 = vst [vmem:[%s176 + $0x18] sm:$0xff] %v183
                %v185 = vld [vmem:[%s175 + $0x40] sm:$0xff]
                %186 = vst [vmem:[%s176 + $0x20] sm:$0xff] %v185
                %v187 = vld [vmem:[%s175 + $0x48] sm:$0xff]
                %188 = vst [vmem:[%s176 + $0x28] sm:$0xff] %v187
                %v189 = vld [vmem:[%s175 + $0x60] sm:$0xff]
                %190 = vst [vmem:[%s176 + $0x30] sm:$0xff] %v189
                %v191 = vld [vmem:[%s175 + $0x68] sm:$0xff]
                %192 = vst [vmem:[%s176 + $0x38] sm:$0xff] %v191
              $region37: #{seq2seq_forward.5} parent=31 // loop_footer
                %s174 = sadd.s32 1, %s170
              $region38: #{seq2seq_forward.5} parent=31 // loop_footer_branch
                %169 = sbr.rel target = $region34
              $region39: #{seq2seq_forward.5} parent=31 // loop_exit
                _
            $region32: #{seq2seq_forward.5} parent=27 // pred_fallthru
              _
            // Predicated region
            $region40: #{seq2seq_forward.5} parent=27 // pred_check
              _
            $region41: #{seq2seq_forward.5} parent=27 // pred_check_branch
              %194 = sbr.rel target = $region43
            $region42: #{seq2seq_forward.5} parent=27 // pred_region
              _
            $region43: #{seq2seq_forward.5} parent=27 // pred_fallthru
              _
          $region28: #{seq2seq_forward.5} parent=23 // pred_fallthru
            _
          %195 = vnop
        $region24: #{seq2seq_forward.5} parent=19 // pred_fallthru
          _
        // Predicated region
        $region44: #{seq2seq_forward.5} parent=19 // pred_check
          %p196 = pneg %p93
        $region45: #{seq2seq_forward.5} parent=19 // pred_check_branch
          %198 = sbr.rel (%p196) target = $region47
        $region46: #{seq2seq_forward.5} parent=19 // pred_region
          %s199 = smul.u32 2, %s17
          %p200 = scmp.lt.s32.totalorder %s199, 3
          %s201 = scalar_select %p200, %s199, 3
          %s202 = scalar_lea.vmem %s2, %s201
          %s203 = smul.u32 2, %s17
        $region47: #{seq2seq_forward.5} parent=19 // pred_fallthru
          _
      $region20: #{seq2seq_forward.5} parent=5 // pred_fallthru
        _
      %p204 = scmp.le.s32.totalorder 1, %s9
      %p205 = scmp.lt.s32.totalorder %s9, 3
      %p206 = pnand %p204, %p205
      %p207 = pneg %p206
      // Predicated region
      $region48: #{seq2seq_forward.5} parent=5 // pred_check
        _
      $region49: #{seq2seq_forward.5} parent=5 // pred_check_branch
        %209 = sbr.rel (%p206) target = $region51
      $region50: #{seq2seq_forward.5} parent=5 // pred_region
        %s210 = ssub.s32 %s9, 1
        %s211 = sand.u32 %s60, 1
        %s212 = sand.u32 %s60, 1
        %s213 = smul.addr %s212, 64
        %s214 = scalar_lea.vmem [#allocation2], %s213
        // Predicated region
        $region52: #{seq2seq_forward.5} parent=50 // pred_check
          %p215 = pneg %p73
        $region53: #{seq2seq_forward.5} parent=50 // pred_check_branch
          %217 = sbr.rel (%p215) target = $region55
        $region54: #{seq2seq_forward.5} parent=50 // pred_region
          _
        $region55: #{seq2seq_forward.5} parent=50 // pred_fallthru
          _
        %s218 = smul.u32 6, %s18
        %p219 = scmp.lt.s32.totalorder %s218, 5
        %s220 = scalar_select %p219, %s218, 5
        %s221 = smul.addr %s220, 8
        %s222 = scalar_lea.vmem %s0, %s221
        %p223 = pneg %p47
        %p224 = pneg %p44
        %s225 = sand.u32 %s60, 1
        %s226 = sand.u32 %s60, 1
        %s227 = smul.addr %s226, 64
        %s228 = scalar_lea.vmem [#allocation2], %s227
        %p229 = pneg %p73
        %p230 = pneg %p70
        %s231 = smul.u32 2, %s19
        %p232 = scmp.lt.s32.totalorder %s231, 3
        %s233 = scalar_select %p232, %s231, 3
        %s234 = scalar_lea.vmem %s2, %s233
        %p235 = pneg %p99
        %p236 = pneg %p96
        %p237 = pneg %p127
        %p238 = pneg %p124
        %s239 = sand.u32 %s114, 1
        %s240 = sand.u32 %s114, 1
        %s241 = smul.addr %s240, 96
        %s242 = scalar_lea.vmem [#allocation3], %s241
        %s243 = smul.u32 6, %s18
        %p244 = scmp.lt.s32.totalorder %s243, 5
        %s245 = scalar_select %p244, %s243, 5
        %s246 = smul.addr %s245, 8
        %s247 = scalar_lea.vmem %s0, %s246
        %s248 = smul.u32 6, %s18
        %s249 = smul.u32 2, %s19
        %s250 = smul.u32 2, %s19
        %p251 = scmp.lt.s32.totalorder %s250, 3
        %s252 = scalar_select %p251, %s250, 3
        %s253 = scalar_lea.vmem %s2, %s252
        %s254 = smul.u32 2, %s19
        %s255 = smul.u32 6, %s18
        %s256 = smul.u32 2, %s19
        %v257 = vld [vmem:[%s247] sm:$0xff]
        %v258 = vld [vmem:[%s247 + $0x8] sm:$0xff]
        %v259 = vld [vmem:[%s247 + $0x10] sm:$0xff]
        %v260 = vld [vmem:[%s247 + $0x18] sm:$0xff]
        %v261 = vld [vmem:[%s247 + $0x20] sm:$0xff]
        %v262 = vld [vmem:[%s247 + $0x28] sm:$0xff]
        %v263 = vld [vmem:[%s214] sm:$0xff]
        %v264 = vld [vmem:[%s214 + $0x8] sm:$0xff]
        %v265 = vld [vmem:[%s214 + $0x10] sm:$0xff]
        %v266 = vld [vmem:[%s214 + $0x18] sm:$0xff]
        %v267 = vld [vmem:[%s214 + $0x20] sm:$0xff]
        %v268 = vld [vmem:[%s214 + $0x28] sm:$0xff]
        %v269 = vld [vmem:[%s214 + $0x30] sm:$0xff]
        %v270 = vld [vmem:[%s214 + $0x38] sm:$0xff]
        %v271 = vld [vmem:[%s253] sm:$0x3]
        %v273 = vlaneseq
        %v274 = vshrl.u32 %v273, 7
        %v275 = vsub.s32 0, %v274
        %v276 = vrot.slane %v271, %v275
        %v277 = vlaneseq
        %v278 = vshrl.u32 %v277, 7
        %v279 = vsub.s32 1, %v278
        %v280 = vrot.slane %v271, %v279
        %vm283 = vcmask 261120
        %v285 = vsel %vm283, %v257, 0
        %v288 = vsel %vm283, %v258, 0
        %v291 = vsel %vm283, %v259, 0
        %v294 = vsel %vm283, %v260, 0
        %v297 = vsel %vm283, %v261, 0
        %v300 = vsel %vm283, %v262, 0
        %302 = vmatprep.subr.mxu0 %v264
        %303 = vmatpush1.msra.mxu0 %v263
        %304 = vmatprep.subr.mxu0 %v266
        %305 = vmatpush1.msra.mxu0 %v265
        %306 = vmatprep.subr.mxu0 %v268
        %307 = vmatpush1.msra.mxu0 %v267
        %308 = vmatprep.subr.mxu0 %v270
        %309 = vmatpush1.msra.mxu0 %v269
        %310 = vmatprep.subr.mxu0 0.0
        %311 = vmatpush1.msra.mxu0 0.0
        %312 = vmatprep.subr.mxu0 0.0
        %313 = vmatpush1.msra.mxu0 0.0
        %314 = vmatprep.subr.mxu0 0.0
        %315 = vmatpush1.msra.mxu0 0.0
        %316 = vmatprep.subr.mxu0 0.0
        %317 = vmatpush1.msra.mxu0 0.0
        %318 = vmatprep.subr.mxu0 0.0
        %319 = vmatpush1.msra.mxu0 0.0
        %320 = vmatprep.subr.mxu0 0.0
        %321 = vmatpush1.msra.mxu0 0.0
        %322 = vmatprep.subr.mxu0 0.0
        %323 = vmatpush1.msra.mxu0 0.0
        %324 = vmatprep.subr.mxu0 0.0
        %325 = vmatpush1.msra.mxu0 0.0
        %326 = vmatprep.subr.mxu0 0.0
        %327 = vmatpush1.msra.mxu0 0.0
        %328 = vmatprep.subr.mxu0 0.0
        %329 = vmatpush1.msra.mxu0 0.0
        %330 = vmatprep.subr.mxu0 0.0
        %331 = vmatpush1.msra.mxu0 0.0
        %332 = vmatprep.subr.mxu0 0.0
        %333 = vmatpush1.msra.mxu0 0.0
        %334 = vmatprep.subr.mxu0 0.0
        %335 = vmatpush1.msra.mxu0 0.0
        %336 = vmatprep.subr.mxu0 0.0
        %337 = vmatpush1.msra.mxu0 0.0
        %338 = vmatprep.subr.mxu0 0.0
        %339 = vmatpush1.msra.mxu0 0.0
        %340 = vmatprep.subr.mxu0 0.0
        %341 = vmatpush1.msra.mxu0 0.0
        %342 = vmatprep.subr.mxu0 0.0
        %343 = vmatpush1.msra.mxu0 0.0
        %344 = vmatprep.subr.mxu0 0.0
        %345 = vmatpush1.msra.mxu0 0.0
        %346 = vmatprep.subr.mxu0 0.0
        %347 = vmatpush1.msra.mxu0 0.0
        %348 = vmatprep.subr.mxu0 0.0
        %349 = vmatpush1.msra.mxu0 0.0
        %350 = vmatprep.subr.mxu0 0.0
        %351 = vmatpush1.msra.mxu0 0.0
        %352 = vmatprep.subr.mxu0 0.0
        %353 = vmatpush1.msra.mxu0 0.0
        %354 = vmatprep.subr.mxu0 0.0
        %355 = vmatpush1.msra.mxu0 0.0
        %356 = vmatprep.subr.mxu0 0.0
        %357 = vmatpush1.msra.mxu0 0.0
        %358 = vmatprep.subr.mxu0 0.0
        %359 = vmatpush1.msra.mxu0 0.0
        %360 = vmatprep.subr.mxu0 0.0
        %361 = vmatpush1.msra.mxu0 0.0
        %362 = vmatprep.subr.mxu0 0.0
        %363 = vmatpush1.msra.mxu0 0.0
        %364 = vmatprep.subr.mxu0 0.0
        %365 = vmatpush1.msra.mxu0 0.0
        %366 = vmatprep.mubr.f32.mxu0 0.0
        %367 = vmatmul.mubr.f32.gmra.mrb[0].mxu0 %v285
        %v368 = vpop.f32.mrb[0].mxu0
        %v369 = vadd.f32 %v276, %v368
        %v370 = vpop.f32.mrb[0].mxu0
        %v371 = vadd.f32 %v280, %v370
        %372 = vmatprep.mubr.f32.mxu0 0.0
        %373 = vmatmul.mubr.f32.gmra.mrb[0].mxu0 %v288
        %v374 = vpop.f32.mrb[0].mxu0
        %v375 = vadd.f32 %v276, %v374
        %v376 = vpop.f32.mrb[0].mxu0
        %v377 = vadd.f32 %v280, %v376
        %378 = vmatprep.mubr.f32.mxu0 0.0
        %379 = vmatmul.mubr.f32.gmra.mrb[0].mxu0 %v291
        %v380 = vpop.f32.mrb[0].mxu0
        %v381 = vadd.f32 %v276, %v380
        %v382 = vpop.f32.mrb[0].mxu0
        %v383 = vadd.f32 %v280, %v382
        %384 = vmatprep.mubr.f32.mxu0 0.0
        %385 = vmatmul.mubr.f32.gmra.mrb[0].mxu0 %v294
        %v386 = vpop.f32.mrb[0].mxu0
        %v387 = vadd.f32 %v276, %v386
        %v388 = vpop.f32.mrb[0].mxu0
        %v389 = vadd.f32 %v280, %v388
        %390 = vmatprep.mubr.f32.mxu0 0.0
        %391 = vmatmul.mubr.f32.gmra.mrb[0].mxu0 %v297
        %v392 = vpop.f32.mrb[0].mxu0
        %v393 = vadd.f32 %v276, %v392
        %v394 = vpop.f32.mrb[0].mxu0
        %v395 = vadd.f32 %v280, %v394
        %396 = vmatprep.mubr.f32.mxu0 0.0
        %397 = vmatmul.mubr.f32.gmra.mrb[0].mxu0 %v300
        %v398 = vpop.f32.mrb[0].mxu0
        %v399 = vadd.f32 %v276, %v398
        %v400 = vpop.f32.mrb[0].mxu0
        %v401 = vadd.f32 %v280, %v400
        %402 = vdwg.mxu0
        %403 = vst [vmem:[%s242] sm:$0xff] %v369
        %404 = vst [vmem:[%s242 + $0x8] sm:$0xff] %v371
        %405 = vst [vmem:[%s242 + $0x10] sm:$0xff] %v375
        %406 = vst [vmem:[%s242 + $0x18] sm:$0xff] %v377
        %407 = vst [vmem:[%s242 + $0x20] sm:$0xff] %v381
        %408 = vst [vmem:[%s242 + $0x28] sm:$0xff] %v383
        %409 = vst [vmem:[%s242 + $0x30] sm:$0xff] %v387
        %410 = vst [vmem:[%s242 + $0x38] sm:$0xff] %v389
        %411 = vst [vmem:[%s242 + $0x40] sm:$0xff] %v393
        %412 = vst [vmem:[%s242 + $0x48] sm:$0xff] %v395
        %413 = vst [vmem:[%s242 + $0x50] sm:$0xff] %v399
        %414 = vst [vmem:[%s242 + $0x58] sm:$0xff] %v401
        %s415 = sand.u32 %s114, 1
        %s416 = sand.u32 %s114, 1
        %s417 = smul.addr %s416, 96
        %s418 = scalar_lea.vmem [#allocation3], %s417
        // Predicated region
        $region56: #{seq2seq_forward.5} parent=50 // pred_check
          %p419 = pneg %p124
        $region57: #{seq2seq_forward.5} parent=50 // pred_check_branch
          %421 = sbr.rel (%p419) target = $region59
        $region58: #{seq2seq_forward.5} parent=50 // pred_region
          %s422 = smul.u32 6, %s18
          %s423 = smul.u32 2, %s19
          %s424 = smul.addr %s422, 4
          %s425 = sadd.s32 %s423, %s424
          %s426 = smul.addr %s425, 8
          %s427 = scalar_lea.vmem %s3, %s426
          // Predicated region
          $region60: #{seq2seq_forward.5} parent=58 // pred_check
            _
          $region61: #{seq2seq_forward.5} parent=58 // pred_check_branch
            %429 = sbr.rel (0) target = $region63
          $region62: #{seq2seq_forward.5} parent=58 // pred_region
            // Predicated region
            $region64: #{seq2seq_forward.5} parent=62 // pred_check
              _
            $region65: #{seq2seq_forward.5} parent=62 // pred_check_branch
              %431 = sbr.rel (0) target = $region67
            $region66: #{seq2seq_forward.5} parent=62 // pred_region
              loop: start=0, step=1, limit=1
              $region68: #{seq2seq_forward.5} parent=66 // loop_pre_header
                _
              $region69: #{seq2seq_forward.5} parent=66 // loop_header
                %s433 = sphi 0, %s437
                %p434 = scmp.ge.s32.totalorder %s433, 1
                %s438 = sphi %s418, %s418
                %s439 = sphi %s427, %s427
              $region70: #{seq2seq_forward.5} parent=66 // loop_header_branch
                %436 = sbr.rel (%p434) target = $region74
              $region71: #{seq2seq_forward.5} parent=66 // loop_body
                %v440 = vld [vmem:[%s438] sm:$0xff]
                %441 = vst [vmem:[%s439] sm:$0xff] %v440
                %v442 = vld [vmem:[%s438 + $0x8] sm:$0xff]
                %443 = vst [vmem:[%s439 + $0x8] sm:$0xff] %v442
                %v444 = vld [vmem:[%s438 + $0x10] sm:$0xff]
                %445 = vst [vmem:[%s439 + $0x20] sm:$0xff] %v444
                %v446 = vld [vmem:[%s438 + $0x18] sm:$0xff]
                %447 = vst [vmem:[%s439 + $0x28] sm:$0xff] %v446
                %v448 = vld [vmem:[%s438 + $0x20] sm:$0xff]
                %449 = vst [vmem:[%s439 + $0x40] sm:$0xff] %v448
                %v450 = vld [vmem:[%s438 + $0x28] sm:$0xff]
                %451 = vst [vmem:[%s439 + $0x48] sm:$0xff] %v450
                %v452 = vld [vmem:[%s438 + $0x30] sm:$0xff]
                %453 = vst [vmem:[%s439 + $0x60] sm:$0xff] %v452
                %v454 = vld [vmem:[%s438 + $0x38] sm:$0xff]
                %455 = vst [vmem:[%s439 + $0x68] sm:$0xff] %v454
                %v456 = vld [vmem:[%s438 + $0x40] sm:$0xff]
                %457 = vst [vmem:[%s439 + $0x80] sm:$0xff] %v456
                %v458 = vld [vmem:[%s438 + $0x48] sm:$0xff]
                %459 = vst [vmem:[%s439 + $0x88] sm:$0xff] %v458
                %v460 = vld [vmem:[%s438 + $0x50] sm:$0xff]
                %461 = vst [vmem:[%s439 + $0xa0] sm:$0xff] %v460
                %v462 = vld [vmem:[%s438 + $0x58] sm:$0xff]
                %463 = vst [vmem:[%s439 + $0xa8] sm:$0xff] %v462
              $region72: #{seq2seq_forward.5} parent=66 // loop_footer
                %s437 = sadd.s32 1, %s433
              $region73: #{seq2seq_forward.5} parent=66 // loop_footer_branch
                %432 = sbr.rel target = $region69
              $region74: #{seq2seq_forward.5} parent=66 // loop_exit
                _
            $region67: #{seq2seq_forward.5} parent=62 // pred_fallthru
              _
            // Predicated region
            $region75: #{seq2seq_forward.5} parent=62 // pred_check
              _
            $region76: #{seq2seq_forward.5} parent=62 // pred_check_branch
              %465 = sbr.rel target = $region78
            $region77: #{seq2seq_forward.5} parent=62 // pred_region
              _
            $region78: #{seq2seq_forward.5} parent=62 // pred_fallthru
              _
          $region63: #{seq2seq_forward.5} parent=58 // pred_fallthru
            _
          %466 = vnop
        $region59: #{seq2seq_forward.5} parent=50 // pred_fallthru
          _
      $region51: #{seq2seq_forward.5} parent=5 // pred_fallthru
        _
      %p467 = scmp.le.s32.totalorder 2, %s9
      // Predicated region
      $region79: #{seq2seq_forward.5} parent=5 // pred_check
        %p468 = pneg %p467
      $region80: #{seq2seq_forward.5} parent=5 // pred_check_branch
        %470 = sbr.rel (%p468) target = $region82
      $region81: #{seq2seq_forward.5} parent=5 // pred_region
        %s471 = ssub.s32 %s9, 2
        // Predicated region
        $region83: #{seq2seq_forward.5} parent=81 // pred_check
          %p472 = pneg %p130
        $region84: #{seq2seq_forward.5} parent=81 // pred_check_branch
          %474 = sbr.rel (%p472) target = $region86
        $region85: #{seq2seq_forward.5} parent=81 // pred_region
          %s475 = sand.u32 %s115, 1
          %s476 = sand.u32 %s115, 1
          %s477 = smul.addr %s476, 96
          %s478 = scalar_lea.vmem [#allocation3], %s477
        $region86: #{seq2seq_forward.5} parent=81 // pred_fallthru
          _
      $region82: #{seq2seq_forward.5} parent=5 // pred_fallthru
        _
    $region6: #{seq2seq_forward.5} parent=1 // loop_footer
      %s13 = sadd.s32 1, %s9
    $region7: #{seq2seq_forward.5} parent=1 // loop_footer_branch
      %8 = sbr.rel target = $region3
    $region8: #{seq2seq_forward.5} parent=1 // loop_exit
      _

// kernel: seq2seq_forward.9
$region0: #{seq2seq_forward.9}
  #allocation0 [shape = 'u32[]', space=smem, size = 0x4, offset = 0x4, fixed_abs, tag = 'smem constant byte address 0x4 - core index']
  #allocation1 [shape = 'u32[144,128]{1,0:T(1,128)}', space=vmem, size = 0x12000, scoped, tag = 'internal scratch']
  %s0 = inlined_call_operand.vmem [shape: f32[6,8,128], index: 0, kind: input, shape index: {}]
  %s1 = inlined_call_operand.vmem [shape: f32[128,256], index: 1, kind: input, shape index: {}]
  %s2 = inlined_call_operand.vmem [shape: f32[1,256], index: 2, kind: input, shape index: {}]
  %s3 = inlined_call_operand.hbm [shape: f32[7,8,256], index: 3, kind: output, shape index: {}]
  %s4 = sld [smem:[#allocation0]]
  $region53: #{seq2seq_forward.9} parent=0
    _
  %s6 = ssub.s32 1, %s4
  %s7 = scalar_select 0, %s6, %s4
  $region1: #{seq2seq_forward.9} parent=0
    #allocation2 [shape = 'u8[16384]{0}', space=vmem, size = 0x4000, scoped, tag = 'output window, operand 0']
    #allocation3 [shape = 's32[2]{0}', space=sflag, size = 0x8, scoped, tag = 'scoped memory for seq2seq_forward.9']
    %8 = vsyncpa [#allocation3], 0
    %s9 = scalar_lea.sflag [#allocation3], 1
    %10 = vsyncpa %s9, 0
    loop: start=0, step=1, limit=9
    $region2: #{seq2seq_forward.9} parent=1 // loop_pre_header
      _
    $region3: #{seq2seq_forward.9} parent=1 // loop_header
      %s12 = sphi 0, %s16
      %p13 = scmp.ge.s32.totalorder %s12, 9
      %s19 = sphi 0, %s31
      %s20 = sphi 0, %s27
      %s21 = sphi 0, %s19
      %s22 = sphi 0, %s20
      %s23 = sphi 0, %s21
      %s24 = sphi 0, %s22
      %s40 = sphi 0, %s42
      %s43 = sphi 0, %s40
      %s44 = sphi 0, %s43
      %s60 = sphi 0, %s44
      %s66 = sphi 0, %s68
      %s69 = sphi 0, %s66
      %s70 = sphi 0, %s69
      %s86 = sphi 0, %s70
      %s92 = sphi 0, %s94
      %s95 = sphi 0, %s92
      %s96 = sphi 0, %s95
      %s112 = sphi 0, %s96
      %s120 = sphi 0, %s122
      %s123 = sphi 0, %s120
      %s124 = sphi 0, %s123
      %s140 = sphi 0, %s124
    $region4: #{seq2seq_forward.9} parent=1 // loop_header_branch
      %15 = sbr.rel (%p13) target = $region8
    $region5: #{seq2seq_forward.9} parent=1 // loop_body
      %s17 = ssub.s32 %s12, 1
      %s18 = ssub.s32 %s12, 2
      %s25 = sadd.s32 1, %s20
      %p26 = scmp.ge.s32.totalorder %s25, 7
      %s27 = scalar_select %p26, 0, %s25
      %s28 = sadd.s32 1, %s19
      %s29 = scalar_select %p26, %s28, %s19
      %p30 = scmp.ge.s32.totalorder %s29, 1
      %s31 = scalar_select %p30, 0, %s29
      %s32 = ssub.s32 %s20, 1
      %p33 = scmp.gt.s32.totalorder %s32, 0
      %s34 = scalar_select %p33, %s32, 0
      %s35 = ssub.s32 %s27, 1
      %p36 = scmp.gt.s32.totalorder %s35, 0
      %s37 = scalar_select %p36, %s35, 0
      %s38 = ssub.s32 %s34, %s37
      %p39 = scmp.eq.s32.totalorder %s38, 0
      %s41 = sadd.s32 %s40, 1
      %s42 = scalar_select %p39, %s40, %s41
      %p45 = pneg %p39
      %p46 = scmp.eq.s32.totalorder %s12, 6
      %p47 = por %p45, %p46
      %p48 = scmp.ne.s32.totalorder %s40, %s43
      %p49 = scmp.eq.s32.totalorder %s12, 0
      %p50 = por %p48, %p49
      %p51 = scmp.ne.s32.totalorder %s40, %s43
      %p52 = scmp.eq.s32.totalorder %s17, 6
      %p53 = por %p51, %p52
      %p54 = scmp.ne.s32.totalorder %s43, %s44
      %p55 = scmp.eq.s32.totalorder %s17, 0
      %p56 = por %p54, %p55
      %p57 = scmp.ne.s32.totalorder %s43, %s44
      %p58 = scmp.eq.s32.totalorder %s18, 6
      %p59 = por %p57, %p58
      %p61 = scmp.ne.s32.totalorder %s44, %s60
      %p62 = scmp.eq.s32.totalorder %s18, 0
      %p63 = por %p61, %p62
      %s64 = ssub.s32 %s19, %s31
      %p65 = scmp.eq.s32.totalorder %s64, 0
      %s67 = sadd.s32 %s66, 1
      %s68 = scalar_select %p65, %s66, %s67
      %p71 = pneg %p65
      %p72 = scmp.eq.s32.totalorder %s12, 6
      %p73 = por %p71, %p72
      %p74 = scmp.ne.s32.totalorder %s66, %s69
      %p75 = scmp.eq.s32.totalorder %s12, 0
      %p76 = por %p74, %p75
      %p77 = scmp.ne.s32.totalorder %s66, %s69
      %p78 = scmp.eq.s32.totalorder %s17, 6
      %p79 = por %p77, %p78
      %p80 = scmp.ne.s32.totalorder %s69, %s70
      %p81 = scmp.eq.s32.totalorder %s17, 0
      %p82 = por %p80, %p81
      %p83 = scmp.ne.s32.totalorder %s69, %s70
      %p84 = scmp.eq.s32.totalorder %s18, 6
      %p85 = por %p83, %p84
      %p87 = scmp.ne.s32.totalorder %s70, %s86
      %p88 = scmp.eq.s32.totalorder %s18, 0
      %p89 = por %p87, %p88
      %s90 = ssub.s32 %s19, %s31
      %p91 = scmp.eq.s32.totalorder %s90, 0
      %s93 = sadd.s32 %s92, 1
      %s94 = scalar_select %p91, %s92, %s93
      %p97 = pneg %p91
      %p98 = scmp.eq.s32.totalorder %s12, 6
      %p99 = por %p97, %p98
      %p100 = scmp.ne.s32.totalorder %s92, %s95
      %p101 = scmp.eq.s32.totalorder %s12, 0
      %p102 = por %p100, %p101
      %p103 = scmp.ne.s32.totalorder %s92, %s95
      %p104 = scmp.eq.s32.totalorder %s17, 6
      %p105 = por %p103, %p104
      %p106 = scmp.ne.s32.totalorder %s95, %s96
      %p107 = scmp.eq.s32.totalorder %s17, 0
      %p108 = por %p106, %p107
      %p109 = scmp.ne.s32.totalorder %s95, %s96
      %p110 = scmp.eq.s32.totalorder %s18, 6
      %p111 = por %p109, %p110
      %p113 = scmp.ne.s32.totalorder %s96, %s112
      %p114 = scmp.eq.s32.totalorder %s18, 0
      %p115 = por %p113, %p114
      %s116 = ssub.s32 %s20, %s27
      %s117 = ssub.s32 %s19, %s31
      %s118 = sor.u32 %s116, %s117
      %p119 = scmp.eq.s32.totalorder %s118, 0
      %s121 = sadd.s32 %s120, 1
      %s122 = scalar_select %p119, %s120, %s121
      %p125 = pneg %p119
      %p126 = scmp.eq.s32.totalorder %s12, 6
      %p127 = por %p125, %p126
      %p128 = scmp.ne.s32.totalorder %s120, %s123
      %p129 = scmp.eq.s32.totalorder %s12, 0
      %p130 = por %p128, %p129
      %p131 = scmp.ne.s32.totalorder %s120, %s123
      %p132 = scmp.eq.s32.totalorder %s17, 6
      %p133 = por %p131, %p132
      %p134 = scmp.ne.s32.totalorder %s123, %s124
      %p135 = scmp.eq.s32.totalorder %s17, 0
      %p136 = por %p134, %p135
      %p137 = scmp.ne.s32.totalorder %s123, %s124
      %p138 = scmp.eq.s32.totalorder %s18, 6
      %p139 = por %p137, %p138
      %p141 = scmp.ne.s32.totalorder %s124, %s140
      %p142 = scmp.eq.s32.totalorder %s18, 0
      %p143 = por %p141, %p142
      %p144 = scmp.le.s32.totalorder 1, %s12
      %p145 = scmp.lt.s32.totalorder %s12, 8
      %p146 = pnand %p144, %p145
      %p147 = pneg %p146
      // Predicated region
      $region9: #{seq2seq_forward.9} parent=5 // pred_check
        _
      $region10: #{seq2seq_forward.9} parent=5 // pred_check_branch
        %149 = sbr.rel (%p146) target = $region12
      $region11: #{seq2seq_forward.9} parent=5 // pred_region
        %s150 = ssub.s32 %s12, 1
        // Predicated region
        $region13: #{seq2seq_forward.9} parent=11 // pred_check
          %p151 = pneg %p82
        $region14: #{seq2seq_forward.9} parent=11 // pred_check_branch
          %153 = sbr.rel (%p151) target = $region16
        $region15: #{seq2seq_forward.9} parent=11 // pred_region
          %s154 = smul.u32 2, %s21
          %p155 = scmp.lt.s32.totalorder %s154, 1
          %s156 = scalar_select %p155, %s154, 1
          %s157 = smul.addr %s156, 8
          %s158 = scalar_lea.vmem %s1, %s157
          %s159 = smul.u32 2, %s21
        $region16: #{seq2seq_forward.9} parent=11 // pred_fallthru
          _
        // Predicated region
        $region17: #{seq2seq_forward.9} parent=11 // pred_check
          %p160 = pneg %p108
        $region18: #{seq2seq_forward.9} parent=11 // pred_check_branch
          %162 = sbr.rel (%p160) target = $region20
        $region19: #{seq2seq_forward.9} parent=11 // pred_region
          %s163 = smul.u32 2, %s21
          %p164 = scmp.lt.s32.totalorder %s163, 1
          %s165 = scalar_select %p164, %s163, 1
          %s166 = scalar_lea.vmem %s2, %s165
          %s167 = smul.u32 2, %s21
        $region20: #{seq2seq_forward.9} parent=11 // pred_fallthru
          _
      $region12: #{seq2seq_forward.9} parent=5 // pred_fallthru
        _
      %p168 = scmp.lt.s32.totalorder %s12, 7
      // Predicated region
      $region21: #{seq2seq_forward.9} parent=5 // pred_check
        %p169 = pneg %p168
      $region22: #{seq2seq_forward.9} parent=5 // pred_check_branch
        %171 = sbr.rel (%p169) target = $region24
      $region23: #{seq2seq_forward.9} parent=5 // pred_region
        // Predicated region
        $region25: #{seq2seq_forward.9} parent=23 // pred_check
          %p172 = pneg %p50
        $region26: #{seq2seq_forward.9} parent=23 // pred_check_branch
          %174 = sbr.rel (%p172) target = $region28
        $region27: #{seq2seq_forward.9} parent=23 // pred_region
          %s175 = ssub.s32 %s20, 1
          %p176 = scmp.gt.s32.totalorder %s175, 0
          %s177 = scalar_select %p176, %s175, 0
          %p178 = scmp.lt.s32.totalorder %s177, 5
          %s179 = scalar_select %p178, %s177, 5
          %s180 = smul.addr %s179, 8
          %s181 = scalar_lea.vmem %s0, %s180
          %s182 = ssub.s32 %s20, 1
          %p183 = scmp.gt.s32.totalorder %s182, 0
          %s184 = scalar_select %p183, %s182, 0
        $region28: #{seq2seq_forward.9} parent=23 // pred_fallthru
          _
      $region24: #{seq2seq_forward.9} parent=5 // pred_fallthru
        _
      %p185 = scmp.le.s32.totalorder 1, %s12
      %p186 = scmp.lt.s32.totalorder %s12, 8
      %p187 = pnand %p185, %p186
      %p188 = pneg %p187
      // Predicated region
      $region29: #{seq2seq_forward.9} parent=5 // pred_check
        _
      $region30: #{seq2seq_forward.9} parent=5 // pred_check_branch
        %190 = sbr.rel (%p187) target = $region32
      $region31: #{seq2seq_forward.9} parent=5 // pred_region
        %s191 = ssub.s32 %s12, 1
        %s192 = ssub.s32 %s22, 1
        %p193 = scmp.gt.s32.totalorder %s192, 0
        %s194 = scalar_select %p193, %s192, 0
        %p195 = scmp.lt.s32.totalorder %s194, 5
        %s196 = scalar_select %p195, %s194, 5
        %s197 = smul.addr %s196, 8
        %s198 = scalar_lea.vmem %s0, %s197
        %p199 = pneg %p56
        %p200 = pneg %p53
        %s201 = smul.u32 2, %s21
        %p202 = scmp.lt.s32.totalorder %s201, 1
        %s203 = scalar_select %p202, %s201, 1
        %s204 = smul.addr %s203, 8
        %s205 = scalar_lea.vmem %s1, %s204
        %p206 = pneg %p82
        %p207 = pneg %p79
        %s208 = smul.u32 2, %s21
        %p209 = scmp.lt.s32.totalorder %s208, 1
        %s210 = scalar_select %p209, %s208, 1
        %s211 = scalar_lea.vmem %s2, %s210
        %p212 = pneg %p108
        %p213 = pneg %p105
        %p214 = pneg %p136
        %p215 = pneg %p133
        %s216 = sand.u32 %s123, 1
        %s217 = scalar_lea.sflag [#allocation3], %s216
        %s218 = sand.u32 %s123, 1
        %s219 = smul.addr %s218, 16
        %s220 = scalar_lea.vmem [#allocation2], %s219
        %s221 = ssub.s32 %s22, 1
        %p222 = scmp.gt.s32.totalorder %s221, 0
        %s223 = scalar_select %p222, %s221, 0
        %p224 = scmp.lt.s32.totalorder %s223, 5
        %s225 = scalar_select %p224, %s223, 5
        %s226 = smul.addr %s225, 8
        %s227 = scalar_lea.vmem %s0, %s226
        %s228 = ssub.s32 %s22, 1
        %p229 = scmp.gt.s32.totalorder %s228, 0
        %s230 = scalar_select %p229, %s228, 0
        %s231 = smul.u32 2, %s21
        %p232 = scmp.lt.s32.totalorder %s231, 1
        %s233 = scalar_select %p232, %s231, 1
        %s234 = smul.addr %s233, 8
        %s235 = scalar_lea.vmem %s1, %s234
        %s236 = smul.u32 2, %s21
        %s237 = smul.u32 2, %s21
        %p238 = scmp.lt.s32.totalorder %s237, 1
        %s239 = scalar_select %p238, %s237, 1
        %s240 = scalar_lea.vmem %s2, %s239
        %s241 = smul.u32 2, %s21
        %s242 = smul.u32 2, %s21
        %p243 = scmp.eq.s32.totalorder %s22, 0
        // Predicated region
        $region33: #{seq2seq_forward.9} parent=31 // pred_check
          %p244 = pneg %p243
        $region34: #{seq2seq_forward.9} parent=31 // pred_check_branch
          %246 = sbr.rel (%p244) target = $region36
        $region35: #{seq2seq_forward.9} parent=31 // pred_region
          %247 = vst [vmem:[%s220] sm:$0xff] 0.0
          %248 = vst [vmem:[%s220 + $0x8] sm:$0xff] 0.0
        $region36: #{seq2seq_forward.9} parent=31 // pred_fallthru
          _
        %p249 = scmp.gt.s32.totalorder %s22, 0
        // Predicated region
        $region37: #{seq2seq_forward.9} parent=31 // pred_check
          %p250 = pneg %p249
        $region38: #{seq2seq_forward.9} parent=31 // pred_check_branch
          %252 = sbr.rel (%p250) target = $region40
        $region39: #{seq2seq_forward.9} parent=31 // pred_region
          %v253 = vld [vmem:[%s227] sm:$0xff]
          %v254 = vld [vmem:[%s235] sm:$0xff]
          %v255 = vld [vmem:[%s235 + $0x8] sm:$0xff]
          %v256 = vld [vmem:[%s235 + $0x10] sm:$0xff]
          %v257 = vld [vmem:[%s235 + $0x18] sm:$0xff]
          %v258 = vld [vmem:[%s235 + $0x20] sm:$0xff]
          %v259 = vld [vmem:[%s235 + $0x28] sm:$0xff]
          %v260 = vld [vmem:[%s235 + $0x30] sm:$0xff]
          %v261 = vld [vmem:[%s235 + $0x38] sm:$0xff]
          %v262 = vld [vmem:[%s235 + $0x40] sm:$0xff]
          %v263 = vld [vmem:[%s235 + $0x48] sm:$0xff]
          %v264 = vld [vmem:[%s235 + $0x50] sm:$0xff]
          %v265 = vld [vmem:[%s235 + $0x58] sm:$0xff]
          %v266 = vld [vmem:[%s235 + $0x60] sm:$0xff]
          %v267 = vld [vmem:[%s235 + $0x68] sm:$0xff]
          %v268 = vld [vmem:[%s235 + $0x70] sm:$0xff]
          %v269 = vld [vmem:[%s235 + $0x78] sm:$0xff]
          %v270 = vld [vmem:[%s235 + $0x80] sm:$0xff]
          %v271 = vld [vmem:[%s235 + $0x88] sm:$0xff]
          %v272 = vld [vmem:[%s235 + $0x90] sm:$0xff]
          %v273 = vld [vmem:[%s235 + $0x98] sm:$0xff]
          %v274 = vld [vmem:[%s235 + $0xa0] sm:$0xff]
          %v275 = vld [vmem:[%s235 + $0xa8] sm:$0xff]
          %v276 = vld [vmem:[%s235 + $0xb0] sm:$0xff]
          %v277 = vld [vmem:[%s235 + $0xb8] sm:$0xff]
          %v278 = vld [vmem:[%s235 + $0xc0] sm:$0xff]
          %v279 = vld [vmem:[%s235 + $0xc8] sm:$0xff]
          %v280 = vld [vmem:[%s235 + $0xd0] sm:$0xff]
          %v281 = vld [vmem:[%s235 + $0xd8] sm:$0xff]
          %v282 = vld [vmem:[%s235 + $0xe0] sm:$0xff]
          %v283 = vld [vmem:[%s235 + $0xe8] sm:$0xff]
          %v284 = vld [vmem:[%s235 + $0xf0] sm:$0xff]
          %v285 = vld [vmem:[%s235 + $0xf8] sm:$0xff]
          %v286 = vld [vmem:[%s240] sm:$0x3]
          %v288 = vlaneseq
          %v289 = vshrl.u32 %v288, 7
          %v290 = vsub.s32 0, %v289
          %v291 = vrot.slane %v286, %v290
          %v292 = vlaneseq
          %v293 = vshrl.u32 %v292, 7
          %v294 = vsub.s32 1, %v293
          %v295 = vrot.slane %v286, %v294
          %298 = vmatprep.subr.mxu0 %v255
          %299 = vmatpush1.msra.mxu0 %v254
          %300 = vmatprep.subr.mxu0 %v257
          %301 = vmatpush1.msra.mxu0 %v256
          %302 = vmatprep.subr.mxu0 %v259
          %303 = vmatpush1.msra.mxu0 %v258
          %304 = vmatprep.subr.mxu0 %v261
          %305 = vmatpush1.msra.mxu0 %v260
          %306 = vmatprep.subr.mxu0 %v263
          %307 = vmatpush1.msra.mxu0 %v262
          %308 = vmatprep.subr.mxu0 %v265
          %309 = vmatpush1.msra.mxu0 %v264
          %310 = vmatprep.subr.mxu0 %v267
          %311 = vmatpush1.msra.mxu0 %v266
          %312 = vmatprep.subr.mxu0 %v269
          %313 = vmatpush1.msra.mxu0 %v268
          %314 = vmatprep.subr.mxu0 %v271
          %315 = vmatpush1.msra.mxu0 %v270
          %316 = vmatprep.subr.mxu0 %v273
          %317 = vmatpush1.msra.mxu0 %v272
          %318 = vmatprep.subr.mxu0 %v275
          %319 = vmatpush1.msra.mxu0 %v274
          %320 = vmatprep.subr.mxu0 %v277
          %321 = vmatpush1.msra.mxu0 %v276
          %322 = vmatprep.subr.mxu0 %v279
          %323 = vmatpush1.msra.mxu0 %v278
          %324 = vmatprep.subr.mxu0 %v281
          %325 = vmatpush1.msra.mxu0 %v280
          %326 = vmatprep.subr.mxu0 %v283
          %327 = vmatpush1.msra.mxu0 %v282
          %328 = vmatprep.subr.mxu0 %v285
          %329 = vmatpush1.msra.mxu0 %v284
          %330 = vmatprep.subr.mxu0 0.0
          %331 = vmatpush1.msra.mxu0 0.0
          %332 = vmatprep.subr.mxu0 0.0
          %333 = vmatpush1.msra.mxu0 0.0
          %334 = vmatprep.subr.mxu0 0.0
          %335 = vmatpush1.msra.mxu0 0.0
          %336 = vmatprep.subr.mxu0 0.0
          %337 = vmatpush1.msra.mxu0 0.0
          %338 = vmatprep.subr.mxu0 0.0
          %339 = vmatpush1.msra.mxu0 0.0
          %340 = vmatprep.subr.mxu0 0.0
          %341 = vmatpush1.msra.mxu0 0.0
          %342 = vmatprep.subr.mxu0 0.0
          %343 = vmatpush1.msra.mxu0 0.0
          %344 = vmatprep.subr.mxu0 0.0
          %345 = vmatpush1.msra.mxu0 0.0
          %346 = vmatprep.subr.mxu0 0.0
          %347 = vmatpush1.msra.mxu0 0.0
          %348 = vmatprep.subr.mxu0 0.0
          %349 = vmatpush1.msra.mxu0 0.0
          %350 = vmatprep.subr.mxu0 0.0
          %351 = vmatpush1.msra.mxu0 0.0
          %352 = vmatprep.subr.mxu0 0.0
          %353 = vmatpush1.msra.mxu0 0.0
          %354 = vmatprep.subr.mxu0 0.0
          %355 = vmatpush1.msra.mxu0 0.0
          %356 = vmatprep.subr.mxu0 0.0
          %357 = vmatpush1.msra.mxu0 0.0
          %358 = vmatprep.subr.mxu0 0.0
          %359 = vmatpush1.msra.mxu0 0.0
          %360 = vmatprep.subr.mxu0 0.0
          %361 = vmatpush1.msra.mxu0 0.0
          %362 = vmatprep.mubr.f32.mxu0 0.0
          %363 = vmatmul.mubr.f32.gmra.mrb[0].mxu0 %v253
          %v364 = vpop.f32.mrb[0].mxu0
          %v365 = vadd.f32 %v291, %v364
          %v366 = vpop.f32.mrb[0].mxu0
          %v367 = vadd.f32 %v295, %v366
          %368 = vdwg.mxu0
          %369 = vst [vmem:[%s220] sm:$0xff] %v365
          %370 = vst [vmem:[%s220 + $0x8] sm:$0xff] %v367
        $region40: #{seq2seq_forward.9} parent=31 // pred_fallthru
          _
        %s371 = sand.u32 %s123, 1
        %s372 = scalar_lea.sflag [#allocation3], %s371
        %s373 = sand.u32 %s123, 1
        %s374 = smul.addr %s373, 16
        %s375 = scalar_lea.vmem [#allocation2], %s374
        // Predicated region
        $region41: #{seq2seq_forward.9} parent=31 // pred_check
          %p376 = pneg %p133
        $region42: #{seq2seq_forward.9} parent=31 // pred_check_branch
          %378 = sbr.rel (%p376) target = $region44
        $region43: #{seq2seq_forward.9} parent=31 // pred_region
          %s379 = smul.u32 2, %s21
          %s381 = ssub.s32 256, 256
          %382 = vsyncadd %s372, %s381
          %s383 = smul.addr %s22, 2
          %s384 = sadd.s32 %s379, %s383
          %s385 = smul.addr %s384, 128
          %s386 = scalar_lea.hbm %s3, %s385
          %s388 = sshll.u32 %s375, 4
          %s389 = int_to_ptr.vmem [resolvable:$true] %s388
          %391 = dma.vmem_to_hbm [thread:$0]  %s389, 256, %s386, %s372
        $region44: #{seq2seq_forward.9} parent=31 // pred_fallthru
          _
      $region32: #{seq2seq_forward.9} parent=5 // pred_fallthru
        _
      %p392 = scmp.le.s32.totalorder 2, %s12
      // Predicated region
      $region45: #{seq2seq_forward.9} parent=5 // pred_check
        %p393 = pneg %p392
      $region46: #{seq2seq_forward.9} parent=5 // pred_check_branch
        %395 = sbr.rel (%p393) target = $region48
      $region47: #{seq2seq_forward.9} parent=5 // pred_region
        %s396 = ssub.s32 %s12, 2
        // Predicated region
        $region49: #{seq2seq_forward.9} parent=47 // pred_check
          %p397 = pneg %p139
        $region50: #{seq2seq_forward.9} parent=47 // pred_check_branch
          %399 = sbr.rel (%p397) target = $region52
        $region51: #{seq2seq_forward.9} parent=47 // pred_region
          %s400 = sand.u32 %s124, 1
          %s401 = scalar_lea.sflag [#allocation3], %s400
          %s402 = sand.u32 %s124, 1
          %s403 = smul.addr %s402, 16
          %s404 = scalar_lea.vmem [#allocation2], %s403
          %405 = dma.done %s401, 256
        $region52: #{seq2seq_forward.9} parent=47 // pred_fallthru
          _
      $region48: #{seq2seq_forward.9} parent=5 // pred_fallthru
        _
    $region6: #{seq2seq_forward.9} parent=1 // loop_footer
      %s16 = sadd.s32 1, %s12
    $region7: #{seq2seq_forward.9} parent=1 // loop_footer_branch
      %11 = sbr.rel target = $region3
    $region8: #{seq2seq_forward.9} parent=1 // loop_exit
      _
    %406 = vsyncpa [#allocation3], 1
    %s407 = scalar_lea.sflag [#allocation3], 1
    %408 = vsyncpa %s407, 1

// kernel: seq2seq_forward.6
$region0: #{seq2seq_forward.6}
  #allocation0 [shape = 'u32[]', space=smem, size = 0x4, offset = 0x4, fixed_abs, tag = 'smem constant byte address 0x4 - core index']
  #allocation1 [shape = 'u32[144,128]{1,0:T(1,128)}', space=vmem, size = 0x12000, scoped, tag = 'internal scratch']
  #allocation2 [shape = 'f32[8,128]{1,0:T(8,128)}', space=vmem, size = 0x1000, scoped, tag = 'scratch operand']
  #allocation3 [shape = 'f32[8,128]{1,0:T(8,128)}', space=vmem, size = 0x1000, scoped, tag = 'scratch operand']
  %s0 = inlined_call_operand.vmem [shape: f32[6,8,512], index: 0, kind: input, shape index: {}]
  %s1 = inlined_call_operand.vmem [shape: f32[8,128], index: 1, kind: input, shape index: {}, may-alias: {1,2}]
  %s2 = inlined_call_operand.vmem [shape: f32[8,128], index: 2, kind: input, shape index: {}, may-alias: {1,2}]
  %s3 = inlined_call_operand.vmem [shape: f32[128,512], index: 3, kind: input, shape index: {}]
  %s4 = inlined_call_operand.vmem [shape: f32[8,128], index: 4, kind: output, shape index: {0}]
  %s5 = inlined_call_operand.vmem [shape: f32[8,128], index: 5, kind: output, shape index: {1}]
  %6 = xla_tuple %s4, %s5
  %s7 = sld [smem:[#allocation0]]
  $region38: #{seq2seq_forward.6} parent=0
    _
  %s9 = ssub.s32 1, %s7
  %s10 = scalar_select 0, %s9, %s7
  // Predicated region
  $region2: #{seq2seq_forward.6} parent=0 // pred_check
    _
  $region3: #{seq2seq_forward.6} parent=0 // pred_check_branch
    %12 = sbr.rel (0) target = $region5
  $region4: #{seq2seq_forward.6} parent=0 // pred_region
    _
  $region5: #{seq2seq_forward.6} parent=0 // pred_fallthru
    _
  // Predicated region
  $region6: #{seq2seq_forward.6} parent=0 // pred_check
    _
  $region7: #{seq2seq_forward.6} parent=0 // pred_check_branch
    %14 = sbr.rel (0) target = $region9
  $region8: #{seq2seq_forward.6} parent=0 // pred_region
    _
  $region9: #{seq2seq_forward.6} parent=0 // pred_fallthru
    _
  // Predicated region
  $region10: #{seq2seq_forward.6} parent=0 // pred_check
    _
  $region11: #{seq2seq_forward.6} parent=0 // pred_check_branch
    %16 = sbr.rel (0) target = $region13
  $region12: #{seq2seq_forward.6} parent=0 // pred_region
    _
  $region13: #{seq2seq_forward.6} parent=0 // pred_fallthru
    _
  // Predicated region
  $region14: #{seq2seq_forward.6} parent=0 // pred_check
    _
  $region15: #{seq2seq_forward.6} parent=0 // pred_check_branch
    %18 = sbr.rel (0) target = $region17
  $region16: #{seq2seq_forward.6} parent=0 // pred_region
    _
  $region17: #{seq2seq_forward.6} parent=0 // pred_fallthru
    _
  %p19 = scmp.eq.s32.totalorder 0, 0
  // Predicated region
  $region18: #{seq2seq_forward.6} parent=0 // pred_check
    %p20 = pneg %p19
  $region19: #{seq2seq_forward.6} parent=0 // pred_check_branch
    %22 = sbr.rel (%p20) target = $region21
  $region20: #{seq2seq_forward.6} parent=0 // pred_region
    %v23 = vld [vmem:[%s1] sm:$0xff]
    %24 = vst [vmem:[#allocation2] sm:$0xff] %v23
    %v25 = vld [vmem:[%s2] sm:$0xff]
    %26 = vst [vmem:[#allocation3] sm:$0xff] %v25
  $region21: #{seq2seq_forward.6} parent=0 // pred_fallthru
    _
  %v27 = vld [vmem:[%s3] sm:$0xff]
  %v28 = vld [vmem:[%s3 + $0x8] sm:$0xff]
  %v29 = vld [vmem:[%s3 + $0x10] sm:$0xff]
  %v30 = vld [vmem:[%s3 + $0x18] sm:$0xff]
  %v31 = vld [vmem:[%s3 + $0x20] sm:$0xff]
  %v32 = vld [vmem:[%s3 + $0x28] sm:$0xff]
  %v33 = vld [vmem:[%s3 + $0x30] sm:$0xff]
  %v34 = vld [vmem:[%s3 + $0x38] sm:$0xff]
  %v35 = vld [vmem:[%s3 + $0x40] sm:$0xff]
  %v36 = vld [vmem:[%s3 + $0x48] sm:$0xff]
  %v37 = vld [vmem:[%s3 + $0x50] sm:$0xff]
  %v38 = vld [vmem:[%s3 + $0x58] sm:$0xff]
  %v39 = vld [vmem:[%s3 + $0x60] sm:$0xff]
  %v40 = vld [vmem:[%s3 + $0x68] sm:$0xff]
  %v41 = vld [vmem:[%s3 + $0x70] sm:$0xff]
  %v42 = vld [vmem:[%s3 + $0x78] sm:$0xff]
  %v43 = vld [vmem:[%s3 + $0x80] sm:$0xff]
  %v44 = vld [vmem:[%s3 + $0x88] sm:$0xff]
  %v45 = vld [vmem:[%s3 + $0x90] sm:$0xff]
  %v46 = vld [vmem:[%s3 + $0x98] sm:$0xff]
  %v47 = vld [vmem:[%s3 + $0xa0] sm:$0xff]
  %v48 = vld [vmem:[%s3 + $0xa8] sm:$0xff]
  %v49 = vld [vmem:[%s3 + $0xb0] sm:$0xff]
  %v50 = vld [vmem:[%s3 + $0xb8] sm:$0xff]
  %v51 = vld [vmem:[%s3 + $0xc0] sm:$0xff]
  %v52 = vld [vmem:[%s3 + $0xc8] sm:$0xff]
  %v53 = vld [vmem:[%s3 + $0xd0] sm:$0xff]
  %v54 = vld [vmem:[%s3 + $0xd8] sm:$0xff]
  %v55 = vld [vmem:[%s3 + $0xe0] sm:$0xff]
  %v56 = vld [vmem:[%s3 + $0xe8] sm:$0xff]
  %v57 = vld [vmem:[%s3 + $0xf0] sm:$0xff]
  %v58 = vld [vmem:[%s3 + $0xf8] sm:$0xff]
  %v59 = vld [vmem:[%s3 + $0x100] sm:$0xff]
  %v60 = vld [vmem:[%s3 + $0x108] sm:$0xff]
  %v61 = vld [vmem:[%s3 + $0x110] sm:$0xff]
  %v62 = vld [vmem:[%s3 + $0x118] sm:$0xff]
  %v63 = vld [vmem:[%s3 + $0x120] sm:$0xff]
  %v64 = vld [vmem:[%s3 + $0x128] sm:$0xff]
  %v65 = vld [vmem:[%s3 + $0x130] sm:$0xff]
  %v66 = vld [vmem:[%s3 + $0x138] sm:$0xff]
  %v67 = vld [vmem:[%s3 + $0x140] sm:$0xff]
  %v68 = vld [vmem:[%s3 + $0x148] sm:$0xff]
  %v69 = vld [vmem:[%s3 + $0x150] sm:$0xff]
  %v70 = vld [vmem:[%s3 + $0x158] sm:$0xff]
  %v71 = vld [vmem:[%s3 + $0x160] sm:$0xff]
  %v72 = vld [vmem:[%s3 + $0x168] sm:$0xff]
  %v73 = vld [vmem:[%s3 + $0x170] sm:$0xff]
  %v74 = vld [vmem:[%s3 + $0x178] sm:$0xff]
  %v75 = vld [vmem:[%s3 + $0x180] sm:$0xff]
  %v76 = vld [vmem:[%s3 + $0x188] sm:$0xff]
  %v77 = vld [vmem:[%s3 + $0x190] sm:$0xff]
  %v78 = vld [vmem:[%s3 + $0x198] sm:$0xff]
  %v79 = vld [vmem:[%s3 + $0x1a0] sm:$0xff]
  %v80 = vld [vmem:[%s3 + $0x1a8] sm:$0xff]
  %v81 = vld [vmem:[%s3 + $0x1b0] sm:$0xff]
  %v82 = vld [vmem:[%s3 + $0x1b8] sm:$0xff]
  %v83 = vld [vmem:[%s3 + $0x1c0] sm:$0xff]
  %v84 = vld [vmem:[%s3 + $0x1c8] sm:$0xff]
  %v85 = vld [vmem:[%s3 + $0x1d0] sm:$0xff]
  %v86 = vld [vmem:[%s3 + $0x1d8] sm:$0xff]
  %v87 = vld [vmem:[%s3 + $0x1e0] sm:$0xff]
  %v88 = vld [vmem:[%s3 + $0x1e8] sm:$0xff]
  %v89 = vld [vmem:[%s3 + $0x1f0] sm:$0xff]
  %v90 = vld [vmem:[%s3 + $0x1f8] sm:$0xff]
  %v91 = vld [vmem:[#allocation2] sm:$0xff]
  %v92 = vld [vmem:[#allocation3] sm:$0xff]
  %v93 = vld [vmem:[%s0] sm:$0xff]
  %v94 = vld [vmem:[%s0 + $0x8] sm:$0xff]
  %v95 = vld [vmem:[%s0 + $0x10] sm:$0xff]
  %v96 = vld [vmem:[%s0 + $0x18] sm:$0xff]
  %97 = vmatprep.subr.mxu0 %v28
  %98 = vmatpush1.msra.mxu0 %v27
  %99 = vmatprep.subr.mxu0 %v32
  %100 = vmatpush1.msra.mxu0 %v31
  %101 = vmatprep.subr.mxu0 %v36
  %102 = vmatpush1.msra.mxu0 %v35
  %103 = vmatprep.subr.mxu0 %v40
  %104 = vmatpush1.msra.mxu0 %v39
  %105 = vmatprep.subr.mxu0 %v44
  %106 = vmatpush1.msra.mxu0 %v43
  %107 = vmatprep.subr.mxu0 %v48
  %108 = vmatpush1.msra.mxu0 %v47
  %109 = vmatprep.subr.mxu0 %v52
  %110 = vmatpush1.msra.mxu0 %v51
  %111 = vmatprep.subr.mxu0 %v56
  %112 = vmatpush1.msra.mxu0 %v55
  %113 = vmatprep.subr.mxu0 %v60
  %114 = vmatpush1.msra.mxu0 %v59
  %115 = vmatprep.subr.mxu0 %v64
  %116 = vmatpush1.msra.mxu0 %v63
  %117 = vmatprep.subr.mxu0 %v68
  %118 = vmatpush1.msra.mxu0 %v67
  %119 = vmatprep.subr.mxu0 %v72
  %120 = vmatpush1.msra.mxu0 %v71
  %121 = vmatprep.subr.mxu0 %v76
  %122 = vmatpush1.msra.mxu0 %v75
  %123 = vmatprep.subr.mxu0 %v80
  %124 = vmatpush1.msra.mxu0 %v79
  %125 = vmatprep.subr.mxu0 %v84
  %126 = vmatpush1.msra.mxu0 %v83
  %127 = vmatprep.subr.mxu0 %v88
  %128 = vmatpush1.msra.mxu0 %v87
  %129 = vmatprep.subr.mxu0 0.0
  %130 = vmatpush1.msra.mxu0 0.0
  %131 = vmatprep.subr.mxu0 0.0
  %132 = vmatpush1.msra.mxu0 0.0
  %133 = vmatprep.subr.mxu0 0.0
  %134 = vmatpush1.msra.mxu0 0.0
  %135 = vmatprep.subr.mxu0 0.0
  %136 = vmatpush1.msra.mxu0 0.0
  %137 = vmatprep.subr.mxu0 0.0
  %138 = vmatpush1.msra.mxu0 0.0
  %139 = vmatprep.subr.mxu0 0.0
  %140 = vmatpush1.msra.mxu0 0.0
  %141 = vmatprep.subr.mxu0 0.0
  %142 = vmatpush1.msra.mxu0 0.0
  %143 = vmatprep.subr.mxu0 0.0
  %144 = vmatpush1.msra.mxu0 0.0
  %145 = vmatprep.subr.mxu0 0.0
  %146 = vmatpush1.msra.mxu0 0.0
  %147 = vmatprep.subr.mxu0 0.0
  %148 = vmatpush1.msra.mxu0 0.0
  %149 = vmatprep.subr.mxu0 0.0
  %150 = vmatpush1.msra.mxu0 0.0
  %151 = vmatprep.subr.mxu0 0.0
  %152 = vmatpush1.msra.mxu0 0.0
  %153 = vmatprep.subr.mxu0 0.0
  %154 = vmatpush1.msra.mxu0 0.0
  %155 = vmatprep.subr.mxu0 0.0
  %156 = vmatpush1.msra.mxu0 0.0
  %157 = vmatprep.subr.mxu0 0.0
  %158 = vmatpush1.msra.mxu0 0.0
  %159 = vmatprep.subr.mxu0 0.0
  %160 = vmatpush1.msra.mxu0 0.0
  %161 = vmatprep.mubr.f32.mxu0 0.0
  %162 = vmatmul.mubr.f32.gmra.mrb[0].mxu0 %v91
  %v163 = vpop.f32.mrb[0].mxu0
  %v164 = vadd.f32 0.0, %v163
  %v165 = vpop.f32.mrb[0].mxu0
  %v166 = vadd.f32 0.0, %v165
  %167 = vdwg.mxu0
  %168 = vmatprep.subr.mxu0 %v30
  %169 = vmatpush1.msra.mxu0 %v29
  %170 = vmatprep.subr.mxu0 %v34
  %171 = vmatpush1.msra.mxu0 %v33
  %172 = vmatprep.subr.mxu0 %v38
  %173 = vmatpush1.msra.mxu0 %v37
  %174 = vmatprep.subr.mxu0 %v42
  %175 = vmatpush1.msra.mxu0 %v41
  %176 = vmatprep.subr.mxu0 %v46
  %177 = vmatpush1.msra.mxu0 %v45
  %178 = vmatprep.subr.mxu0 %v50
  %179 = vmatpush1.msra.mxu0 %v49
  %180 = vmatprep.subr.mxu0 %v54
  %181 = vmatpush1.msra.mxu0 %v53
  %182 = vmatprep.subr.mxu0 %v58
  %183 = vmatpush1.msra.mxu0 %v57
  %184 = vmatprep.subr.mxu0 %v62
  %185 = vmatpush1.msra.mxu0 %v61
  %186 = vmatprep.subr.mxu0 %v66
  %187 = vmatpush1.msra.mxu0 %v65
  %188 = vmatprep.subr.mxu0 %v70
  %189 = vmatpush1.msra.mxu0 %v69
  %190 = vmatprep.subr.mxu0 %v74
  %191 = vmatpush1.msra.mxu0 %v73
  %192 = vmatprep.subr.mxu0 %v78
  %193 = vmatpush1.msra.mxu0 %v77
  %194 = vmatprep.subr.mxu0 %v82
  %195 = vmatpush1.msra.mxu0 %v81
  %196 = vmatprep.subr.mxu0 %v86
  %197 = vmatpush1.msra.mxu0 %v85
  %198 = vmatprep.subr.mxu0 %v90
  %199 = vmatpush1.msra.mxu0 %v89
  %200 = vmatprep.subr.mxu0 0.0
  %201 = vmatpush1.msra.mxu0 0.0
  %202 = vmatprep.subr.mxu0 0.0
  %203 = vmatpush1.msra.mxu0 0.0
  %204 = vmatprep.subr.mxu0 0.0
  %205 = vmatpush1.msra.mxu0 0.0
  %206 = vmatprep.subr.mxu0 0.0
  %207 = vmatpush1.msra.mxu0 0.0
  %208 = vmatprep.subr.mxu0 0.0
  %209 = vmatpush1.msra.mxu0 0.0
  %210 = vmatprep.subr.mxu0 0.0
  %211 = vmatpush1.msra.mxu0 0.0
  %212 = vmatprep.subr.mxu0 0.0
  %213 = vmatpush1.msra.mxu0 0.0
  %214 = vmatprep.subr.mxu0 0.0
  %215 = vmatpush1.msra.mxu0 0.0
  %216 = vmatprep.subr.mxu0 0.0
  %217 = vmatpush1.msra.mxu0 0.0
  %218 = vmatprep.subr.mxu0 0.0
  %219 = vmatpush1.msra.mxu0 0.0
  %220 = vmatprep.subr.mxu0 0.0
  %221 = vmatpush1.msra.mxu0 0.0
  %222 = vmatprep.subr.mxu0 0.0
  %223 = vmatpush1.msra.mxu0 0.0
  %224 = vmatprep.subr.mxu0 0.0
  %225 = vmatpush1.msra.mxu0 0.0
  %226 = vmatprep.subr.mxu0 0.0
  %227 = vmatpush1.msra.mxu0 0.0
  %228 = vmatprep.subr.mxu0 0.0
  %229 = vmatpush1.msra.mxu0 0.0
  %230 = vmatprep.subr.mxu0 0.0
  %231 = vmatpush1.msra.mxu0 0.0
  %232 = vmatprep.mubr.f32.mxu0 0.0
  %233 = vmatmul.mubr.f32.gmra.mrb[0].mxu0 %v91
  %v234 = vpop.f32.mrb[0].mxu0
  %v235 = vadd.f32 0.0, %v234
  %v236 = vpop.f32.mrb[0].mxu0
  %v237 = vadd.f32 0.0, %v236
  %238 = vdwg.mxu0
  %v239 = vadd.f32 %v93, %v164
  %v240 = vadd.f32 %v94, %v166
  %v241 = vadd.f32 %v95, %v235
  %v242 = vadd.f32 %v96, %v237
  %v243 = vxor.u32 %v239, 2147483648
  %v244 = vxor.u32 %v240, 2147483648
  %v245 = vxor.u32 %v241, 2147483648
  %v246 = vmul.f32 %v243, 1.442695
  %v247 = vpow.pop %v246
  %v248 = vmul.f32 %v244, 1.442695
  %v249 = vpow.pop %v248
  %v250 = vmul.f32 %v245, 1.442695
  %v251 = vpow.pop %v250
  %v252 = vadd.f32 %v247, 1.0
  %v253 = vadd.f32 %v249, 1.0
  %v254 = vadd.f32 %v251, 1.0
  %v255 = vrcp.pop %v252
  %v256 = vmul.f32 1.0, %v255
  %v257 = vrcp.pop %v253
  %v258 = vmul.f32 1.0, %v257
  %v259 = vrcp.pop %v254
  %v260 = vmul.f32 1.0, %v259
  %v261 = vtanh.pop %v242
  %v262 = vmul.f32 %v258, %v92
  %v263 = vmul.f32 %v256, %v261
  %v264 = vadd.f32 %v262, %v263
  %v265 = vtanh.pop %v264
  %v266 = vmul.f32 %v260, %v265
  %s267 = scalar_lea.vmem %s0, 32
  %v268 = vld [vmem:[%s267] sm:$0xff]
  %v269 = vld [vmem:[%s267 + $0x8] sm:$0xff]
  %v270 = vld [vmem:[%s267 + $0x10] sm:$0xff]
  %v271 = vld [vmem:[%s267 + $0x18] sm:$0xff]
  %272 = vmatprep.subr.mxu0 %v28
  %273 = vmatpush1.msra.mxu0 %v27
  %274 = vmatprep.subr.mxu0 %v32
  %275 = vmatpush1.msra.mxu0 %v31
  %276 = vmatprep.subr.mxu0 %v36
  %277 = vmatpush1.msra.mxu0 %v35
  %278 = vmatprep.subr.mxu0 %v40
  %279 = vmatpush1.msra.mxu0 %v39
  %280 = vmatprep.subr.mxu0 %v44
  %281 = vmatpush1.msra.mxu0 %v43
  %282 = vmatprep.subr.mxu0 %v48
  %283 = vmatpush1.msra.mxu0 %v47
  %284 = vmatprep.subr.mxu0 %v52
  %285 = vmatpush1.msra.mxu0 %v51
  %286 = vmatprep.subr.mxu0 %v56
  %287 = vmatpush1.msra.mxu0 %v55
  %288 = vmatprep.subr.mxu0 %v60
  %289 = vmatpush1.msra.mxu0 %v59
  %290 = vmatprep.subr.mxu0 %v64
  %291 = vmatpush1.msra.mxu0 %v63
  %292 = vmatprep.subr.mxu0 %v68
  %293 = vmatpush1.msra.mxu0 %v67
  %294 = vmatprep.subr.mxu0 %v72
  %295 = vmatpush1.msra.mxu0 %v71
  %296 = vmatprep.subr.mxu0 %v76
  %297 = vmatpush1.msra.mxu0 %v75
  %298 = vmatprep.subr.mxu0 %v80
  %299 = vmatpush1.msra.mxu0 %v79
  %300 = vmatprep.subr.mxu0 %v84
  %301 = vmatpush1.msra.mxu0 %v83
  %302 = vmatprep.subr.mxu0 %v88
  %303 = vmatpush1.msra.mxu0 %v87
  %304 = vmatprep.subr.mxu0 0.0
  %305 = vmatpush1.msra.mxu0 0.0
  %306 = vmatprep.subr.mxu0 0.0
  %307 = vmatpush1.msra.mxu0 0.0
  %308 = vmatprep.subr.mxu0 0.0
  %309 = vmatpush1.msra.mxu0 0.0
  %310 = vmatprep.subr.mxu0 0.0
  %311 = vmatpush1.msra.mxu0 0.0
  %312 = vmatprep.subr.mxu0 0.0
  %313 = vmatpush1.msra.mxu0 0.0
  %314 = vmatprep.subr.mxu0 0.0
  %315 = vmatpush1.msra.mxu0 0.0
  %316 = vmatprep.subr.mxu0 0.0
  %317 = vmatpush1.msra.mxu0 0.0
  %318 = vmatprep.subr.mxu0 0.0
  %319 = vmatpush1.msra.mxu0 0.0
  %320 = vmatprep.subr.mxu0 0.0
  %321 = vmatpush1.msra.mxu0 0.0
  %322 = vmatprep.subr.mxu0 0.0
  %323 = vmatpush1.msra.mxu0 0.0
  %324 = vmatprep.subr.mxu0 0.0
  %325 = vmatpush1.msra.mxu0 0.0
  %326 = vmatprep.subr.mxu0 0.0
  %327 = vmatpush1.msra.mxu0 0.0
  %328 = vmatprep.subr.mxu0 0.0
  %329 = vmatpush1.msra.mxu0 0.0
  %330 = vmatprep.subr.mxu0 0.0
  %331 = vmatpush1.msra.mxu0 0.0
  %332 = vmatprep.subr.mxu0 0.0
  %333 = vmatpush1.msra.mxu0 0.0
  %334 = vmatprep.subr.mxu0 0.0
  %335 = vmatpush1.msra.mxu0 0.0
  %336 = vmatprep.mubr.f32.mxu0 0.0
  %337 = vmatmul.mubr.f32.gmra.mrb[0].mxu0 %v266
  %v338 = vpop.f32.mrb[0].mxu0
  %v339 = vadd.f32 0.0, %v338
  %v340 = vpop.f32.mrb[0].mxu0
  %v341 = vadd.f32 0.0, %v340
  %342 = vdwg.mxu0
  %343 = vmatprep.subr.mxu0 %v30
  %344 = vmatpush1.msra.mxu0 %v29
  %345 = vmatprep.subr.mxu0 %v34
  %346 = vmatpush1.msra.mxu0 %v33
  %347 = vmatprep.subr.mxu0 %v38
  %348 = vmatpush1.msra.mxu0 %v37
  %349 = vmatprep.subr.mxu0 %v42
  %350 = vmatpush1.msra.mxu0 %v41
  %351 = vmatprep.subr.mxu0 %v46
  %352 = vmatpush1.msra.mxu0 %v45
  %353 = vmatprep.subr.mxu0 %v50
  %354 = vmatpush1.msra.mxu0 %v49
  %355 = vmatprep.subr.mxu0 %v54
  %356 = vmatpush1.msra.mxu0 %v53
  %357 = vmatprep.subr.mxu0 %v58
  %358 = vmatpush1.msra.mxu0 %v57
  %359 = vmatprep.subr.mxu0 %v62
  %360 = vmatpush1.msra.mxu0 %v61
  %361 = vmatprep.subr.mxu0 %v66
  %362 = vmatpush1.msra.mxu0 %v65
  %363 = vmatprep.subr.mxu0 %v70
  %364 = vmatpush1.msra.mxu0 %v69
  %365 = vmatprep.subr.mxu0 %v74
  %366 = vmatpush1.msra.mxu0 %v73
  %367 = vmatprep.subr.mxu0 %v78
  %368 = vmatpush1.msra.mxu0 %v77
  %369 = vmatprep.subr.mxu0 %v82
  %370 = vmatpush1.msra.mxu0 %v81
  %371 = vmatprep.subr.mxu0 %v86
  %372 = vmatpush1.msra.mxu0 %v85
  %373 = vmatprep.subr.mxu0 %v90
  %374 = vmatpush1.msra.mxu0 %v89
  %375 = vmatprep.subr.mxu0 0.0
  %376 = vmatpush1.msra.mxu0 0.0
  %377 = vmatprep.subr.mxu0 0.0
  %378 = vmatpush1.msra.mxu0 0.0
  %379 = vmatprep.subr.mxu0 0.0
  %380 = vmatpush1.msra.mxu0 0.0
  %381 = vmatprep.subr.mxu0 0.0
  %382 = vmatpush1.msra.mxu0 0.0
  %383 = vmatprep.subr.mxu0 0.0
  %384 = vmatpush1.msra.mxu0 0.0
  %385 = vmatprep.subr.mxu0 0.0
  %386 = vmatpush1.msra.mxu0 0.0
  %387 = vmatprep.subr.mxu0 0.0
  %388 = vmatpush1.msra.mxu0 0.0
  %389 = vmatprep.subr.mxu0 0.0
  %390 = vmatpush1.msra.mxu0 0.0
  %391 = vmatprep.subr.mxu0 0.0
  %392 = vmatpush1.msra.mxu0 0.0
  %393 = vmatprep.subr.mxu0 0.0
  %394 = vmatpush1.msra.mxu0 0.0
  %395 = vmatprep.subr.mxu0 0.0
  %396 = vmatpush1.msra.mxu0 0.0
  %397 = vmatprep.subr.mxu0 0.0
  %398 = vmatpush1.msra.mxu0 0.0
  %399 = vmatprep.subr.mxu0 0.0
  %400 = vmatpush1.msra.mxu0 0.0
  %401 = vmatprep.subr.mxu0 0.0
  %402 = vmatpush1.msra.mxu0 0.0
  %403 = vmatprep.subr.mxu0 0.0
  %404 = vmatpush1.msra.mxu0 0.0
  %405 = vmatprep.subr.mxu0 0.0
  %406 = vmatpush1.msra.mxu0 0.0
  %407 = vmatprep.mubr.f32.mxu0 0.0
  %408 = vmatmul.mubr.f32.gmra.mrb[0].mxu0 %v266
  %v409 = vpop.f32.mrb[0].mxu0
  %v410 = vadd.f32 0.0, %v409
  %v411 = vpop.f32.mrb[0].mxu0
  %v412 = vadd.f32 0.0, %v411
  %413 = vdwg.mxu0
  %v414 = vadd.f32 %v268, %v339
  %v415 = vadd.f32 %v269, %v341
  %v416 = vadd.f32 %v270, %v410
  %v417 = vadd.f32 %v271, %v412
  %v418 = vxor.u32 %v414, 2147483648
  %v419 = vxor.u32 %v415, 2147483648
  %v420 = vxor.u32 %v416, 2147483648
  %v421 = vmul.f32 %v418, 1.442695
  %v422 = vpow.pop %v421
  %v423 = vmul.f32 %v419, 1.442695
  %v424 = vpow.pop %v423
  %v425 = vmul.f32 %v420, 1.442695
  %v426 = vpow.pop %v425
  %v427 = vadd.f32 %v422, 1.0
  %v428 = vadd.f32 %v424, 1.0
  %v429 = vadd.f32 %v426, 1.0
  %v430 = vrcp.pop %v427
  %v431 = vmul.f32 1.0, %v430
  %v432 = vrcp.pop %v428
  %v433 = vmul.f32 1.0, %v432
  %v434 = vrcp.pop %v429
  %v435 = vmul.f32 1.0, %v434
  %v436 = vtanh.pop %v417
  %v437 = vmul.f32 %v433, %v264
  %v438 = vmul.f32 %v431, %v436
  %v439 = vadd.f32 %v437, %v438
  %v440 = vtanh.pop %v439
  %v441 = vmul.f32 %v435, %v440
  %s442 = scalar_lea.vmem %s0, 64
  %v443 = vld [vmem:[%s442] sm:$0xff]
  %v444 = vld [vmem:[%s442 + $0x8] sm:$0xff]
  %v445 = vld [vmem:[%s442 + $0x10] sm:$0xff]
  %v446 = vld [vmem:[%s442 + $0x18] sm:$0xff]
  %447 = vmatprep.subr.mxu0 %v28
  %448 = vmatpush1.msra.mxu0 %v27
  %449 = vmatprep.subr.mxu0 %v32
  %450 = vmatpush1.msra.mxu0 %v31
  %451 = vmatprep.subr.mxu0 %v36
  %452 = vmatpush1.msra.mxu0 %v35
  %453 = vmatprep.subr.mxu0 %v40
  %454 = vmatpush1.msra.mxu0 %v39
  %455 = vmatprep.subr.mxu0 %v44
  %456 = vmatpush1.msra.mxu0 %v43
  %457 = vmatprep.subr.mxu0 %v48
  %458 = vmatpush1.msra.mxu0 %v47
  %459 = vmatprep.subr.mxu0 %v52
  %460 = vmatpush1.msra.mxu0 %v51
  %461 = vmatprep.subr.mxu0 %v56
  %462 = vmatpush1.msra.mxu0 %v55
  %463 = vmatprep.subr.mxu0 %v60
  %464 = vmatpush1.msra.mxu0 %v59
  %465 = vmatprep.subr.mxu0 %v64
  %466 = vmatpush1.msra.mxu0 %v63
  %467 = vmatprep.subr.mxu0 %v68
  %468 = vmatpush1.msra.mxu0 %v67
  %469 = vmatprep.subr.mxu0 %v72
  %470 = vmatpush1.msra.mxu0 %v71
  %471 = vmatprep.subr.mxu0 %v76
  %472 = vmatpush1.msra.mxu0 %v75
  %473 = vmatprep.subr.mxu0 %v80
  %474 = vmatpush1.msra.mxu0 %v79
  %475 = vmatprep.subr.mxu0 %v84
  %476 = vmatpush1.msra.mxu0 %v83
  %477 = vmatprep.subr.mxu0 %v88
  %478 = vmatpush1.msra.mxu0 %v87
  %479 = vmatprep.subr.mxu0 0.0
  %480 = vmatpush1.msra.mxu0 0.0
  %481 = vmatprep.subr.mxu0 0.0
  %482 = vmatpush1.msra.mxu0 0.0
  %483 = vmatprep.subr.mxu0 0.0
  %484 = vmatpush1.msra.mxu0 0.0
  %485 = vmatprep.subr.mxu0 0.0
  %486 = vmatpush1.msra.mxu0 0.0
  %487 = vmatprep.subr.mxu0 0.0
  %488 = vmatpush1.msra.mxu0 0.0
  %489 = vmatprep.subr.mxu0 0.0
  %490 = vmatpush1.msra.mxu0 0.0
  %491 = vmatprep.subr.mxu0 0.0
  %492 = vmatpush1.msra.mxu0 0.0
  %493 = vmatprep.subr.mxu0 0.0
  %494 = vmatpush1.msra.mxu0 0.0
  %495 = vmatprep.subr.mxu0 0.0
  %496 = vmatpush1.msra.mxu0 0.0
  %497 = vmatprep.subr.mxu0 0.0
  %498 = vmatpush1.msra.mxu0 0.0
  %499 = vmatprep.subr.mxu0 0.0
  %500 = vmatpush1.msra.mxu0 0.0
  %501 = vmatprep.subr.mxu0 0.0
  %502 = vmatpush1.msra.mxu0 0.0
  %503 = vmatprep.subr.mxu0 0.0
  %504 = vmatpush1.msra.mxu0 0.0
  %505 = vmatprep.subr.mxu0 0.0
  %506 = vmatpush1.msra.mxu0 0.0
  %507 = vmatprep.subr.mxu0 0.0
  %508 = vmatpush1.msra.mxu0 0.0
  %509 = vmatprep.subr.mxu0 0.0
  %510 = vmatpush1.msra.mxu0 0.0
  %511 = vmatprep.mubr.f32.mxu0 0.0
  %512 = vmatmul.mubr.f32.gmra.mrb[0].mxu0 %v441
  %v513 = vpop.f32.mrb[0].mxu0
  %v514 = vadd.f32 0.0, %v513
  %v515 = vpop.f32.mrb[0].mxu0
  %v516 = vadd.f32 0.0, %v515
  %517 = vdwg.mxu0
  %518 = vmatprep.subr.mxu0 %v30
  %519 = vmatpush1.msra.mxu0 %v29
  %520 = vmatprep.subr.mxu0 %v34
  %521 = vmatpush1.msra.mxu0 %v33
  %522 = vmatprep.subr.mxu0 %v38
  %523 = vmatpush1.msra.mxu0 %v37
  %524 = vmatprep.subr.mxu0 %v42
  %525 = vmatpush1.msra.mxu0 %v41
  %526 = vmatprep.subr.mxu0 %v46
  %527 = vmatpush1.msra.mxu0 %v45
  %528 = vmatprep.subr.mxu0 %v50
  %529 = vmatpush1.msra.mxu0 %v49
  %530 = vmatprep.subr.mxu0 %v54
  %531 = vmatpush1.msra.mxu0 %v53
  %532 = vmatprep.subr.mxu0 %v58
  %533 = vmatpush1.msra.mxu0 %v57
  %534 = vmatprep.subr.mxu0 %v62
  %535 = vmatpush1.msra.mxu0 %v61
  %536 = vmatprep.subr.mxu0 %v66
  %537 = vmatpush1.msra.mxu0 %v65
  %538 = vmatprep.subr.mxu0 %v70
  %539 = vmatpush1.msra.mxu0 %v69
  %540 = vmatprep.subr.mxu0 %v74
  %541 = vmatpush1.msra.mxu0 %v73
  %542 = vmatprep.subr.mxu0 %v78
  %543 = vmatpush1.msra.mxu0 %v77
  %544 = vmatprep.subr.mxu0 %v82
  %545 = vmatpush1.msra.mxu0 %v81
  %546 = vmatprep.subr.mxu0 %v86
  %547 = vmatpush1.msra.mxu0 %v85
  %548 = vmatprep.subr.mxu0 %v90
  %549 = vmatpush1.msra.mxu0 %v89
  %550 = vmatprep.subr.mxu0 0.0
  %551 = vmatpush1.msra.mxu0 0.0
  %552 = vmatprep.subr.mxu0 0.0
  %553 = vmatpush1.msra.mxu0 0.0
  %554 = vmatprep.subr.mxu0 0.0
  %555 = vmatpush1.msra.mxu0 0.0
  %556 = vmatprep.subr.mxu0 0.0
  %557 = vmatpush1.msra.mxu0 0.0
  %558 = vmatprep.subr.mxu0 0.0
  %559 = vmatpush1.msra.mxu0 0.0
  %560 = vmatprep.subr.mxu0 0.0
  %561 = vmatpush1.msra.mxu0 0.0
  %562 = vmatprep.subr.mxu0 0.0
  %563 = vmatpush1.msra.mxu0 0.0
  %564 = vmatprep.subr.mxu0 0.0
  %565 = vmatpush1.msra.mxu0 0.0
  %566 = vmatprep.subr.mxu0 0.0
  %567 = vmatpush1.msra.mxu0 0.0
  %568 = vmatprep.subr.mxu0 0.0
  %569 = vmatpush1.msra.mxu0 0.0
  %570 = vmatprep.subr.mxu0 0.0
  %571 = vmatpush1.msra.mxu0 0.0
  %572 = vmatprep.subr.mxu0 0.0
  %573 = vmatpush1.msra.mxu0 0.0
  %574 = vmatprep.subr.mxu0 0.0
  %575 = vmatpush1.msra.mxu0 0.0
  %576 = vmatprep.subr.mxu0 0.0
  %577 = vmatpush1.msra.mxu0 0.0
  %578 = vmatprep.subr.mxu0 0.0
  %579 = vmatpush1.msra.mxu0 0.0
  %580 = vmatprep.subr.mxu0 0.0
  %581 = vmatpush1.msra.mxu0 0.0
  %582 = vmatprep.mubr.f32.mxu0 0.0
  %583 = vmatmul.mubr.f32.gmra.mrb[0].mxu0 %v441
  %v584 = vpop.f32.mrb[0].mxu0
  %v585 = vadd.f32 0.0, %v584
  %v586 = vpop.f32.mrb[0].mxu0
  %v587 = vadd.f32 0.0, %v586
  %588 = vdwg.mxu0
  %v589 = vadd.f32 %v443, %v514
  %v590 = vadd.f32 %v444, %v516
  %v591 = vadd.f32 %v445, %v585
  %v592 = vadd.f32 %v446, %v587
  %v593 = vxor.u32 %v589, 2147483648
  %v594 = vxor.u32 %v590, 2147483648
  %v595 = vxor.u32 %v591, 2147483648
  %v596 = vmul.f32 %v593, 1.442695
  %v597 = vpow.pop %v596
  %v598 = vmul.f32 %v594, 1.442695
  %v599 = vpow.pop %v598
  %v600 = vmul.f32 %v595, 1.442695
  %v601 = vpow.pop %v600
  %v602 = vadd.f32 %v597, 1.0
  %v603 = vadd.f32 %v599, 1.0
  %v604 = vadd.f32 %v601, 1.0
  %v605 = vrcp.pop %v602
  %v606 = vmul.f32 1.0, %v605
  %v607 = vrcp.pop %v603
  %v608 = vmul.f32 1.0, %v607
  %v609 = vrcp.pop %v604
  %v610 = vmul.f32 1.0, %v609
  %v611 = vtanh.pop %v592
  %v612 = vmul.f32 %v608, %v439
  %v613 = vmul.f32 %v606, %v611
  %v614 = vadd.f32 %v612, %v613
  %v615 = vtanh.pop %v614
  %v616 = vmul.f32 %v610, %v615
  %s617 = scalar_lea.vmem %s0, 96
  %v618 = vld [vmem:[%s617] sm:$0xff]
  %v619 = vld [vmem:[%s617 + $0x8] sm:$0xff]
  %v620 = vld [vmem:[%s617 + $0x10] sm:$0xff]
  %v621 = vld [vmem:[%s617 + $0x18] sm:$0xff]
  %622 = vmatprep.subr.mxu0 %v28
  %623 = vmatpush1.msra.mxu0 %v27
  %624 = vmatprep.subr.mxu0 %v32
  %625 = vmatpush1.msra.mxu0 %v31
  %626 = vmatprep.subr.mxu0 %v36
  %627 = vmatpush1.msra.mxu0 %v35
  %628 = vmatprep.subr.mxu0 %v40
  %629 = vmatpush1.msra.mxu0 %v39
  %630 = vmatprep.subr.mxu0 %v44
  %631 = vmatpush1.msra.mxu0 %v43
  %632 = vmatprep.subr.mxu0 %v48
  %633 = vmatpush1.msra.mxu0 %v47
  %634 = vmatprep.subr.mxu0 %v52
  %635 = vmatpush1.msra.mxu0 %v51
  %636 = vmatprep.subr.mxu0 %v56
  %637 = vmatpush1.msra.mxu0 %v55
  %638 = vmatprep.subr.mxu0 %v60
  %639 = vmatpush1.msra.mxu0 %v59
  %640 = vmatprep.subr.mxu0 %v64
  %641 = vmatpush1.msra.mxu0 %v63
  %642 = vmatprep.subr.mxu0 %v68
  %643 = vmatpush1.msra.mxu0 %v67
  %644 = vmatprep.subr.mxu0 %v72
  %645 = vmatpush1.msra.mxu0 %v71
  %646 = vmatprep.subr.mxu0 %v76
  %647 = vmatpush1.msra.mxu0 %v75
  %648 = vmatprep.subr.mxu0 %v80
  %649 = vmatpush1.msra.mxu0 %v79
  %650 = vmatprep.subr.mxu0 %v84
  %651 = vmatpush1.msra.mxu0 %v83
  %652 = vmatprep.subr.mxu0 %v88
  %653 = vmatpush1.msra.mxu0 %v87
  %654 = vmatprep.subr.mxu0 0.0
  %655 = vmatpush1.msra.mxu0 0.0
  %656 = vmatprep.subr.mxu0 0.0
  %657 = vmatpush1.msra.mxu0 0.0
  %658 = vmatprep.subr.mxu0 0.0
  %659 = vmatpush1.msra.mxu0 0.0
  %660 = vmatprep.subr.mxu0 0.0
  %661 = vmatpush1.msra.mxu0 0.0
  %662 = vmatprep.subr.mxu0 0.0
  %663 = vmatpush1.msra.mxu0 0.0
  %664 = vmatprep.subr.mxu0 0.0
  %665 = vmatpush1.msra.mxu0 0.0
  %666 = vmatprep.subr.mxu0 0.0
  %667 = vmatpush1.msra.mxu0 0.0
  %668 = vmatprep.subr.mxu0 0.0
  %669 = vmatpush1.msra.mxu0 0.0
  %670 = vmatprep.subr.mxu0 0.0
  %671 = vmatpush1.msra.mxu0 0.0
  %672 = vmatprep.subr.mxu0 0.0
  %673 = vmatpush1.msra.mxu0 0.0
  %674 = vmatprep.subr.mxu0 0.0
  %675 = vmatpush1.msra.mxu0 0.0
  %676 = vmatprep.subr.mxu0 0.0
  %677 = vmatpush1.msra.mxu0 0.0
  %678 = vmatprep.subr.mxu0 0.0
  %679 = vmatpush1.msra.mxu0 0.0
  %680 = vmatprep.subr.mxu0 0.0
  %681 = vmatpush1.msra.mxu0 0.0
  %682 = vmatprep.subr.mxu0 0.0
  %683 = vmatpush1.msra.mxu0 0.0
  %684 = vmatprep.subr.mxu0 0.0
  %685 = vmatpush1.msra.mxu0 0.0
  %686 = vmatprep.mubr.f32.mxu0 0.0
  %687 = vmatmul.mubr.f32.gmra.mrb[0].mxu0 %v616
  %v688 = vpop.f32.mrb[0].mxu0
  %v689 = vadd.f32 0.0, %v688
  %v690 = vpop.f32.mrb[0].mxu0
  %v691 = vadd.f32 0.0, %v690
  %692 = vdwg.mxu0
  %693 = vmatprep.subr.mxu0 %v30
  %694 = vmatpush1.msra.mxu0 %v29
  %695 = vmatprep.subr.mxu0 %v34
  %696 = vmatpush1.msra.mxu0 %v33
  %697 = vmatprep.subr.mxu0 %v38
  %698 = vmatpush1.msra.mxu0 %v37
  %699 = vmatprep.subr.mxu0 %v42
  %700 = vmatpush1.msra.mxu0 %v41
  %701 = vmatprep.subr.mxu0 %v46
  %702 = vmatpush1.msra.mxu0 %v45
  %703 = vmatprep.subr.mxu0 %v50
  %704 = vmatpush1.msra.mxu0 %v49
  %705 = vmatprep.subr.mxu0 %v54
  %706 = vmatpush1.msra.mxu0 %v53
  %707 = vmatprep.subr.mxu0 %v58
  %708 = vmatpush1.msra.mxu0 %v57
  %709 = vmatprep.subr.mxu0 %v62
  %710 = vmatpush1.msra.mxu0 %v61
  %711 = vmatprep.subr.mxu0 %v66
  %712 = vmatpush1.msra.mxu0 %v65
  %713 = vmatprep.subr.mxu0 %v70
  %714 = vmatpush1.msra.mxu0 %v69
  %715 = vmatprep.subr.mxu0 %v74
  %716 = vmatpush1.msra.mxu0 %v73
  %717 = vmatprep.subr.mxu0 %v78
  %718 = vmatpush1.msra.mxu0 %v77
  %719 = vmatprep.subr.mxu0 %v82
  %720 = vmatpush1.msra.mxu0 %v81
  %721 = vmatprep.subr.mxu0 %v86
  %722 = vmatpush1.msra.mxu0 %v85
  %723 = vmatprep.subr.mxu0 %v90
  %724 = vmatpush1.msra.mxu0 %v89
  %725 = vmatprep.subr.mxu0 0.0
  %726 = vmatpush1.msra.mxu0 0.0
  %727 = vmatprep.subr.mxu0 0.0
  %728 = vmatpush1.msra.mxu0 0.0
  %729 = vmatprep.subr.mxu0 0.0
  %730 = vmatpush1.msra.mxu0 0.0
  %731 = vmatprep.subr.mxu0 0.0
  %732 = vmatpush1.msra.mxu0 0.0
  %733 = vmatprep.subr.mxu0 0.0
  %734 = vmatpush1.msra.mxu0 0.0
  %735 = vmatprep.subr.mxu0 0.0
  %736 = vmatpush1.msra.mxu0 0.0
  %737 = vmatprep.subr.mxu0 0.0
  %738 = vmatpush1.msra.mxu0 0.0
  %739 = vmatprep.subr.mxu0 0.0
  %740 = vmatpush1.msra.mxu0 0.0
  %741 = vmatprep.subr.mxu0 0.0
  %742 = vmatpush1.msra.mxu0 0.0
  %743 = vmatprep.subr.mxu0 0.0
  %744 = vmatpush1.msra.mxu0 0.0
  %745 = vmatprep.subr.mxu0 0.0
  %746 = vmatpush1.msra.mxu0 0.0
  %747 = vmatprep.subr.mxu0 0.0
  %748 = vmatpush1.msra.mxu0 0.0
  %749 = vmatprep.subr.mxu0 0.0
  %750 = vmatpush1.msra.mxu0 0.0
  %751 = vmatprep.subr.mxu0 0.0
  %752 = vmatpush1.msra.mxu0 0.0
  %753 = vmatprep.subr.mxu0 0.0
  %754 = vmatpush1.msra.mxu0 0.0
  %755 = vmatprep.subr.mxu0 0.0
  %756 = vmatpush1.msra.mxu0 0.0
  %757 = vmatprep.mubr.f32.mxu0 0.0
  %758 = vmatmul.mubr.f32.gmra.mrb[0].mxu0 %v616
  %v759 = vpop.f32.mrb[0].mxu0
  %v760 = vadd.f32 0.0, %v759
  %v761 = vpop.f32.mrb[0].mxu0
  %v762 = vadd.f32 0.0, %v761
  %763 = vdwg.mxu0
  %v764 = vadd.f32 %v618, %v689
  %v765 = vadd.f32 %v619, %v691
  %v766 = vadd.f32 %v620, %v760
  %v767 = vadd.f32 %v621, %v762
  %v768 = vxor.u32 %v764, 2147483648
  %v769 = vxor.u32 %v765, 2147483648
  %v770 = vxor.u32 %v766, 2147483648
  %v771 = vmul.f32 %v768, 1.442695
  %v772 = vpow.pop %v771
  %v773 = vmul.f32 %v769, 1.442695
  %v774 = vpow.pop %v773
  %v775 = vmul.f32 %v770, 1.442695
  %v776 = vpow.pop %v775
  %v777 = vadd.f32 %v772, 1.0
  %v778 = vadd.f32 %v774, 1.0
  %v779 = vadd.f32 %v776, 1.0
  %v780 = vrcp.pop %v777
  %v781 = vmul.f32 1.0, %v780
  %v782 = vrcp.pop %v778
  %v783 = vmul.f32 1.0, %v782
  %v784 = vrcp.pop %v779
  %v785 = vmul.f32 1.0, %v784
  %v786 = vtanh.pop %v767
  %v787 = vmul.f32 %v783, %v614
  %v788 = vmul.f32 %v781, %v786
  %v789 = vadd.f32 %v787, %v788
  %v790 = vtanh.pop %v789
  %v791 = vmul.f32 %v785, %v790
  %s792 = scalar_lea.vmem %s0, 128
  %v793 = vld [vmem:[%s792] sm:$0xff]
  %v794 = vld [vmem:[%s792 + $0x8] sm:$0xff]
  %v795 = vld [vmem:[%s792 + $0x10] sm:$0xff]
  %v796 = vld [vmem:[%s792 + $0x18] sm:$0xff]
  %797 = vmatprep.subr.mxu0 %v28
  %798 = vmatpush1.msra.mxu0 %v27
  %799 = vmatprep.subr.mxu0 %v32
  %800 = vmatpush1.msra.mxu0 %v31
  %801 = vmatprep.subr.mxu0 %v36
  %802 = vmatpush1.msra.mxu0 %v35
  %803 = vmatprep.subr.mxu0 %v40
  %804 = vmatpush1.msra.mxu0 %v39
  %805 = vmatprep.subr.mxu0 %v44
  %806 = vmatpush1.msra.mxu0 %v43
  %807 = vmatprep.subr.mxu0 %v48
  %808 = vmatpush1.msra.mxu0 %v47
  %809 = vmatprep.subr.mxu0 %v52
  %810 = vmatpush1.msra.mxu0 %v51
  %811 = vmatprep.subr.mxu0 %v56
  %812 = vmatpush1.msra.mxu0 %v55
  %813 = vmatprep.subr.mxu0 %v60
  %814 = vmatpush1.msra.mxu0 %v59
  %815 = vmatprep.subr.mxu0 %v64
  %816 = vmatpush1.msra.mxu0 %v63
  %817 = vmatprep.subr.mxu0 %v68
  %818 = vmatpush1.msra.mxu0 %v67
  %819 = vmatprep.subr.mxu0 %v72
  %820 = vmatpush1.msra.mxu0 %v71
  %821 = vmatprep.subr.mxu0 %v76
  %822 = vmatpush1.msra.mxu0 %v75
  %823 = vmatprep.subr.mxu0 %v80
  %824 = vmatpush1.msra.mxu0 %v79
  %825 = vmatprep.subr.mxu0 %v84
  %826 = vmatpush1.msra.mxu0 %v83
  %827 = vmatprep.subr.mxu0 %v88
  %828 = vmatpush1.msra.mxu0 %v87
  %829 = vmatprep.subr.mxu0 0.0
  %830 = vmatpush1.msra.mxu0 0.0
  %831 = vmatprep.subr.mxu0 0.0
  %832 = vmatpush1.msra.mxu0 0.0
  %833 = vmatprep.subr.mxu0 0.0
  %834 = vmatpush1.msra.mxu0 0.0
  %835 = vmatprep.subr.mxu0 0.0
  %836 = vmatpush1.msra.mxu0 0.0
  %837 = vmatprep.subr.mxu0 0.0
  %838 = vmatpush1.msra.mxu0 0.0
  %839 = vmatprep.subr.mxu0 0.0
  %840 = vmatpush1.msra.mxu0 0.0
  %841 = vmatprep.subr.mxu0 0.0
  %842 = vmatpush1.msra.mxu0 0.0
  %843 = vmatprep.subr.mxu0 0.0
  %844 = vmatpush1.msra.mxu0 0.0
  %845 = vmatprep.subr.mxu0 0.0
  %846 = vmatpush1.msra.mxu0 0.0
  %847 = vmatprep.subr.mxu0 0.0
  %848 = vmatpush1.msra.mxu0 0.0
  %849 = vmatprep.subr.mxu0 0.0
  %850 = vmatpush1.msra.mxu0 0.0
  %851 = vmatprep.subr.mxu0 0.0
  %852 = vmatpush1.msra.mxu0 0.0
  %853 = vmatprep.subr.mxu0 0.0
  %854 = vmatpush1.msra.mxu0 0.0
  %855 = vmatprep.subr.mxu0 0.0
  %856 = vmatpush1.msra.mxu0 0.0
  %857 = vmatprep.subr.mxu0 0.0
  %858 = vmatpush1.msra.mxu0 0.0
  %859 = vmatprep.subr.mxu0 0.0
  %860 = vmatpush1.msra.mxu0 0.0
  %861 = vmatprep.mubr.f32.mxu0 0.0
  %862 = vmatmul.mubr.f32.gmra.mrb[0].mxu0 %v791
  %v863 = vpop.f32.mrb[0].mxu0
  %v864 = vadd.f32 0.0, %v863
  %v865 = vpop.f32.mrb[0].mxu0
  %v866 = vadd.f32 0.0, %v865
  %867 = vdwg.mxu0
  %868 = vmatprep.subr.mxu0 %v30
  %869 = vmatpush1.msra.mxu0 %v29
  %870 = vmatprep.subr.mxu0 %v34
  %871 = vmatpush1.msra.mxu0 %v33
  %872 = vmatprep.subr.mxu0 %v38
  %873 = vmatpush1.msra.mxu0 %v37
  %874 = vmatprep.subr.mxu0 %v42
  %875 = vmatpush1.msra.mxu0 %v41
  %876 = vmatprep.subr.mxu0 %v46
  %877 = vmatpush1.msra.mxu0 %v45
  %878 = vmatprep.subr.mxu0 %v50
  %879 = vmatpush1.msra.mxu0 %v49
  %880 = vmatprep.subr.mxu0 %v54
  %881 = vmatpush1.msra.mxu0 %v53
  %882 = vmatprep.subr.mxu0 %v58
  %883 = vmatpush1.msra.mxu0 %v57
  %884 = vmatprep.subr.mxu0 %v62
  %885 = vmatpush1.msra.mxu0 %v61
  %886 = vmatprep.subr.mxu0 %v66
  %887 = vmatpush1.msra.mxu0 %v65
  %888 = vmatprep.subr.mxu0 %v70
  %889 = vmatpush1.msra.mxu0 %v69
  %890 = vmatprep.subr.mxu0 %v74
  %891 = vmatpush1.msra.mxu0 %v73
  %892 = vmatprep.subr.mxu0 %v78
  %893 = vmatpush1.msra.mxu0 %v77
  %894 = vmatprep.subr.mxu0 %v82
  %895 = vmatpush1.msra.mxu0 %v81
  %896 = vmatprep.subr.mxu0 %v86
  %897 = vmatpush1.msra.mxu0 %v85
  %898 = vmatprep.subr.mxu0 %v90
  %899 = vmatpush1.msra.mxu0 %v89
  %900 = vmatprep.subr.mxu0 0.0
  %901 = vmatpush1.msra.mxu0 0.0
  %902 = vmatprep.subr.mxu0 0.0
  %903 = vmatpush1.msra.mxu0 0.0
  %904 = vmatprep.subr.mxu0 0.0
  %905 = vmatpush1.msra.mxu0 0.0
  %906 = vmatprep.subr.mxu0 0.0
  %907 = vmatpush1.msra.mxu0 0.0
  %908 = vmatprep.subr.mxu0 0.0
  %909 = vmatpush1.msra.mxu0 0.0
  %910 = vmatprep.subr.mxu0 0.0
  %911 = vmatpush1.msra.mxu0 0.0
  %912 = vmatprep.subr.mxu0 0.0
  %913 = vmatpush1.msra.mxu0 0.0
  %914 = vmatprep.subr.mxu0 0.0
  %915 = vmatpush1.msra.mxu0 0.0
  %916 = vmatprep.subr.mxu0 0.0
  %917 = vmatpush1.msra.mxu0 0.0
  %918 = vmatprep.subr.mxu0 0.0
  %919 = vmatpush1.msra.mxu0 0.0
  %920 = vmatprep.subr.mxu0 0.0
  %921 = vmatpush1.msra.mxu0 0.0
  %922 = vmatprep.subr.mxu0 0.0
  %923 = vmatpush1.msra.mxu0 0.0
  %924 = vmatprep.subr.mxu0 0.0
  %925 = vmatpush1.msra.mxu0 0.0
  %926 = vmatprep.subr.mxu0 0.0
  %927 = vmatpush1.msra.mxu0 0.0
  %928 = vmatprep.subr.mxu0 0.0
  %929 = vmatpush1.msra.mxu0 0.0
  %930 = vmatprep.subr.mxu0 0.0
  %931 = vmatpush1.msra.mxu0 0.0
  %932 = vmatprep.mubr.f32.mxu0 0.0
  %933 = vmatmul.mubr.f32.gmra.mrb[0].mxu0 %v791
  %v934 = vpop.f32.mrb[0].mxu0
  %v935 = vadd.f32 0.0, %v934
  %v936 = vpop.f32.mrb[0].mxu0
  %v937 = vadd.f32 0.0, %v936
  %938 = vdwg.mxu0
  %v939 = vadd.f32 %v793, %v864
  %v940 = vadd.f32 %v794, %v866
  %v941 = vadd.f32 %v795, %v935
  %v942 = vadd.f32 %v796, %v937
  %v943 = vxor.u32 %v939, 2147483648
  %v944 = vxor.u32 %v940, 2147483648
  %v945 = vxor.u32 %v941, 2147483648
  %v946 = vmul.f32 %v943, 1.442695
  %v947 = vpow.pop %v946
  %v948 = vmul.f32 %v944, 1.442695
  %v949 = vpow.pop %v948
  %v950 = vmul.f32 %v945, 1.442695
  %v951 = vpow.pop %v950
  %v952 = vadd.f32 %v947, 1.0
  %v953 = vadd.f32 %v949, 1.0
  %v954 = vadd.f32 %v951, 1.0
  %v955 = vrcp.pop %v952
  %v956 = vmul.f32 1.0, %v955
  %v957 = vrcp.pop %v953
  %v958 = vmul.f32 1.0, %v957
  %v959 = vrcp.pop %v954
  %v960 = vmul.f32 1.0, %v959
  %v961 = vtanh.pop %v942
  %v962 = vmul.f32 %v958, %v789
  %v963 = vmul.f32 %v956, %v961
  %v964 = vadd.f32 %v962, %v963
  %v965 = vtanh.pop %v964
  %v966 = vmul.f32 %v960, %v965
  %s967 = scalar_lea.vmem %s0, 160
  %v968 = vld [vmem:[%s967] sm:$0xff]
  %v969 = vld [vmem:[%s967 + $0x8] sm:$0xff]
  %v970 = vld [vmem:[%s967 + $0x10] sm:$0xff]
  %v971 = vld [vmem:[%s967 + $0x18] sm:$0xff]
  %972 = vmatprep.subr.mxu0 %v28
  %973 = vmatpush1.msra.mxu0 %v27
  %974 = vmatprep.subr.mxu0 %v32
  %975 = vmatpush1.msra.mxu0 %v31
  %976 = vmatprep.subr.mxu0 %v36
  %977 = vmatpush1.msra.mxu0 %v35
  %978 = vmatprep.subr.mxu0 %v40
  %979 = vmatpush1.msra.mxu0 %v39
  %980 = vmatprep.subr.mxu0 %v44
  %981 = vmatpush1.msra.mxu0 %v43
  %982 = vmatprep.subr.mxu0 %v48
  %983 = vmatpush1.msra.mxu0 %v47
  %984 = vmatprep.subr.mxu0 %v52
  %985 = vmatpush1.msra.mxu0 %v51
  %986 = vmatprep.subr.mxu0 %v56
  %987 = vmatpush1.msra.mxu0 %v55
  %988 = vmatprep.subr.mxu0 %v60
  %989 = vmatpush1.msra.mxu0 %v59
  %990 = vmatprep.subr.mxu0 %v64
  %991 = vmatpush1.msra.mxu0 %v63
  %992 = vmatprep.subr.mxu0 %v68
  %993 = vmatpush1.msra.mxu0 %v67
  %994 = vmatprep.subr.mxu0 %v72
  %995 = vmatpush1.msra.mxu0 %v71
  %996 = vmatprep.subr.mxu0 %v76
  %997 = vmatpush1.msra.mxu0 %v75
  %998 = vmatprep.subr.mxu0 %v80
  %999 = vmatpush1.msra.mxu0 %v79
  %1000 = vmatprep.subr.mxu0 %v84
  %1001 = vmatpush1.msra.mxu0 %v83
  %1002 = vmatprep.subr.mxu0 %v88
  %1003 = vmatpush1.msra.mxu0 %v87
  %1004 = vmatprep.subr.mxu0 0.0
  %1005 = vmatpush1.msra.mxu0 0.0
  %1006 = vmatprep.subr.mxu0 0.0
  %1007 = vmatpush1.msra.mxu0 0.0
  %1008 = vmatprep.subr.mxu0 0.0
  %1009 = vmatpush1.msra.mxu0 0.0
  %1010 = vmatprep.subr.mxu0 0.0
  %1011 = vmatpush1.msra.mxu0 0.0
  %1012 = vmatprep.subr.mxu0 0.0
  %1013 = vmatpush1.msra.mxu0 0.0
  %1014 = vmatprep.subr.mxu0 0.0
  %1015 = vmatpush1.msra.mxu0 0.0
  %1016 = vmatprep.subr.mxu0 0.0
  %1017 = vmatpush1.msra.mxu0 0.0
  %1018 = vmatprep.subr.mxu0 0.0
  %1019 = vmatpush1.msra.mxu0 0.0
  %1020 = vmatprep.subr.mxu0 0.0
  %1021 = vmatpush1.msra.mxu0 0.0
  %1022 = vmatprep.subr.mxu0 0.0
  %1023 = vmatpush1.msra.mxu0 0.0
  %1024 = vmatprep.subr.mxu0 0.0
  %1025 = vmatpush1.msra.mxu0 0.0
  %1026 = vmatprep.subr.mxu0 0.0
  %1027 = vmatpush1.msra.mxu0 0.0
  %1028 = vmatprep.subr.mxu0 0.0
  %1029 = vmatpush1.msra.mxu0 0.0
  %1030 = vmatprep.subr.mxu0 0.0
  %1031 = vmatpush1.msra.mxu0 0.0
  %1032 = vmatprep.subr.mxu0 0.0
  %1033 = vmatpush1.msra.mxu0 0.0
  %1034 = vmatprep.subr.mxu0 0.0
  %1035 = vmatpush1.msra.mxu0 0.0
  %1036 = vmatprep.mubr.f32.mxu0 0.0
  %1037 = vmatmul.mubr.f32.gmra.mrb[0].mxu0 %v966
  %v1038 = vpop.f32.mrb[0].mxu0
  %v1039 = vadd.f32 0.0, %v1038
  %v1040 = vpop.f32.mrb[0].mxu0
  %v1041 = vadd.f32 0.0, %v1040
  %1042 = vdwg.mxu0
  %1043 = vmatprep.subr.mxu0 %v30
  %1044 = vmatpush1.msra.mxu0 %v29
  %1045 = vmatprep.subr.mxu0 %v34
  %1046 = vmatpush1.msra.mxu0 %v33
  %1047 = vmatprep.subr.mxu0 %v38
  %1048 = vmatpush1.msra.mxu0 %v37
  %1049 = vmatprep.subr.mxu0 %v42
  %1050 = vmatpush1.msra.mxu0 %v41
  %1051 = vmatprep.subr.mxu0 %v46
  %1052 = vmatpush1.msra.mxu0 %v45
  %1053 = vmatprep.subr.mxu0 %v50
  %1054 = vmatpush1.msra.mxu0 %v49
  %1055 = vmatprep.subr.mxu0 %v54
  %1056 = vmatpush1.msra.mxu0 %v53
  %1057 = vmatprep.subr.mxu0 %v58
  %1058 = vmatpush1.msra.mxu0 %v57
  %1059 = vmatprep.subr.mxu0 %v62
  %1060 = vmatpush1.msra.mxu0 %v61
  %1061 = vmatprep.subr.mxu0 %v66
  %1062 = vmatpush1.msra.mxu0 %v65
  %1063 = vmatprep.subr.mxu0 %v70
  %1064 = vmatpush1.msra.mxu0 %v69
  %1065 = vmatprep.subr.mxu0 %v74
  %1066 = vmatpush1.msra.mxu0 %v73
  %1067 = vmatprep.subr.mxu0 %v78
  %1068 = vmatpush1.msra.mxu0 %v77
  %1069 = vmatprep.subr.mxu0 %v82
  %1070 = vmatpush1.msra.mxu0 %v81
  %1071 = vmatprep.subr.mxu0 %v86
  %1072 = vmatpush1.msra.mxu0 %v85
  %1073 = vmatprep.subr.mxu0 %v90
  %1074 = vmatpush1.msra.mxu0 %v89
  %1075 = vmatprep.subr.mxu0 0.0
  %1076 = vmatpush1.msra.mxu0 0.0
  %1077 = vmatprep.subr.mxu0 0.0
  %1078 = vmatpush1.msra.mxu0 0.0
  %1079 = vmatprep.subr.mxu0 0.0
  %1080 = vmatpush1.msra.mxu0 0.0
  %1081 = vmatprep.subr.mxu0 0.0
  %1082 = vmatpush1.msra.mxu0 0.0
  %1083 = vmatprep.subr.mxu0 0.0
  %1084 = vmatpush1.msra.mxu0 0.0
  %1085 = vmatprep.subr.mxu0 0.0
  %1086 = vmatpush1.msra.mxu0 0.0
  %1087 = vmatprep.subr.mxu0 0.0
  %1088 = vmatpush1.msra.mxu0 0.0
  %1089 = vmatprep.subr.mxu0 0.0
  %1090 = vmatpush1.msra.mxu0 0.0
  %1091 = vmatprep.subr.mxu0 0.0
  %1092 = vmatpush1.msra.mxu0 0.0
  %1093 = vmatprep.subr.mxu0 0.0
  %1094 = vmatpush1.msra.mxu0 0.0
  %1095 = vmatprep.subr.mxu0 0.0
  %1096 = vmatpush1.msra.mxu0 0.0
  %1097 = vmatprep.subr.mxu0 0.0
  %1098 = vmatpush1.msra.mxu0 0.0
  %1099 = vmatprep.subr.mxu0 0.0
  %1100 = vmatpush1.msra.mxu0 0.0
  %1101 = vmatprep.subr.mxu0 0.0
  %1102 = vmatpush1.msra.mxu0 0.0
  %1103 = vmatprep.subr.mxu0 0.0
  %1104 = vmatpush1.msra.mxu0 0.0
  %1105 = vmatprep.subr.mxu0 0.0
  %1106 = vmatpush1.msra.mxu0 0.0
  %1107 = vmatprep.mubr.f32.mxu0 0.0
  %1108 = vmatmul.mubr.f32.gmra.mrb[0].mxu0 %v966
  %v1109 = vpop.f32.mrb[0].mxu0
  %v1110 = vadd.f32 0.0, %v1109
  %v1111 = vpop.f32.mrb[0].mxu0
  %v1112 = vadd.f32 0.0, %v1111
  %1113 = vdwg.mxu0
  %v1114 = vadd.f32 %v968, %v1039
  %v1115 = vadd.f32 %v969, %v1041
  %v1116 = vadd.f32 %v970, %v1110
  %v1117 = vadd.f32 %v971, %v1112
  %v1118 = vxor.u32 %v1114, 2147483648
  %v1119 = vxor.u32 %v1115, 2147483648
  %v1120 = vxor.u32 %v1116, 2147483648
  %v1121 = vmul.f32 %v1118, 1.442695
  %v1122 = vpow.pop %v1121
  %v1123 = vmul.f32 %v1119, 1.442695
  %v1124 = vpow.pop %v1123
  %v1125 = vmul.f32 %v1120, 1.442695
  %v1126 = vpow.pop %v1125
  %v1127 = vadd.f32 %v1122, 1.0
  %v1128 = vadd.f32 %v1124, 1.0
  %v1129 = vadd.f32 %v1126, 1.0
  %v1130 = vrcp.pop %v1127
  %v1131 = vmul.f32 1.0, %v1130
  %v1132 = vrcp.pop %v1128
  %v1133 = vmul.f32 1.0, %v1132
  %v1134 = vrcp.pop %v1129
  %v1135 = vmul.f32 1.0, %v1134
  %v1136 = vtanh.pop %v1117
  %v1137 = vmul.f32 %v1133, %v964
  %v1138 = vmul.f32 %v1131, %v1136
  %v1139 = vadd.f32 %v1137, %v1138
  %v1140 = vtanh.pop %v1139
  %v1141 = vmul.f32 %v1135, %v1140
  %1142 = vst [vmem:[#allocation2] sm:$0xff] %v1141
  %1143 = vst [vmem:[#allocation3] sm:$0xff] %v1139
  %1144 = vst [vmem:[%s4] sm:$0xff] %v1141
  %1145 = vst [vmem:[%s5] sm:$0xff] %v1139
  // Predicated region
  $region22: #{seq2seq_forward.6} parent=0 // pred_check
    _
  $region23: #{seq2seq_forward.6} parent=0 // pred_check_branch
    %1147 = sbr.rel (0) target = $region25
  $region24: #{seq2seq_forward.6} parent=0 // pred_region
    _
  $region25: #{seq2seq_forward.6} parent=0 // pred_fallthru
    _
  // Predicated region
  $region26: #{seq2seq_forward.6} parent=0 // pred_check
    _
  $region27: #{seq2seq_forward.6} parent=0 // pred_check_branch
    %1149 = sbr.rel (0) target = $region29
  $region28: #{seq2seq_forward.6} parent=0 // pred_region
    _
  $region29: #{seq2seq_forward.6} parent=0 // pred_fallthru
    _
  // Predicated region
  $region30: #{seq2seq_forward.6} parent=0 // pred_check
    _
  $region31: #{seq2seq_forward.6} parent=0 // pred_check_branch
    %1151 = sbr.rel (0) target = $region33
  $region32: #{seq2seq_forward.6} parent=0 // pred_region
    _
  $region33: #{seq2seq_forward.6} parent=0 // pred_fallthru
    _
  // Predicated region
  $region34: #{seq2seq_forward.6} parent=0 // pred_check
    _
  $region35: #{seq2seq_forward.6} parent=0 // pred_check_branch
    %1153 = sbr.rel (0) target = $region37
  $region36: #{seq2seq_forward.6} parent=0 // pred_region
    _
  $region37: #{seq2seq_forward.6} parent=0 // pred_fallthru
    _

// kernel: seq2seq_forward.8
$region0: #{seq2seq_forward.8}
  #allocation0 [shape = 'u32[]', space=smem, size = 0x4, offset = 0x4, fixed_abs, tag = 'smem constant byte address 0x4 - core index']
  #allocation1 [shape = 'u32[144,128]{1,0:T(1,128)}', space=vmem, size = 0x12000, scoped, tag = 'internal scratch']
  #allocation2 [shape = 'f32[8,128]{1,0:T(8,128)}', space=vmem, size = 0x1000, scoped, tag = 'scratch operand']
  #allocation3 [shape = 'f32[8,128]{1,0:T(8,128)}', space=vmem, size = 0x1000, scoped, tag = 'scratch operand']
  %s0 = inlined_call_operand.vmem [shape: f32[6,8,512], index: 0, kind: input, shape index: {}]
  %s1 = inlined_call_operand.vmem [shape: f32[8,128], index: 1, kind: input, shape index: {}]
  %s2 = inlined_call_operand.vmem [shape: f32[8,128], index: 2, kind: input, shape index: {}]
  %s3 = inlined_call_operand.vmem [shape: f32[128,512], index: 3, kind: input, shape index: {}]
  %s4 = inlined_call_operand.vmem [shape: f32[6,8,128], index: 4, kind: output, shape index: {0}]
  %s5 = inlined_call_operand.hbm [shape: f32[8,128], index: 5, kind: output, shape index: {1}]
  %s6 = inlined_call_operand.hbm [shape: f32[8,128], index: 6, kind: output, shape index: {2}]
  %7 = xla_tuple %s4, %s5, %s6
  %s8 = sld [smem:[#allocation0]]
  $region46: #{seq2seq_forward.8} parent=0
    _
  %s10 = ssub.s32 1, %s8
  %s11 = scalar_select 0, %s10, %s8
  $region1: #{seq2seq_forward.8} parent=0
    #allocation4 [shape = 'u8[4096]{0}', space=vmem, size = 0x1000, scoped, tag = 'output window, operand 1, single buffered']
    #allocation5 [shape = 's32[1]{0}', space=sflag, size = 0x4, scoped, tag = 'scoped memory for seq2seq_forward.8']
    #allocation6 [shape = 'u8[4096]{0}', space=vmem, size = 0x1000, scoped, tag = 'output window, operand 2, single buffered']
    #allocation7 [shape = 's32[1]{0}', space=sflag, size = 0x4, scoped, tag = 'scoped memory for seq2seq_forward.8']
    %12 = vsyncpa [#allocation5], 0
    %13 = vsyncpa [#allocation7], 0
    // Predicated region
    $region2: #{seq2seq_forward.8} parent=1 // pred_check
      _
    $region3: #{seq2seq_forward.8} parent=1 // pred_check_branch
      %15 = sbr.rel (0) target = $region5
    $region4: #{seq2seq_forward.8} parent=1 // pred_region
      _
    $region5: #{seq2seq_forward.8} parent=1 // pred_fallthru
      _
    // Predicated region
    $region6: #{seq2seq_forward.8} parent=1 // pred_check
      _
    $region7: #{seq2seq_forward.8} parent=1 // pred_check_branch
      %17 = sbr.rel (0) target = $region9
    $region8: #{seq2seq_forward.8} parent=1 // pred_region
      _
    $region9: #{seq2seq_forward.8} parent=1 // pred_fallthru
      _
    // Predicated region
    $region10: #{seq2seq_forward.8} parent=1 // pred_check
      _
    $region11: #{seq2seq_forward.8} parent=1 // pred_check_branch
      %19 = sbr.rel (0) target = $region13
    $region12: #{seq2seq_forward.8} parent=1 // pred_region
      _
    $region13: #{seq2seq_forward.8} parent=1 // pred_fallthru
      _
    // Predicated region
    $region14: #{seq2seq_forward.8} parent=1 // pred_check
      _
    $region15: #{seq2seq_forward.8} parent=1 // pred_check_branch
      %21 = sbr.rel (0) target = $region17
    $region16: #{seq2seq_forward.8} parent=1 // pred_region
      _
    $region17: #{seq2seq_forward.8} parent=1 // pred_fallthru
      _
    %p22 = scmp.eq.s32.totalorder 0, 0
    // Predicated region
    $region18: #{seq2seq_forward.8} parent=1 // pred_check
      %p23 = pneg %p22
    $region19: #{seq2seq_forward.8} parent=1 // pred_check_branch
      %25 = sbr.rel (%p23) target = $region21
    $region20: #{seq2seq_forward.8} parent=1 // pred_region
      %v26 = vld [vmem:[%s1] sm:$0xff]
      %27 = vst [vmem:[#allocation2] sm:$0xff] %v26
      %v28 = vld [vmem:[%s2] sm:$0xff]
      %29 = vst [vmem:[#allocation3] sm:$0xff] %v28
    $region21: #{seq2seq_forward.8} parent=1 // pred_fallthru
      _
    %v30 = vld [vmem:[%s3] sm:$0xff]
    %v31 = vld [vmem:[%s3 + $0x8] sm:$0xff]
    %v32 = vld [vmem:[%s3 + $0x10] sm:$0xff]
    %v33 = vld [vmem:[%s3 + $0x18] sm:$0xff]
    %v34 = vld [vmem:[%s3 + $0x20] sm:$0xff]
    %v35 = vld [vmem:[%s3 + $0x28] sm:$0xff]
    %v36 = vld [vmem:[%s3 + $0x30] sm:$0xff]
    %v37 = vld [vmem:[%s3 + $0x38] sm:$0xff]
    %v38 = vld [vmem:[%s3 + $0x40] sm:$0xff]
    %v39 = vld [vmem:[%s3 + $0x48] sm:$0xff]
    %v40 = vld [vmem:[%s3 + $0x50] sm:$0xff]
    %v41 = vld [vmem:[%s3 + $0x58] sm:$0xff]
    %v42 = vld [vmem:[%s3 + $0x60] sm:$0xff]
    %v43 = vld [vmem:[%s3 + $0x68] sm:$0xff]
    %v44 = vld [vmem:[%s3 + $0x70] sm:$0xff]
    %v45 = vld [vmem:[%s3 + $0x78] sm:$0xff]
    %v46 = vld [vmem:[%s3 + $0x80] sm:$0xff]
    %v47 = vld [vmem:[%s3 + $0x88] sm:$0xff]
    %v48 = vld [vmem:[%s3 + $0x90] sm:$0xff]
    %v49 = vld [vmem:[%s3 + $0x98] sm:$0xff]
    %v50 = vld [vmem:[%s3 + $0xa0] sm:$0xff]
    %v51 = vld [vmem:[%s3 + $0xa8] sm:$0xff]
    %v52 = vld [vmem:[%s3 + $0xb0] sm:$0xff]
    %v53 = vld [vmem:[%s3 + $0xb8] sm:$0xff]
    %v54 = vld [vmem:[%s3 + $0xc0] sm:$0xff]
    %v55 = vld [vmem:[%s3 + $0xc8] sm:$0xff]
    %v56 = vld [vmem:[%s3 + $0xd0] sm:$0xff]
    %v57 = vld [vmem:[%s3 + $0xd8] sm:$0xff]
    %v58 = vld [vmem:[%s3 + $0xe0] sm:$0xff]
    %v59 = vld [vmem:[%s3 + $0xe8] sm:$0xff]
    %v60 = vld [vmem:[%s3 + $0xf0] sm:$0xff]
    %v61 = vld [vmem:[%s3 + $0xf8] sm:$0xff]
    %v62 = vld [vmem:[%s3 + $0x100] sm:$0xff]
    %v63 = vld [vmem:[%s3 + $0x108] sm:$0xff]
    %v64 = vld [vmem:[%s3 + $0x110] sm:$0xff]
    %v65 = vld [vmem:[%s3 + $0x118] sm:$0xff]
    %v66 = vld [vmem:[%s3 + $0x120] sm:$0xff]
    %v67 = vld [vmem:[%s3 + $0x128] sm:$0xff]
    %v68 = vld [vmem:[%s3 + $0x130] sm:$0xff]
    %v69 = vld [vmem:[%s3 + $0x138] sm:$0xff]
    %v70 = vld [vmem:[%s3 + $0x140] sm:$0xff]
    %v71 = vld [vmem:[%s3 + $0x148] sm:$0xff]
    %v72 = vld [vmem:[%s3 + $0x150] sm:$0xff]
    %v73 = vld [vmem:[%s3 + $0x158] sm:$0xff]
    %v74 = vld [vmem:[%s3 + $0x160] sm:$0xff]
    %v75 = vld [vmem:[%s3 + $0x168] sm:$0xff]
    %v76 = vld [vmem:[%s3 + $0x170] sm:$0xff]
    %v77 = vld [vmem:[%s3 + $0x178] sm:$0xff]
    %v78 = vld [vmem:[%s3 + $0x180] sm:$0xff]
    %v79 = vld [vmem:[%s3 + $0x188] sm:$0xff]
    %v80 = vld [vmem:[%s3 + $0x190] sm:$0xff]
    %v81 = vld [vmem:[%s3 + $0x198] sm:$0xff]
    %v82 = vld [vmem:[%s3 + $0x1a0] sm:$0xff]
    %v83 = vld [vmem:[%s3 + $0x1a8] sm:$0xff]
    %v84 = vld [vmem:[%s3 + $0x1b0] sm:$0xff]
    %v85 = vld [vmem:[%s3 + $0x1b8] sm:$0xff]
    %v86 = vld [vmem:[%s3 + $0x1c0] sm:$0xff]
    %v87 = vld [vmem:[%s3 + $0x1c8] sm:$0xff]
    %v88 = vld [vmem:[%s3 + $0x1d0] sm:$0xff]
    %v89 = vld [vmem:[%s3 + $0x1d8] sm:$0xff]
    %v90 = vld [vmem:[%s3 + $0x1e0] sm:$0xff]
    %v91 = vld [vmem:[%s3 + $0x1e8] sm:$0xff]
    %v92 = vld [vmem:[%s3 + $0x1f0] sm:$0xff]
    %v93 = vld [vmem:[%s3 + $0x1f8] sm:$0xff]
    %v94 = vld [vmem:[#allocation2] sm:$0xff]
    %v95 = vld [vmem:[#allocation3] sm:$0xff]
    %v96 = vld [vmem:[%s0] sm:$0xff]
    %v97 = vld [vmem:[%s0 + $0x8] sm:$0xff]
    %v98 = vld [vmem:[%s0 + $0x10] sm:$0xff]
    %v99 = vld [vmem:[%s0 + $0x18] sm:$0xff]
    %100 = vmatprep.subr.mxu0 %v31
    %101 = vmatpush1.msra.mxu0 %v30
    %102 = vmatprep.subr.mxu0 %v35
    %103 = vmatpush1.msra.mxu0 %v34
    %104 = vmatprep.subr.mxu0 %v39
    %105 = vmatpush1.msra.mxu0 %v38
    %106 = vmatprep.subr.mxu0 %v43
    %107 = vmatpush1.msra.mxu0 %v42
    %108 = vmatprep.subr.mxu0 %v47
    %109 = vmatpush1.msra.mxu0 %v46
    %110 = vmatprep.subr.mxu0 %v51
    %111 = vmatpush1.msra.mxu0 %v50
    %112 = vmatprep.subr.mxu0 %v55
    %113 = vmatpush1.msra.mxu0 %v54
    %114 = vmatprep.subr.mxu0 %v59
    %115 = vmatpush1.msra.mxu0 %v58
    %116 = vmatprep.subr.mxu0 %v63
    %117 = vmatpush1.msra.mxu0 %v62
    %118 = vmatprep.subr.mxu0 %v67
    %119 = vmatpush1.msra.mxu0 %v66
    %120 = vmatprep.subr.mxu0 %v71
    %121 = vmatpush1.msra.mxu0 %v70
    %122 = vmatprep.subr.mxu0 %v75
    %123 = vmatpush1.msra.mxu0 %v74
    %124 = vmatprep.subr.mxu0 %v79
    %125 = vmatpush1.msra.mxu0 %v78
    %126 = vmatprep.subr.mxu0 %v83
    %127 = vmatpush1.msra.mxu0 %v82
    %128 = vmatprep.subr.mxu0 %v87
    %129 = vmatpush1.msra.mxu0 %v86
    %130 = vmatprep.subr.mxu0 %v91
    %131 = vmatpush1.msra.mxu0 %v90
    %132 = vmatprep.subr.mxu0 0.0
    %133 = vmatpush1.msra.mxu0 0.0
    %134 = vmatprep.subr.mxu0 0.0
    %135 = vmatpush1.msra.mxu0 0.0
    %136 = vmatprep.subr.mxu0 0.0
    %137 = vmatpush1.msra.mxu0 0.0
    %138 = vmatprep.subr.mxu0 0.0
    %139 = vmatpush1.msra.mxu0 0.0
    %140 = vmatprep.subr.mxu0 0.0
    %141 = vmatpush1.msra.mxu0 0.0
    %142 = vmatprep.subr.mxu0 0.0
    %143 = vmatpush1.msra.mxu0 0.0
    %144 = vmatprep.subr.mxu0 0.0
    %145 = vmatpush1.msra.mxu0 0.0
    %146 = vmatprep.subr.mxu0 0.0
    %147 = vmatpush1.msra.mxu0 0.0
    %148 = vmatprep.subr.mxu0 0.0
    %149 = vmatpush1.msra.mxu0 0.0
    %150 = vmatprep.subr.mxu0 0.0
    %151 = vmatpush1.msra.mxu0 0.0
    %152 = vmatprep.subr.mxu0 0.0
    %153 = vmatpush1.msra.mxu0 0.0
    %154 = vmatprep.subr.mxu0 0.0
    %155 = vmatpush1.msra.mxu0 0.0
    %156 = vmatprep.subr.mxu0 0.0
    %157 = vmatpush1.msra.mxu0 0.0
    %158 = vmatprep.subr.mxu0 0.0
    %159 = vmatpush1.msra.mxu0 0.0
    %160 = vmatprep.subr.mxu0 0.0
    %161 = vmatpush1.msra.mxu0 0.0
    %162 = vmatprep.subr.mxu0 0.0
    %163 = vmatpush1.msra.mxu0 0.0
    %164 = vmatprep.mubr.f32.mxu0 0.0
    %165 = vmatmul.mubr.f32.gmra.mrb[0].mxu0 %v94
    %v166 = vpop.f32.mrb[0].mxu0
    %v167 = vadd.f32 0.0, %v166
    %v168 = vpop.f32.mrb[0].mxu0
    %v169 = vadd.f32 0.0, %v168
    %170 = vdwg.mxu0
    %171 = vmatprep.subr.mxu0 %v33
    %172 = vmatpush1.msra.mxu0 %v32
    %173 = vmatprep.subr.mxu0 %v37
    %174 = vmatpush1.msra.mxu0 %v36
    %175 = vmatprep.subr.mxu0 %v41
    %176 = vmatpush1.msra.mxu0 %v40
    %177 = vmatprep.subr.mxu0 %v45
    %178 = vmatpush1.msra.mxu0 %v44
    %179 = vmatprep.subr.mxu0 %v49
    %180 = vmatpush1.msra.mxu0 %v48
    %181 = vmatprep.subr.mxu0 %v53
    %182 = vmatpush1.msra.mxu0 %v52
    %183 = vmatprep.subr.mxu0 %v57
    %184 = vmatpush1.msra.mxu0 %v56
    %185 = vmatprep.subr.mxu0 %v61
    %186 = vmatpush1.msra.mxu0 %v60
    %187 = vmatprep.subr.mxu0 %v65
    %188 = vmatpush1.msra.mxu0 %v64
    %189 = vmatprep.subr.mxu0 %v69
    %190 = vmatpush1.msra.mxu0 %v68
    %191 = vmatprep.subr.mxu0 %v73
    %192 = vmatpush1.msra.mxu0 %v72
    %193 = vmatprep.subr.mxu0 %v77
    %194 = vmatpush1.msra.mxu0 %v76
    %195 = vmatprep.subr.mxu0 %v81
    %196 = vmatpush1.msra.mxu0 %v80
    %197 = vmatprep.subr.mxu0 %v85
    %198 = vmatpush1.msra.mxu0 %v84
    %199 = vmatprep.subr.mxu0 %v89
    %200 = vmatpush1.msra.mxu0 %v88
    %201 = vmatprep.subr.mxu0 %v93
    %202 = vmatpush1.msra.mxu0 %v92
    %203 = vmatprep.subr.mxu0 0.0
    %204 = vmatpush1.msra.mxu0 0.0
    %205 = vmatprep.subr.mxu0 0.0
    %206 = vmatpush1.msra.mxu0 0.0
    %207 = vmatprep.subr.mxu0 0.0
    %208 = vmatpush1.msra.mxu0 0.0
    %209 = vmatprep.subr.mxu0 0.0
    %210 = vmatpush1.msra.mxu0 0.0
    %211 = vmatprep.subr.mxu0 0.0
    %212 = vmatpush1.msra.mxu0 0.0
    %213 = vmatprep.subr.mxu0 0.0
    %214 = vmatpush1.msra.mxu0 0.0
    %215 = vmatprep.subr.mxu0 0.0
    %216 = vmatpush1.msra.mxu0 0.0
    %217 = vmatprep.subr.mxu0 0.0
    %218 = vmatpush1.msra.mxu0 0.0
    %219 = vmatprep.subr.mxu0 0.0
    %220 = vmatpush1.msra.mxu0 0.0
    %221 = vmatprep.subr.mxu0 0.0
    %222 = vmatpush1.msra.mxu0 0.0
    %223 = vmatprep.subr.mxu0 0.0
    %224 = vmatpush1.msra.mxu0 0.0
    %225 = vmatprep.subr.mxu0 0.0
    %226 = vmatpush1.msra.mxu0 0.0
    %227 = vmatprep.subr.mxu0 0.0
    %228 = vmatpush1.msra.mxu0 0.0
    %229 = vmatprep.subr.mxu0 0.0
    %230 = vmatpush1.msra.mxu0 0.0
    %231 = vmatprep.subr.mxu0 0.0
    %232 = vmatpush1.msra.mxu0 0.0
    %233 = vmatprep.subr.mxu0 0.0
    %234 = vmatpush1.msra.mxu0 0.0
    %235 = vmatprep.mubr.f32.mxu0 0.0
    %236 = vmatmul.mubr.f32.gmra.mrb[0].mxu0 %v94
    %v237 = vpop.f32.mrb[0].mxu0
    %v238 = vadd.f32 0.0, %v237
    %v239 = vpop.f32.mrb[0].mxu0
    %v240 = vadd.f32 0.0, %v239
    %241 = vdwg.mxu0
    %v242 = vadd.f32 %v96, %v167
    %v243 = vadd.f32 %v97, %v169
    %v244 = vadd.f32 %v98, %v238
    %v245 = vadd.f32 %v99, %v240
    %v246 = vxor.u32 %v242, 2147483648
    %v247 = vxor.u32 %v243, 2147483648
    %v248 = vxor.u32 %v244, 2147483648
    %v249 = vmul.f32 %v246, 1.442695
    %v250 = vpow.pop %v249
    %v251 = vmul.f32 %v247, 1.442695
    %v252 = vpow.pop %v251
    %v253 = vmul.f32 %v248, 1.442695
    %v254 = vpow.pop %v253
    %v255 = vadd.f32 %v250, 1.0
    %v256 = vadd.f32 %v252, 1.0
    %v257 = vadd.f32 %v254, 1.0
    %v258 = vrcp.pop %v255
    %v259 = vmul.f32 1.0, %v258
    %v260 = vrcp.pop %v256
    %v261 = vmul.f32 1.0, %v260
    %v262 = vrcp.pop %v257
    %v263 = vmul.f32 1.0, %v262
    %v264 = vtanh.pop %v245
    %v265 = vmul.f32 %v261, %v95
    %v266 = vmul.f32 %v259, %v264
    %v267 = vadd.f32 %v265, %v266
    %v268 = vtanh.pop %v267
    %v269 = vmul.f32 %v263, %v268
    %270 = vst [vmem:[%s4] sm:$0xff] %v269
    %s271 = scalar_lea.vmem %s0, 32
    %v272 = vld [vmem:[%s271] sm:$0xff]
    %v273 = vld [vmem:[%s271 + $0x8] sm:$0xff]
    %v274 = vld [vmem:[%s271 + $0x10] sm:$0xff]
    %v275 = vld [vmem:[%s271 + $0x18] sm:$0xff]
    %276 = vmatprep.subr.mxu0 %v31
    %277 = vmatpush1.msra.mxu0 %v30
    %278 = vmatprep.subr.mxu0 %v35
    %279 = vmatpush1.msra.mxu0 %v34
    %280 = vmatprep.subr.mxu0 %v39
    %281 = vmatpush1.msra.mxu0 %v38
    %282 = vmatprep.subr.mxu0 %v43
    %283 = vmatpush1.msra.mxu0 %v42
    %284 = vmatprep.subr.mxu0 %v47
    %285 = vmatpush1.msra.mxu0 %v46
    %286 = vmatprep.subr.mxu0 %v51
    %287 = vmatpush1.msra.mxu0 %v50
    %288 = vmatprep.subr.mxu0 %v55
    %289 = vmatpush1.msra.mxu0 %v54
    %290 = vmatprep.subr.mxu0 %v59
    %291 = vmatpush1.msra.mxu0 %v58
    %292 = vmatprep.subr.mxu0 %v63
    %293 = vmatpush1.msra.mxu0 %v62
    %294 = vmatprep.subr.mxu0 %v67
    %295 = vmatpush1.msra.mxu0 %v66
    %296 = vmatprep.subr.mxu0 %v71
    %297 = vmatpush1.msra.mxu0 %v70
    %298 = vmatprep.subr.mxu0 %v75
    %299 = vmatpush1.msra.mxu0 %v74
    %300 = vmatprep.subr.mxu0 %v79
    %301 = vmatpush1.msra.mxu0 %v78
    %302 = vmatprep.subr.mxu0 %v83
    %303 = vmatpush1.msra.mxu0 %v82
    %304 = vmatprep.subr.mxu0 %v87
    %305 = vmatpush1.msra.mxu0 %v86
    %306 = vmatprep.subr.mxu0 %v91
    %307 = vmatpush1.msra.mxu0 %v90
    %308 = vmatprep.subr.mxu0 0.0
    %309 = vmatpush1.msra.mxu0 0.0
    %310 = vmatprep.subr.mxu0 0.0
    %311 = vmatpush1.msra.mxu0 0.0
    %312 = vmatprep.subr.mxu0 0.0
    %313 = vmatpush1.msra.mxu0 0.0
    %314 = vmatprep.subr.mxu0 0.0
    %315 = vmatpush1.msra.mxu0 0.0
    %316 = vmatprep.subr.mxu0 0.0
    %317 = vmatpush1.msra.mxu0 0.0
    %318 = vmatprep.subr.mxu0 0.0
    %319 = vmatpush1.msra.mxu0 0.0
    %320 = vmatprep.subr.mxu0 0.0
    %321 = vmatpush1.msra.mxu0 0.0
    %322 = vmatprep.subr.mxu0 0.0
    %323 = vmatpush1.msra.mxu0 0.0
    %324 = vmatprep.subr.mxu0 0.0
    %325 = vmatpush1.msra.mxu0 0.0
    %326 = vmatprep.subr.mxu0 0.0
    %327 = vmatpush1.msra.mxu0 0.0
    %328 = vmatprep.subr.mxu0 0.0
    %329 = vmatpush1.msra.mxu0 0.0
    %330 = vmatprep.subr.mxu0 0.0
    %331 = vmatpush1.msra.mxu0 0.0
    %332 = vmatprep.subr.mxu0 0.0
    %333 = vmatpush1.msra.mxu0 0.0
    %334 = vmatprep.subr.mxu0 0.0
    %335 = vmatpush1.msra.mxu0 0.0
    %336 = vmatprep.subr.mxu0 0.0
    %337 = vmatpush1.msra.mxu0 0.0
    %338 = vmatprep.subr.mxu0 0.0
    %339 = vmatpush1.msra.mxu0 0.0
    %340 = vmatprep.mubr.f32.mxu0 0.0
    %341 = vmatmul.mubr.f32.gmra.mrb[0].mxu0 %v269
    %v342 = vpop.f32.mrb[0].mxu0
    %v343 = vadd.f32 0.0, %v342
    %v344 = vpop.f32.mrb[0].mxu0
    %v345 = vadd.f32 0.0, %v344
    %346 = vdwg.mxu0
    %347 = vmatprep.subr.mxu0 %v33
    %348 = vmatpush1.msra.mxu0 %v32
    %349 = vmatprep.subr.mxu0 %v37
    %350 = vmatpush1.msra.mxu0 %v36
    %351 = vmatprep.subr.mxu0 %v41
    %352 = vmatpush1.msra.mxu0 %v40
    %353 = vmatprep.subr.mxu0 %v45
    %354 = vmatpush1.msra.mxu0 %v44
    %355 = vmatprep.subr.mxu0 %v49
    %356 = vmatpush1.msra.mxu0 %v48
    %357 = vmatprep.subr.mxu0 %v53
    %358 = vmatpush1.msra.mxu0 %v52
    %359 = vmatprep.subr.mxu0 %v57
    %360 = vmatpush1.msra.mxu0 %v56
    %361 = vmatprep.subr.mxu0 %v61
    %362 = vmatpush1.msra.mxu0 %v60
    %363 = vmatprep.subr.mxu0 %v65
    %364 = vmatpush1.msra.mxu0 %v64
    %365 = vmatprep.subr.mxu0 %v69
    %366 = vmatpush1.msra.mxu0 %v68
    %367 = vmatprep.subr.mxu0 %v73
    %368 = vmatpush1.msra.mxu0 %v72
    %369 = vmatprep.subr.mxu0 %v77
    %370 = vmatpush1.msra.mxu0 %v76
    %371 = vmatprep.subr.mxu0 %v81
    %372 = vmatpush1.msra.mxu0 %v80
    %373 = vmatprep.subr.mxu0 %v85
    %374 = vmatpush1.msra.mxu0 %v84
    %375 = vmatprep.subr.mxu0 %v89
    %376 = vmatpush1.msra.mxu0 %v88
    %377 = vmatprep.subr.mxu0 %v93
    %378 = vmatpush1.msra.mxu0 %v92
    %379 = vmatprep.subr.mxu0 0.0
    %380 = vmatpush1.msra.mxu0 0.0
    %381 = vmatprep.subr.mxu0 0.0
    %382 = vmatpush1.msra.mxu0 0.0
    %383 = vmatprep.subr.mxu0 0.0
    %384 = vmatpush1.msra.mxu0 0.0
    %385 = vmatprep.subr.mxu0 0.0
    %386 = vmatpush1.msra.mxu0 0.0
    %387 = vmatprep.subr.mxu0 0.0
    %388 = vmatpush1.msra.mxu0 0.0
    %389 = vmatprep.subr.mxu0 0.0
    %390 = vmatpush1.msra.mxu0 0.0
    %391 = vmatprep.subr.mxu0 0.0
    %392 = vmatpush1.msra.mxu0 0.0
    %393 = vmatprep.subr.mxu0 0.0
    %394 = vmatpush1.msra.mxu0 0.0
    %395 = vmatprep.subr.mxu0 0.0
    %396 = vmatpush1.msra.mxu0 0.0
    %397 = vmatprep.subr.mxu0 0.0
    %398 = vmatpush1.msra.mxu0 0.0
    %399 = vmatprep.subr.mxu0 0.0
    %400 = vmatpush1.msra.mxu0 0.0
    %401 = vmatprep.subr.mxu0 0.0
    %402 = vmatpush1.msra.mxu0 0.0
    %403 = vmatprep.subr.mxu0 0.0
    %404 = vmatpush1.msra.mxu0 0.0
    %405 = vmatprep.subr.mxu0 0.0
    %406 = vmatpush1.msra.mxu0 0.0
    %407 = vmatprep.subr.mxu0 0.0
    %408 = vmatpush1.msra.mxu0 0.0
    %409 = vmatprep.subr.mxu0 0.0
    %410 = vmatpush1.msra.mxu0 0.0
    %411 = vmatprep.mubr.f32.mxu0 0.0
    %412 = vmatmul.mubr.f32.gmra.mrb[0].mxu0 %v269
    %v413 = vpop.f32.mrb[0].mxu0
    %v414 = vadd.f32 0.0, %v413
    %v415 = vpop.f32.mrb[0].mxu0
    %v416 = vadd.f32 0.0, %v415
    %417 = vdwg.mxu0
    %v418 = vadd.f32 %v272, %v343
    %v419 = vadd.f32 %v273, %v345
    %v420 = vadd.f32 %v274, %v414
    %v421 = vadd.f32 %v275, %v416
    %v422 = vxor.u32 %v418, 2147483648
    %v423 = vxor.u32 %v419, 2147483648
    %v424 = vxor.u32 %v420, 2147483648
    %v425 = vmul.f32 %v422, 1.442695
    %v426 = vpow.pop %v425
    %v427 = vmul.f32 %v423, 1.442695
    %v428 = vpow.pop %v427
    %v429 = vmul.f32 %v424, 1.442695
    %v430 = vpow.pop %v429
    %v431 = vadd.f32 %v426, 1.0
    %v432 = vadd.f32 %v428, 1.0
    %v433 = vadd.f32 %v430, 1.0
    %v434 = vrcp.pop %v431
    %v435 = vmul.f32 1.0, %v434
    %v436 = vrcp.pop %v432
    %v437 = vmul.f32 1.0, %v436
    %v438 = vrcp.pop %v433
    %v439 = vmul.f32 1.0, %v438
    %v440 = vtanh.pop %v421
    %v441 = vmul.f32 %v437, %v267
    %v442 = vmul.f32 %v435, %v440
    %v443 = vadd.f32 %v441, %v442
    %v444 = vtanh.pop %v443
    %v445 = vmul.f32 %v439, %v444
    %s446 = scalar_lea.vmem %s4, 8
    %447 = vst [vmem:[%s446] sm:$0xff] %v445
    %s448 = scalar_lea.vmem %s0, 64
    %v449 = vld [vmem:[%s448] sm:$0xff]
    %v450 = vld [vmem:[%s448 + $0x8] sm:$0xff]
    %v451 = vld [vmem:[%s448 + $0x10] sm:$0xff]
    %v452 = vld [vmem:[%s448 + $0x18] sm:$0xff]
    %453 = vmatprep.subr.mxu0 %v31
    %454 = vmatpush1.msra.mxu0 %v30
    %455 = vmatprep.subr.mxu0 %v35
    %456 = vmatpush1.msra.mxu0 %v34
    %457 = vmatprep.subr.mxu0 %v39
    %458 = vmatpush1.msra.mxu0 %v38
    %459 = vmatprep.subr.mxu0 %v43
    %460 = vmatpush1.msra.mxu0 %v42
    %461 = vmatprep.subr.mxu0 %v47
    %462 = vmatpush1.msra.mxu0 %v46
    %463 = vmatprep.subr.mxu0 %v51
    %464 = vmatpush1.msra.mxu0 %v50
    %465 = vmatprep.subr.mxu0 %v55
    %466 = vmatpush1.msra.mxu0 %v54
    %467 = vmatprep.subr.mxu0 %v59
    %468 = vmatpush1.msra.mxu0 %v58
    %469 = vmatprep.subr.mxu0 %v63
    %470 = vmatpush1.msra.mxu0 %v62
    %471 = vmatprep.subr.mxu0 %v67
    %472 = vmatpush1.msra.mxu0 %v66
    %473 = vmatprep.subr.mxu0 %v71
    %474 = vmatpush1.msra.mxu0 %v70
    %475 = vmatprep.subr.mxu0 %v75
    %476 = vmatpush1.msra.mxu0 %v74
    %477 = vmatprep.subr.mxu0 %v79
    %478 = vmatpush1.msra.mxu0 %v78
    %479 = vmatprep.subr.mxu0 %v83
    %480 = vmatpush1.msra.mxu0 %v82
    %481 = vmatprep.subr.mxu0 %v87
    %482 = vmatpush1.msra.mxu0 %v86
    %483 = vmatprep.subr.mxu0 %v91
    %484 = vmatpush1.msra.mxu0 %v90
    %485 = vmatprep.subr.mxu0 0.0
    %486 = vmatpush1.msra.mxu0 0.0
    %487 = vmatprep.subr.mxu0 0.0
    %488 = vmatpush1.msra.mxu0 0.0
    %489 = vmatprep.subr.mxu0 0.0
    %490 = vmatpush1.msra.mxu0 0.0
    %491 = vmatprep.subr.mxu0 0.0
    %492 = vmatpush1.msra.mxu0 0.0
    %493 = vmatprep.subr.mxu0 0.0
    %494 = vmatpush1.msra.mxu0 0.0
    %495 = vmatprep.subr.mxu0 0.0
    %496 = vmatpush1.msra.mxu0 0.0
    %497 = vmatprep.subr.mxu0 0.0
    %498 = vmatpush1.msra.mxu0 0.0
    %499 = vmatprep.subr.mxu0 0.0
    %500 = vmatpush1.msra.mxu0 0.0
    %501 = vmatprep.subr.mxu0 0.0
    %502 = vmatpush1.msra.mxu0 0.0
    %503 = vmatprep.subr.mxu0 0.0
    %504 = vmatpush1.msra.mxu0 0.0
    %505 = vmatprep.subr.mxu0 0.0
    %506 = vmatpush1.msra.mxu0 0.0
    %507 = vmatprep.subr.mxu0 0.0
    %508 = vmatpush1.msra.mxu0 0.0
    %509 = vmatprep.subr.mxu0 0.0
    %510 = vmatpush1.msra.mxu0 0.0
    %511 = vmatprep.subr.mxu0 0.0
    %512 = vmatpush1.msra.mxu0 0.0
    %513 = vmatprep.subr.mxu0 0.0
    %514 = vmatpush1.msra.mxu0 0.0
    %515 = vmatprep.subr.mxu0 0.0
    %516 = vmatpush1.msra.mxu0 0.0
    %517 = vmatprep.mubr.f32.mxu0 0.0
    %518 = vmatmul.mubr.f32.gmra.mrb[0].mxu0 %v445
    %v519 = vpop.f32.mrb[0].mxu0
    %v520 = vadd.f32 0.0, %v519
    %v521 = vpop.f32.mrb[0].mxu0
    %v522 = vadd.f32 0.0, %v521
    %523 = vdwg.mxu0
    %524 = vmatprep.subr.mxu0 %v33
    %525 = vmatpush1.msra.mxu0 %v32
    %526 = vmatprep.subr.mxu0 %v37
    %527 = vmatpush1.msra.mxu0 %v36
    %528 = vmatprep.subr.mxu0 %v41
    %529 = vmatpush1.msra.mxu0 %v40
    %530 = vmatprep.subr.mxu0 %v45
    %531 = vmatpush1.msra.mxu0 %v44
    %532 = vmatprep.subr.mxu0 %v49
    %533 = vmatpush1.msra.mxu0 %v48
    %534 = vmatprep.subr.mxu0 %v53
    %535 = vmatpush1.msra.mxu0 %v52
    %536 = vmatprep.subr.mxu0 %v57
    %537 = vmatpush1.msra.mxu0 %v56
    %538 = vmatprep.subr.mxu0 %v61
    %539 = vmatpush1.msra.mxu0 %v60
    %540 = vmatprep.subr.mxu0 %v65
    %541 = vmatpush1.msra.mxu0 %v64
    %542 = vmatprep.subr.mxu0 %v69
    %543 = vmatpush1.msra.mxu0 %v68
    %544 = vmatprep.subr.mxu0 %v73
    %545 = vmatpush1.msra.mxu0 %v72
    %546 = vmatprep.subr.mxu0 %v77
    %547 = vmatpush1.msra.mxu0 %v76
    %548 = vmatprep.subr.mxu0 %v81
    %549 = vmatpush1.msra.mxu0 %v80
    %550 = vmatprep.subr.mxu0 %v85
    %551 = vmatpush1.msra.mxu0 %v84
    %552 = vmatprep.subr.mxu0 %v89
    %553 = vmatpush1.msra.mxu0 %v88
    %554 = vmatprep.subr.mxu0 %v93
    %555 = vmatpush1.msra.mxu0 %v92
    %556 = vmatprep.subr.mxu0 0.0
    %557 = vmatpush1.msra.mxu0 0.0
    %558 = vmatprep.subr.mxu0 0.0
    %559 = vmatpush1.msra.mxu0 0.0
    %560 = vmatprep.subr.mxu0 0.0
    %561 = vmatpush1.msra.mxu0 0.0
    %562 = vmatprep.subr.mxu0 0.0
    %563 = vmatpush1.msra.mxu0 0.0
    %564 = vmatprep.subr.mxu0 0.0
    %565 = vmatpush1.msra.mxu0 0.0
    %566 = vmatprep.subr.mxu0 0.0
    %567 = vmatpush1.msra.mxu0 0.0
    %568 = vmatprep.subr.mxu0 0.0
    %569 = vmatpush1.msra.mxu0 0.0
    %570 = vmatprep.subr.mxu0 0.0
    %571 = vmatpush1.msra.mxu0 0.0
    %572 = vmatprep.subr.mxu0 0.0
    %573 = vmatpush1.msra.mxu0 0.0
    %574 = vmatprep.subr.mxu0 0.0
    %575 = vmatpush1.msra.mxu0 0.0
    %576 = vmatprep.subr.mxu0 0.0
    %577 = vmatpush1.msra.mxu0 0.0
    %578 = vmatprep.subr.mxu0 0.0
    %579 = vmatpush1.msra.mxu0 0.0
    %580 = vmatprep.subr.mxu0 0.0
    %581 = vmatpush1.msra.mxu0 0.0
    %582 = vmatprep.subr.mxu0 0.0
    %583 = vmatpush1.msra.mxu0 0.0
    %584 = vmatprep.subr.mxu0 0.0
    %585 = vmatpush1.msra.mxu0 0.0
    %586 = vmatprep.subr.mxu0 0.0
    %587 = vmatpush1.msra.mxu0 0.0
    %588 = vmatprep.mubr.f32.mxu0 0.0
    %589 = vmatmul.mubr.f32.gmra.mrb[0].mxu0 %v445
    %v590 = vpop.f32.mrb[0].mxu0
    %v591 = vadd.f32 0.0, %v590
    %v592 = vpop.f32.mrb[0].mxu0
    %v593 = vadd.f32 0.0, %v592
    %594 = vdwg.mxu0
    %v595 = vadd.f32 %v449, %v520
    %v596 = vadd.f32 %v450, %v522
    %v597 = vadd.f32 %v451, %v591
    %v598 = vadd.f32 %v452, %v593
    %v599 = vxor.u32 %v595, 2147483648
    %v600 = vxor.u32 %v596, 2147483648
    %v601 = vxor.u32 %v597, 2147483648
    %v602 = vmul.f32 %v599, 1.442695
    %v603 = vpow.pop %v602
    %v604 = vmul.f32 %v600, 1.442695
    %v605 = vpow.pop %v604
    %v606 = vmul.f32 %v601, 1.442695
    %v607 = vpow.pop %v606
    %v608 = vadd.f32 %v603, 1.0
    %v609 = vadd.f32 %v605, 1.0
    %v610 = vadd.f32 %v607, 1.0
    %v611 = vrcp.pop %v608
    %v612 = vmul.f32 1.0, %v611
    %v613 = vrcp.pop %v609
    %v614 = vmul.f32 1.0, %v613
    %v615 = vrcp.pop %v610
    %v616 = vmul.f32 1.0, %v615
    %v617 = vtanh.pop %v598
    %v618 = vmul.f32 %v614, %v443
    %v619 = vmul.f32 %v612, %v617
    %v620 = vadd.f32 %v618, %v619
    %v621 = vtanh.pop %v620
    %v622 = vmul.f32 %v616, %v621
    %s623 = scalar_lea.vmem %s4, 16
    %624 = vst [vmem:[%s623] sm:$0xff] %v622
    %s625 = scalar_lea.vmem %s0, 96
    %v626 = vld [vmem:[%s625] sm:$0xff]
    %v627 = vld [vmem:[%s625 + $0x8] sm:$0xff]
    %v628 = vld [vmem:[%s625 + $0x10] sm:$0xff]
    %v629 = vld [vmem:[%s625 + $0x18] sm:$0xff]
    %630 = vmatprep.subr.mxu0 %v31
    %631 = vmatpush1.msra.mxu0 %v30
    %632 = vmatprep.subr.mxu0 %v35
    %633 = vmatpush1.msra.mxu0 %v34
    %634 = vmatprep.subr.mxu0 %v39
    %635 = vmatpush1.msra.mxu0 %v38
    %636 = vmatprep.subr.mxu0 %v43
    %637 = vmatpush1.msra.mxu0 %v42
    %638 = vmatprep.subr.mxu0 %v47
    %639 = vmatpush1.msra.mxu0 %v46
    %640 = vmatprep.subr.mxu0 %v51
    %641 = vmatpush1.msra.mxu0 %v50
    %642 = vmatprep.subr.mxu0 %v55
    %643 = vmatpush1.msra.mxu0 %v54
    %644 = vmatprep.subr.mxu0 %v59
    %645 = vmatpush1.msra.mxu0 %v58
    %646 = vmatprep.subr.mxu0 %v63
    %647 = vmatpush1.msra.mxu0 %v62
    %648 = vmatprep.subr.mxu0 %v67
    %649 = vmatpush1.msra.mxu0 %v66
    %650 = vmatprep.subr.mxu0 %v71
    %651 = vmatpush1.msra.mxu0 %v70
    %652 = vmatprep.subr.mxu0 %v75
    %653 = vmatpush1.msra.mxu0 %v74
    %654 = vmatprep.subr.mxu0 %v79
    %655 = vmatpush1.msra.mxu0 %v78
    %656 = vmatprep.subr.mxu0 %v83
    %657 = vmatpush1.msra.mxu0 %v82
    %658 = vmatprep.subr.mxu0 %v87
    %659 = vmatpush1.msra.mxu0 %v86
    %660 = vmatprep.subr.mxu0 %v91
    %661 = vmatpush1.msra.mxu0 %v90
    %662 = vmatprep.subr.mxu0 0.0
    %663 = vmatpush1.msra.mxu0 0.0
    %664 = vmatprep.subr.mxu0 0.0
    %665 = vmatpush1.msra.mxu0 0.0
    %666 = vmatprep.subr.mxu0 0.0
    %667 = vmatpush1.msra.mxu0 0.0
    %668 = vmatprep.subr.mxu0 0.0
    %669 = vmatpush1.msra.mxu0 0.0
    %670 = vmatprep.subr.mxu0 0.0
    %671 = vmatpush1.msra.mxu0 0.0
    %672 = vmatprep.subr.mxu0 0.0
    %673 = vmatpush1.msra.mxu0 0.0
    %674 = vmatprep.subr.mxu0 0.0
    %675 = vmatpush1.msra.mxu0 0.0
    %676 = vmatprep.subr.mxu0 0.0
    %677 = vmatpush1.msra.mxu0 0.0
    %678 = vmatprep.subr.mxu0 0.0
    %679 = vmatpush1.msra.mxu0 0.0
    %680 = vmatprep.subr.mxu0 0.0
    %681 = vmatpush1.msra.mxu0 0.0
    %682 = vmatprep.subr.mxu0 0.0
    %683 = vmatpush1.msra.mxu0 0.0
    %684 = vmatprep.subr.mxu0 0.0
    %685 = vmatpush1.msra.mxu0 0.0
    %686 = vmatprep.subr.mxu0 0.0
    %687 = vmatpush1.msra.mxu0 0.0
    %688 = vmatprep.subr.mxu0 0.0
    %689 = vmatpush1.msra.mxu0 0.0
    %690 = vmatprep.subr.mxu0 0.0
    %691 = vmatpush1.msra.mxu0 0.0
    %692 = vmatprep.subr.mxu0 0.0
    %693 = vmatpush1.msra.mxu0 0.0
    %694 = vmatprep.mubr.f32.mxu0 0.0
    %695 = vmatmul.mubr.f32.gmra.mrb[0].mxu0 %v622
    %v696 = vpop.f32.mrb[0].mxu0
    %v697 = vadd.f32 0.0, %v696
    %v698 = vpop.f32.mrb[0].mxu0
    %v699 = vadd.f32 0.0, %v698
    %700 = vdwg.mxu0
    %701 = vmatprep.subr.mxu0 %v33
    %702 = vmatpush1.msra.mxu0 %v32
    %703 = vmatprep.subr.mxu0 %v37
    %704 = vmatpush1.msra.mxu0 %v36
    %705 = vmatprep.subr.mxu0 %v41
    %706 = vmatpush1.msra.mxu0 %v40
    %707 = vmatprep.subr.mxu0 %v45
    %708 = vmatpush1.msra.mxu0 %v44
    %709 = vmatprep.subr.mxu0 %v49
    %710 = vmatpush1.msra.mxu0 %v48
    %711 = vmatprep.subr.mxu0 %v53
    %712 = vmatpush1.msra.mxu0 %v52
    %713 = vmatprep.subr.mxu0 %v57
    %714 = vmatpush1.msra.mxu0 %v56
    %715 = vmatprep.subr.mxu0 %v61
    %716 = vmatpush1.msra.mxu0 %v60
    %717 = vmatprep.subr.mxu0 %v65
    %718 = vmatpush1.msra.mxu0 %v64
    %719 = vmatprep.subr.mxu0 %v69
    %720 = vmatpush1.msra.mxu0 %v68
    %721 = vmatprep.subr.mxu0 %v73
    %722 = vmatpush1.msra.mxu0 %v72
    %723 = vmatprep.subr.mxu0 %v77
    %724 = vmatpush1.msra.mxu0 %v76
    %725 = vmatprep.subr.mxu0 %v81
    %726 = vmatpush1.msra.mxu0 %v80
    %727 = vmatprep.subr.mxu0 %v85
    %728 = vmatpush1.msra.mxu0 %v84
    %729 = vmatprep.subr.mxu0 %v89
    %730 = vmatpush1.msra.mxu0 %v88
    %731 = vmatprep.subr.mxu0 %v93
    %732 = vmatpush1.msra.mxu0 %v92
    %733 = vmatprep.subr.mxu0 0.0
    %734 = vmatpush1.msra.mxu0 0.0
    %735 = vmatprep.subr.mxu0 0.0
    %736 = vmatpush1.msra.mxu0 0.0
    %737 = vmatprep.subr.mxu0 0.0
    %738 = vmatpush1.msra.mxu0 0.0
    %739 = vmatprep.subr.mxu0 0.0
    %740 = vmatpush1.msra.mxu0 0.0
    %741 = vmatprep.subr.mxu0 0.0
    %742 = vmatpush1.msra.mxu0 0.0
    %743 = vmatprep.subr.mxu0 0.0
    %744 = vmatpush1.msra.mxu0 0.0
    %745 = vmatprep.subr.mxu0 0.0
    %746 = vmatpush1.msra.mxu0 0.0
    %747 = vmatprep.subr.mxu0 0.0
    %748 = vmatpush1.msra.mxu0 0.0
    %749 = vmatprep.subr.mxu0 0.0
    %750 = vmatpush1.msra.mxu0 0.0
    %751 = vmatprep.subr.mxu0 0.0
    %752 = vmatpush1.msra.mxu0 0.0
    %753 = vmatprep.subr.mxu0 0.0
    %754 = vmatpush1.msra.mxu0 0.0
    %755 = vmatprep.subr.mxu0 0.0
    %756 = vmatpush1.msra.mxu0 0.0
    %757 = vmatprep.subr.mxu0 0.0
    %758 = vmatpush1.msra.mxu0 0.0
    %759 = vmatprep.subr.mxu0 0.0
    %760 = vmatpush1.msra.mxu0 0.0
    %761 = vmatprep.subr.mxu0 0.0
    %762 = vmatpush1.msra.mxu0 0.0
    %763 = vmatprep.subr.mxu0 0.0
    %764 = vmatpush1.msra.mxu0 0.0
    %765 = vmatprep.mubr.f32.mxu0 0.0
    %766 = vmatmul.mubr.f32.gmra.mrb[0].mxu0 %v622
    %v767 = vpop.f32.mrb[0].mxu0
    %v768 = vadd.f32 0.0, %v767
    %v769 = vpop.f32.mrb[0].mxu0
    %v770 = vadd.f32 0.0, %v769
    %771 = vdwg.mxu0
    %v772 = vadd.f32 %v626, %v697
    %v773 = vadd.f32 %v627, %v699
    %v774 = vadd.f32 %v628, %v768
    %v775 = vadd.f32 %v629, %v770
    %v776 = vxor.u32 %v772, 2147483648
    %v777 = vxor.u32 %v773, 2147483648
    %v778 = vxor.u32 %v774, 2147483648
    %v779 = vmul.f32 %v776, 1.442695
    %v780 = vpow.pop %v779
    %v781 = vmul.f32 %v777, 1.442695
    %v782 = vpow.pop %v781
    %v783 = vmul.f32 %v778, 1.442695
    %v784 = vpow.pop %v783
    %v785 = vadd.f32 %v780, 1.0
    %v786 = vadd.f32 %v782, 1.0
    %v787 = vadd.f32 %v784, 1.0
    %v788 = vrcp.pop %v785
    %v789 = vmul.f32 1.0, %v788
    %v790 = vrcp.pop %v786
    %v791 = vmul.f32 1.0, %v790
    %v792 = vrcp.pop %v787
    %v793 = vmul.f32 1.0, %v792
    %v794 = vtanh.pop %v775
    %v795 = vmul.f32 %v791, %v620
    %v796 = vmul.f32 %v789, %v794
    %v797 = vadd.f32 %v795, %v796
    %v798 = vtanh.pop %v797
    %v799 = vmul.f32 %v793, %v798
    %s800 = scalar_lea.vmem %s4, 24
    %801 = vst [vmem:[%s800] sm:$0xff] %v799
    %s802 = scalar_lea.vmem %s0, 128
    %v803 = vld [vmem:[%s802] sm:$0xff]
    %v804 = vld [vmem:[%s802 + $0x8] sm:$0xff]
    %v805 = vld [vmem:[%s802 + $0x10] sm:$0xff]
    %v806 = vld [vmem:[%s802 + $0x18] sm:$0xff]
    %807 = vmatprep.subr.mxu0 %v31
    %808 = vmatpush1.msra.mxu0 %v30
    %809 = vmatprep.subr.mxu0 %v35
    %810 = vmatpush1.msra.mxu0 %v34
    %811 = vmatprep.subr.mxu0 %v39
    %812 = vmatpush1.msra.mxu0 %v38
    %813 = vmatprep.subr.mxu0 %v43
    %814 = vmatpush1.msra.mxu0 %v42
    %815 = vmatprep.subr.mxu0 %v47
    %816 = vmatpush1.msra.mxu0 %v46
    %817 = vmatprep.subr.mxu0 %v51
    %818 = vmatpush1.msra.mxu0 %v50
    %819 = vmatprep.subr.mxu0 %v55
    %820 = vmatpush1.msra.mxu0 %v54
    %821 = vmatprep.subr.mxu0 %v59
    %822 = vmatpush1.msra.mxu0 %v58
    %823 = vmatprep.subr.mxu0 %v63
    %824 = vmatpush1.msra.mxu0 %v62
    %825 = vmatprep.subr.mxu0 %v67
    %826 = vmatpush1.msra.mxu0 %v66
    %827 = vmatprep.subr.mxu0 %v71
    %828 = vmatpush1.msra.mxu0 %v70
    %829 = vmatprep.subr.mxu0 %v75
    %830 = vmatpush1.msra.mxu0 %v74
    %831 = vmatprep.subr.mxu0 %v79
    %832 = vmatpush1.msra.mxu0 %v78
    %833 = vmatprep.subr.mxu0 %v83
    %834 = vmatpush1.msra.mxu0 %v82
    %835 = vmatprep.subr.mxu0 %v87
    %836 = vmatpush1.msra.mxu0 %v86
    %837 = vmatprep.subr.mxu0 %v91
    %838 = vmatpush1.msra.mxu0 %v90
    %839 = vmatprep.subr.mxu0 0.0
    %840 = vmatpush1.msra.mxu0 0.0
    %841 = vmatprep.subr.mxu0 0.0
    %842 = vmatpush1.msra.mxu0 0.0
    %843 = vmatprep.subr.mxu0 0.0
    %844 = vmatpush1.msra.mxu0 0.0
    %845 = vmatprep.subr.mxu0 0.0
    %846 = vmatpush1.msra.mxu0 0.0
    %847 = vmatprep.subr.mxu0 0.0
    %848 = vmatpush1.msra.mxu0 0.0
    %849 = vmatprep.subr.mxu0 0.0
    %850 = vmatpush1.msra.mxu0 0.0
    %851 = vmatprep.subr.mxu0 0.0
    %852 = vmatpush1.msra.mxu0 0.0
    %853 = vmatprep.subr.mxu0 0.0
    %854 = vmatpush1.msra.mxu0 0.0
    %855 = vmatprep.subr.mxu0 0.0
    %856 = vmatpush1.msra.mxu0 0.0
    %857 = vmatprep.subr.mxu0 0.0
    %858 = vmatpush1.msra.mxu0 0.0
    %859 = vmatprep.subr.mxu0 0.0
    %860 = vmatpush1.msra.mxu0 0.0
    %861 = vmatprep.subr.mxu0 0.0
    %862 = vmatpush1.msra.mxu0 0.0
    %863 = vmatprep.subr.mxu0 0.0
    %864 = vmatpush1.msra.mxu0 0.0
    %865 = vmatprep.subr.mxu0 0.0
    %866 = vmatpush1.msra.mxu0 0.0
    %867 = vmatprep.subr.mxu0 0.0
    %868 = vmatpush1.msra.mxu0 0.0
    %869 = vmatprep.subr.mxu0 0.0
    %870 = vmatpush1.msra.mxu0 0.0
    %871 = vmatprep.mubr.f32.mxu0 0.0
    %872 = vmatmul.mubr.f32.gmra.mrb[0].mxu0 %v799
    %v873 = vpop.f32.mrb[0].mxu0
    %v874 = vadd.f32 0.0, %v873
    %v875 = vpop.f32.mrb[0].mxu0
    %v876 = vadd.f32 0.0, %v875
    %877 = vdwg.mxu0
    %878 = vmatprep.subr.mxu0 %v33
    %879 = vmatpush1.msra.mxu0 %v32
    %880 = vmatprep.subr.mxu0 %v37
    %881 = vmatpush1.msra.mxu0 %v36
    %882 = vmatprep.subr.mxu0 %v41
    %883 = vmatpush1.msra.mxu0 %v40
    %884 = vmatprep.subr.mxu0 %v45
    %885 = vmatpush1.msra.mxu0 %v44
    %886 = vmatprep.subr.mxu0 %v49
    %887 = vmatpush1.msra.mxu0 %v48
    %888 = vmatprep.subr.mxu0 %v53
    %889 = vmatpush1.msra.mxu0 %v52
    %890 = vmatprep.subr.mxu0 %v57
    %891 = vmatpush1.msra.mxu0 %v56
    %892 = vmatprep.subr.mxu0 %v61
    %893 = vmatpush1.msra.mxu0 %v60
    %894 = vmatprep.subr.mxu0 %v65
    %895 = vmatpush1.msra.mxu0 %v64
    %896 = vmatprep.subr.mxu0 %v69
    %897 = vmatpush1.msra.mxu0 %v68
    %898 = vmatprep.subr.mxu0 %v73
    %899 = vmatpush1.msra.mxu0 %v72
    %900 = vmatprep.subr.mxu0 %v77
    %901 = vmatpush1.msra.mxu0 %v76
    %902 = vmatprep.subr.mxu0 %v81
    %903 = vmatpush1.msra.mxu0 %v80
    %904 = vmatprep.subr.mxu0 %v85
    %905 = vmatpush1.msra.mxu0 %v84
    %906 = vmatprep.subr.mxu0 %v89
    %907 = vmatpush1.msra.mxu0 %v88
    %908 = vmatprep.subr.mxu0 %v93
    %909 = vmatpush1.msra.mxu0 %v92
    %910 = vmatprep.subr.mxu0 0.0
    %911 = vmatpush1.msra.mxu0 0.0
    %912 = vmatprep.subr.mxu0 0.0
    %913 = vmatpush1.msra.mxu0 0.0
    %914 = vmatprep.subr.mxu0 0.0
    %915 = vmatpush1.msra.mxu0 0.0
    %916 = vmatprep.subr.mxu0 0.0
    %917 = vmatpush1.msra.mxu0 0.0
    %918 = vmatprep.subr.mxu0 0.0
    %919 = vmatpush1.msra.mxu0 0.0
    %920 = vmatprep.subr.mxu0 0.0
    %921 = vmatpush1.msra.mxu0 0.0
    %922 = vmatprep.subr.mxu0 0.0
    %923 = vmatpush1.msra.mxu0 0.0
    %924 = vmatprep.subr.mxu0 0.0
    %925 = vmatpush1.msra.mxu0 0.0
    %926 = vmatprep.subr.mxu0 0.0
    %927 = vmatpush1.msra.mxu0 0.0
    %928 = vmatprep.subr.mxu0 0.0
    %929 = vmatpush1.msra.mxu0 0.0
    %930 = vmatprep.subr.mxu0 0.0
    %931 = vmatpush1.msra.mxu0 0.0
    %932 = vmatprep.subr.mxu0 0.0
    %933 = vmatpush1.msra.mxu0 0.0
    %934 = vmatprep.subr.mxu0 0.0
    %935 = vmatpush1.msra.mxu0 0.0
    %936 = vmatprep.subr.mxu0 0.0
    %937 = vmatpush1.msra.mxu0 0.0
    %938 = vmatprep.subr.mxu0 0.0
    %939 = vmatpush1.msra.mxu0 0.0
    %940 = vmatprep.subr.mxu0 0.0
    %941 = vmatpush1.msra.mxu0 0.0
    %942 = vmatprep.mubr.f32.mxu0 0.0
    %943 = vmatmul.mubr.f32.gmra.mrb[0].mxu0 %v799
    %v944 = vpop.f32.mrb[0].mxu0
    %v945 = vadd.f32 0.0, %v944
    %v946 = vpop.f32.mrb[0].mxu0
    %v947 = vadd.f32 0.0, %v946
    %948 = vdwg.mxu0
    %v949 = vadd.f32 %v803, %v874
    %v950 = vadd.f32 %v804, %v876
    %v951 = vadd.f32 %v805, %v945
    %v952 = vadd.f32 %v806, %v947
    %v953 = vxor.u32 %v949, 2147483648
    %v954 = vxor.u32 %v950, 2147483648
    %v955 = vxor.u32 %v951, 2147483648
    %v956 = vmul.f32 %v953, 1.442695
    %v957 = vpow.pop %v956
    %v958 = vmul.f32 %v954, 1.442695
    %v959 = vpow.pop %v958
    %v960 = vmul.f32 %v955, 1.442695
    %v961 = vpow.pop %v960
    %v962 = vadd.f32 %v957, 1.0
    %v963 = vadd.f32 %v959, 1.0
    %v964 = vadd.f32 %v961, 1.0
    %v965 = vrcp.pop %v962
    %v966 = vmul.f32 1.0, %v965
    %v967 = vrcp.pop %v963
    %v968 = vmul.f32 1.0, %v967
    %v969 = vrcp.pop %v964
    %v970 = vmul.f32 1.0, %v969
    %v971 = vtanh.pop %v952
    %v972 = vmul.f32 %v968, %v797
    %v973 = vmul.f32 %v966, %v971
    %v974 = vadd.f32 %v972, %v973
    %v975 = vtanh.pop %v974
    %v976 = vmul.f32 %v970, %v975
    %s977 = scalar_lea.vmem %s4, 32
    %978 = vst [vmem:[%s977] sm:$0xff] %v976
    %s979 = scalar_lea.vmem %s0, 160
    %v980 = vld [vmem:[%s979] sm:$0xff]
    %v981 = vld [vmem:[%s979 + $0x8] sm:$0xff]
    %v982 = vld [vmem:[%s979 + $0x10] sm:$0xff]
    %v983 = vld [vmem:[%s979 + $0x18] sm:$0xff]
    %984 = vmatprep.subr.mxu0 %v31
    %985 = vmatpush1.msra.mxu0 %v30
    %986 = vmatprep.subr.mxu0 %v35
    %987 = vmatpush1.msra.mxu0 %v34
    %988 = vmatprep.subr.mxu0 %v39
    %989 = vmatpush1.msra.mxu0 %v38
    %990 = vmatprep.subr.mxu0 %v43
    %991 = vmatpush1.msra.mxu0 %v42
    %992 = vmatprep.subr.mxu0 %v47
    %993 = vmatpush1.msra.mxu0 %v46
    %994 = vmatprep.subr.mxu0 %v51
    %995 = vmatpush1.msra.mxu0 %v50
    %996 = vmatprep.subr.mxu0 %v55
    %997 = vmatpush1.msra.mxu0 %v54
    %998 = vmatprep.subr.mxu0 %v59
    %999 = vmatpush1.msra.mxu0 %v58
    %1000 = vmatprep.subr.mxu0 %v63
    %1001 = vmatpush1.msra.mxu0 %v62
    %1002 = vmatprep.subr.mxu0 %v67
    %1003 = vmatpush1.msra.mxu0 %v66
    %1004 = vmatprep.subr.mxu0 %v71
    %1005 = vmatpush1.msra.mxu0 %v70
    %1006 = vmatprep.subr.mxu0 %v75
    %1007 = vmatpush1.msra.mxu0 %v74
    %1008 = vmatprep.subr.mxu0 %v79
    %1009 = vmatpush1.msra.mxu0 %v78
    %1010 = vmatprep.subr.mxu0 %v83
    %1011 = vmatpush1.msra.mxu0 %v82
    %1012 = vmatprep.subr.mxu0 %v87
    %1013 = vmatpush1.msra.mxu0 %v86
    %1014 = vmatprep.subr.mxu0 %v91
    %1015 = vmatpush1.msra.mxu0 %v90
    %1016 = vmatprep.subr.mxu0 0.0
    %1017 = vmatpush1.msra.mxu0 0.0
    %1018 = vmatprep.subr.mxu0 0.0
    %1019 = vmatpush1.msra.mxu0 0.0
    %1020 = vmatprep.subr.mxu0 0.0
    %1021 = vmatpush1.msra.mxu0 0.0
    %1022 = vmatprep.subr.mxu0 0.0
    %1023 = vmatpush1.msra.mxu0 0.0
    %1024 = vmatprep.subr.mxu0 0.0
    %1025 = vmatpush1.msra.mxu0 0.0
    %1026 = vmatprep.subr.mxu0 0.0
    %1027 = vmatpush1.msra.mxu0 0.0
    %1028 = vmatprep.subr.mxu0 0.0
    %1029 = vmatpush1.msra.mxu0 0.0
    %1030 = vmatprep.subr.mxu0 0.0
    %1031 = vmatpush1.msra.mxu0 0.0
    %1032 = vmatprep.subr.mxu0 0.0
    %1033 = vmatpush1.msra.mxu0 0.0
    %1034 = vmatprep.subr.mxu0 0.0
    %1035 = vmatpush1.msra.mxu0 0.0
    %1036 = vmatprep.subr.mxu0 0.0
    %1037 = vmatpush1.msra.mxu0 0.0
    %1038 = vmatprep.subr.mxu0 0.0
    %1039 = vmatpush1.msra.mxu0 0.0
    %1040 = vmatprep.subr.mxu0 0.0
    %1041 = vmatpush1.msra.mxu0 0.0
    %1042 = vmatprep.subr.mxu0 0.0
    %1043 = vmatpush1.msra.mxu0 0.0
    %1044 = vmatprep.subr.mxu0 0.0
    %1045 = vmatpush1.msra.mxu0 0.0
    %1046 = vmatprep.subr.mxu0 0.0
    %1047 = vmatpush1.msra.mxu0 0.0
    %1048 = vmatprep.mubr.f32.mxu0 0.0
    %1049 = vmatmul.mubr.f32.gmra.mrb[0].mxu0 %v976
    %v1050 = vpop.f32.mrb[0].mxu0
    %v1051 = vadd.f32 0.0, %v1050
    %v1052 = vpop.f32.mrb[0].mxu0
    %v1053 = vadd.f32 0.0, %v1052
    %1054 = vdwg.mxu0
    %1055 = vmatprep.subr.mxu0 %v33
    %1056 = vmatpush1.msra.mxu0 %v32
    %1057 = vmatprep.subr.mxu0 %v37
    %1058 = vmatpush1.msra.mxu0 %v36
    %1059 = vmatprep.subr.mxu0 %v41
    %1060 = vmatpush1.msra.mxu0 %v40
    %1061 = vmatprep.subr.mxu0 %v45
    %1062 = vmatpush1.msra.mxu0 %v44
    %1063 = vmatprep.subr.mxu0 %v49
    %1064 = vmatpush1.msra.mxu0 %v48
    %1065 = vmatprep.subr.mxu0 %v53
    %1066 = vmatpush1.msra.mxu0 %v52
    %1067 = vmatprep.subr.mxu0 %v57
    %1068 = vmatpush1.msra.mxu0 %v56
    %1069 = vmatprep.subr.mxu0 %v61
    %1070 = vmatpush1.msra.mxu0 %v60
    %1071 = vmatprep.subr.mxu0 %v65
    %1072 = vmatpush1.msra.mxu0 %v64
    %1073 = vmatprep.subr.mxu0 %v69
    %1074 = vmatpush1.msra.mxu0 %v68
    %1075 = vmatprep.subr.mxu0 %v73
    %1076 = vmatpush1.msra.mxu0 %v72
    %1077 = vmatprep.subr.mxu0 %v77
    %1078 = vmatpush1.msra.mxu0 %v76
    %1079 = vmatprep.subr.mxu0 %v81
    %1080 = vmatpush1.msra.mxu0 %v80
    %1081 = vmatprep.subr.mxu0 %v85
    %1082 = vmatpush1.msra.mxu0 %v84
    %1083 = vmatprep.subr.mxu0 %v89
    %1084 = vmatpush1.msra.mxu0 %v88
    %1085 = vmatprep.subr.mxu0 %v93
    %1086 = vmatpush1.msra.mxu0 %v92
    %1087 = vmatprep.subr.mxu0 0.0
    %1088 = vmatpush1.msra.mxu0 0.0
    %1089 = vmatprep.subr.mxu0 0.0
    %1090 = vmatpush1.msra.mxu0 0.0
    %1091 = vmatprep.subr.mxu0 0.0
    %1092 = vmatpush1.msra.mxu0 0.0
    %1093 = vmatprep.subr.mxu0 0.0
    %1094 = vmatpush1.msra.mxu0 0.0
    %1095 = vmatprep.subr.mxu0 0.0
    %1096 = vmatpush1.msra.mxu0 0.0
    %1097 = vmatprep.subr.mxu0 0.0
    %1098 = vmatpush1.msra.mxu0 0.0
    %1099 = vmatprep.subr.mxu0 0.0
    %1100 = vmatpush1.msra.mxu0 0.0
    %1101 = vmatprep.subr.mxu0 0.0
    %1102 = vmatpush1.msra.mxu0 0.0
    %1103 = vmatprep.subr.mxu0 0.0
    %1104 = vmatpush1.msra.mxu0 0.0
    %1105 = vmatprep.subr.mxu0 0.0
    %1106 = vmatpush1.msra.mxu0 0.0
    %1107 = vmatprep.subr.mxu0 0.0
    %1108 = vmatpush1.msra.mxu0 0.0
    %1109 = vmatprep.subr.mxu0 0.0
    %1110 = vmatpush1.msra.mxu0 0.0
    %1111 = vmatprep.subr.mxu0 0.0
    %1112 = vmatpush1.msra.mxu0 0.0
    %1113 = vmatprep.subr.mxu0 0.0
    %1114 = vmatpush1.msra.mxu0 0.0
    %1115 = vmatprep.subr.mxu0 0.0
    %1116 = vmatpush1.msra.mxu0 0.0
    %1117 = vmatprep.subr.mxu0 0.0
    %1118 = vmatpush1.msra.mxu0 0.0
    %1119 = vmatprep.mubr.f32.mxu0 0.0
    %1120 = vmatmul.mubr.f32.gmra.mrb[0].mxu0 %v976
    %v1121 = vpop.f32.mrb[0].mxu0
    %v1122 = vadd.f32 0.0, %v1121
    %v1123 = vpop.f32.mrb[0].mxu0
    %v1124 = vadd.f32 0.0, %v1123
    %1125 = vdwg.mxu0
    %v1126 = vadd.f32 %v980, %v1051
    %v1127 = vadd.f32 %v981, %v1053
    %v1128 = vadd.f32 %v982, %v1122
    %v1129 = vadd.f32 %v983, %v1124
    %v1130 = vxor.u32 %v1126, 2147483648
    %v1131 = vxor.u32 %v1127, 2147483648
    %v1132 = vxor.u32 %v1128, 2147483648
    %v1133 = vmul.f32 %v1130, 1.442695
    %v1134 = vpow.pop %v1133
    %v1135 = vmul.f32 %v1131, 1.442695
    %v1136 = vpow.pop %v1135
    %v1137 = vmul.f32 %v1132, 1.442695
    %v1138 = vpow.pop %v1137
    %v1139 = vadd.f32 %v1134, 1.0
    %v1140 = vadd.f32 %v1136, 1.0
    %v1141 = vadd.f32 %v1138, 1.0
    %v1142 = vrcp.pop %v1139
    %v1143 = vmul.f32 1.0, %v1142
    %v1144 = vrcp.pop %v1140
    %v1145 = vmul.f32 1.0, %v1144
    %v1146 = vrcp.pop %v1141
    %v1147 = vmul.f32 1.0, %v1146
    %v1148 = vtanh.pop %v1129
    %v1149 = vmul.f32 %v1145, %v974
    %v1150 = vmul.f32 %v1143, %v1148
    %v1151 = vadd.f32 %v1149, %v1150
    %v1152 = vtanh.pop %v1151
    %v1153 = vmul.f32 %v1147, %v1152
    %s1154 = scalar_lea.vmem %s4, 40
    %1155 = vst [vmem:[%s1154] sm:$0xff] %v1153
    %1156 = vst [vmem:[#allocation2] sm:$0xff] %v1153
    %1157 = vst [vmem:[#allocation3] sm:$0xff] %v1151
    %1158 = vst [vmem:[#allocation4] sm:$0xff] %v1153
    %1159 = vst [vmem:[#allocation6] sm:$0xff] %v1151
    // Predicated region
    $region22: #{seq2seq_forward.8} parent=1 // pred_check
      _
    $region23: #{seq2seq_forward.8} parent=1 // pred_check_branch
      %1161 = sbr.rel (0) target = $region25
    $region24: #{seq2seq_forward.8} parent=1 // pred_region
      _
    $region25: #{seq2seq_forward.8} parent=1 // pred_fallthru
      _
    // Predicated region
    $region26: #{seq2seq_forward.8} parent=1 // pred_check
      _
    $region27: #{seq2seq_forward.8} parent=1 // pred_check_branch
      %1163 = sbr.rel (0) target = $region29
    $region28: #{seq2seq_forward.8} parent=1 // pred_region
      %s1165 = ssub.s32 128, 128
      %1166 = vsyncadd [#allocation5], %s1165
      %s1168 = sshll.u32 [#allocation4], 4
      %s1169 = int_to_ptr.vmem [resolvable:$true] %s1168
      %1171 = dma.vmem_to_hbm [thread:$0]  %s1169, 128, %s5, [#allocation5]
    $region29: #{seq2seq_forward.8} parent=1 // pred_fallthru
      _
    // Predicated region
    $region30: #{seq2seq_forward.8} parent=1 // pred_check
      _
    $region31: #{seq2seq_forward.8} parent=1 // pred_check_branch
      %1173 = sbr.rel (0) target = $region33
    $region32: #{seq2seq_forward.8} parent=1 // pred_region
      %s1175 = ssub.s32 128, 128
      %1176 = vsyncadd [#allocation7], %s1175
      %s1178 = sshll.u32 [#allocation6], 4
      %s1179 = int_to_ptr.vmem [resolvable:$true] %s1178
      %1181 = dma.vmem_to_hbm [thread:$0]  %s1179, 128, %s6, [#allocation7]
    $region33: #{seq2seq_forward.8} parent=1 // pred_fallthru
      _
    // Predicated region
    $region34: #{seq2seq_forward.8} parent=1 // pred_check
      _
    $region35: #{seq2seq_forward.8} parent=1 // pred_check_branch
      %1183 = sbr.rel (0) target = $region37
    $region36: #{seq2seq_forward.8} parent=1 // pred_region
      _
    $region37: #{seq2seq_forward.8} parent=1 // pred_fallthru
      _
    // Predicated region
    $region38: #{seq2seq_forward.8} parent=1 // pred_check
      _
    $region39: #{seq2seq_forward.8} parent=1 // pred_check_branch
      %1185 = sbr.rel (0) target = $region41
    $region40: #{seq2seq_forward.8} parent=1 // pred_region
      %1186 = dma.done [#allocation5], 128
    $region41: #{seq2seq_forward.8} parent=1 // pred_fallthru
      _
    // Predicated region
    $region42: #{seq2seq_forward.8} parent=1 // pred_check
      _
    $region43: #{seq2seq_forward.8} parent=1 // pred_check_branch
      %1188 = sbr.rel (0) target = $region45
    $region44: #{seq2seq_forward.8} parent=1 // pred_region
      %1189 = dma.done [#allocation7], 128
    $region45: #{seq2seq_forward.8} parent=1 // pred_fallthru
      _
    %1190 = vsyncpa [#allocation5], 1
    %1191 = vsyncpa [#allocation7], 1

</llo_original>
